<compile_context>
chip_gen: v5e
topology: v5e:2x2
jax: 0.10.0
libtpu: 0.0.40
codegen_flags: <defaults>
</compile_context>

<pallas_src>
import math

import jax
import jax.numpy as jnp
from jax.experimental import pallas as pl
from jax.experimental.pallas import tpu as pltpu

_HID = 512  # fixed inner width of the projection MLP (matches nn.Linear(..., 512))


def _round_up(x, m):
    return (x + m - 1) // m * m


def _gelu_exact(x):
    # torch.nn.GELU() default is the exact (erf-based) GELU; kept for numerical parity.
    # TODO(synk): switch to tanh-approx GELU (EUP offload) only if the drift from torch is acceptable.
    return 0.5 * x * (1.0 + jax.lax.erf(x * (1.0 / math.sqrt(2.0))))


def _projection_mlp_kernel(x_ref,
                           w1_ref, b1_ref,
                           w2_ref, b2_ref,
                           w3_ref, b3_ref,
                           w4_ref, b4_ref,
                           out_ref,
                           acc_ref):
    """Batch-tiled, K-tiled 4-layer MLP with exact GELU between layers.

    grid = (batch_tiles, k_tiles). Axis 1 walks chunks of the embedding dim for
    layer 1; partial products accumulate in an f32 VMEM scratch.  Layers 2-4 and
    the GELUs run once per batch tile on the last k step.

      x_ref:  (TM, TK)  float32         acc_ref: (TM, 512) float32 scratch
      w1: (TK, 512) bf16   b1: (1, 512) f32
      w2: (512, 512) bf16  b2: (1, 512) f32
      w3: (512, 512) bf16  b3: (1, 512) f32
      w4: (512, OUTP) bf16 b4: (1, OUTP) f32
      out_ref: (TM, OUTP) float32
    """
    k = pl.program_id(1)

    @pl.when(k == 0)
    def _():
        acc_ref[...] = jnp.zeros_like(acc_ref)

    # Layer 1 partial matmul: bf16 MXU-native inputs, f32 accumulation.
    x = x_ref[...].astype(jnp.bfloat16)
    acc_ref[...] += jnp.dot(x, w1_ref[...], preferred_element_type=jnp.float32)

    @pl.when(k == pl.num_programs(1) - 1)
    def _():
        h = _gelu_exact(acc_ref[...] + b1_ref[...])                      # GELU math kept in f32
        h = jnp.dot(h.astype(jnp.bfloat16), w2_ref[...],
                    preferred_element_type=jnp.float32) + b2_ref[...]
        h = _gelu_exact(h)
        h = jnp.dot(h.astype(jnp.bfloat16), w3_ref[...],
                    preferred_element_type=jnp.float32) + b3_ref[...]
        h = _gelu_exact(h)
        out_ref[...] = (jnp.dot(h.astype(jnp.bfloat16), w4_ref[...],
                                preferred_element_type=jnp.float32)
                        + b4_ref[...]).astype(out_ref.dtype)


def projection_mlp(x_flat, weights_bf16, biases_f32, out_dim):
    """Projection MLP hot path as a single batch/K-tiled Pallas kernel."""
    w1, w2, w3, w4 = weights_bf16
    b1, b2, b3, b4 = biases_f32
    B, E = x_flat.shape

    # ---- hardware-friendly padding / tile selection -------------------------
    # Batch tile: multiple of 8 sublanes; 128 rows at large B keeps MXU row occupancy high
    # on all generations (v5e 4x128^2; also fine for v6e/v7x 2x256^2).
    tm = 128 if B >= 128 else _round_up(max(B, 1), 8)
    B_pad = _round_up(B, tm)

    # Embedding dim: lane dim of the x block must be a multiple of 128.  Cap the
    # per-step K tile so the resident w1 slab stays small (v7x 64 MiB VMEM).
    E_pad = _round_up(E, 128)
    if E_pad <= 2048:
        tk = E_pad
    else:
        tk = 2048
        E_pad = _round_up(E_pad, tk)

    # Output lanes: keep the final store lane-dense (multiple of 128).
    out_pad = _round_up(out_dim, 128)

    if (B_pad, E_pad) != (B, E):
        x_flat = jnp.pad(x_flat, ((0, B_pad - B), (0, E_pad - E)))
    if w1.shape[0] != E_pad:
        w1 = jnp.pad(w1, ((0, E_pad - w1.shape[0]), (0, 0)))
    if out_pad != out_dim:
        w4 = jnp.pad(w4, ((0, 0), (0, out_pad - out_dim)))
        b4 = jnp.pad(b4, ((0, 0), (0, out_pad - out_dim)))

    grid = (B_pad // tm, E_pad // tk)
    const = lambda i, k: (0, 0)

    grid_spec = pltpu.PrefetchScalarGridSpec(
        num_scalar_prefetch=0,
        grid=grid,
        in_specs=[
            pl.BlockSpec((tm, tk), lambda i, k: (i, k)),       # x tile
            pl.BlockSpec((tk, _HID), lambda i, k: (k, 0)),     # w1 K-slab
            pl.BlockSpec((1, _HID), const),                    # b1 (resident)
            pl.BlockSpec((_HID, _HID), const),                 # w2 (resident)
            pl.BlockSpec((1, _HID), const),                    # b2
            pl.BlockSpec((_HID, _HID), const),                 # w3 (resident)
            pl.BlockSpec((1, _HID), const),                    # b3
            pl.BlockSpec((_HID, out_pad), const),              # w4 (resident)
            pl.BlockSpec((1, out_pad), const),                 # b4
        ],
        out_specs=pl.BlockSpec((tm, out_pad), lambda i, k: (i, 0)),
        scratch_shapes=[pltpu.VMEM((tm, _HID), jnp.float32)],
    )

    # Explicit VMEM budget (v5e scoped default is only 16 MiB): 2x (double buffer)
    # on every operand tile + accumulator + headroom, clamped below physical VMEM.
    tile_bytes = (2 * (tm * tk * 4                       # x tile (f32)
                       + tk * _HID * 2                   # w1 slab (bf16)
                       + 2 * _HID * _HID * 2             # w2, w3 (bf16)
                       + _HID * out_pad * 2              # w4 (bf16)
                       + (3 * _HID + out_pad) * 4        # biases (f32)
                       + tm * out_pad * 4)               # out tile (f32)
                  + tm * _HID * 4)                       # accumulator scratch
    vmem_limit = min(max(int(tile_bytes) + (4 << 20), 8 << 20), 100 << 20)

    flops = 2 * B_pad * (E_pad * _HID + 2 * _HID * _HID + _HID * out_pad)
    transcendentals = 3 * B_pad * _HID                   # one erf per GELU element
    bytes_accessed = (B_pad * E_pad * 4
                      + 2 * (E_pad * _HID + 2 * _HID * _HID + _HID * out_pad)
                      + 4 * (3 * _HID + out_pad)
                      + B_pad * out_pad * 4)

    out = pl.pallas_call(
        _projection_mlp_kernel,
        grid_spec=grid_spec,
        out_shape=jax.ShapeDtypeStruct((B_pad, out_pad), jnp.float32),
        compiler_params=pltpu.CompilerParams(
            dimension_semantics=("parallel", "arbitrary"),
            vmem_limit_bytes=vmem_limit),
        cost_estimate=pl.CostEstimate(flops=flops,
                                      transcendentals=transcendentals,
                                      bytes_accessed=bytes_accessed),
    )(x_flat, w1, b1, w2, b2, w3, b3, w4, b4)

    return out[:B, :out_dim]


def init_projection_params(key, embedding_size, hidden_size, num_patches_per_entry):
    """Deterministic PyTorch-Linear-style init (uniform ±1/sqrt(fan_in)), f32 masters."""
    dims = [embedding_size, _HID, _HID, _HID, hidden_size * num_patches_per_entry]
    params = []
    for i in range(4):
        key, kw, kb = jax.random.split(key, 3)
        fan_in, fan_out = dims[i], dims[i + 1]
        bound = 1.0 / math.sqrt(fan_in)
        w = jax.random.uniform(kw, (fan_in, fan_out), jnp.float32, -bound, bound)
        b = jax.random.uniform(kb, (1, fan_out), jnp.float32, -bound, bound)
        params.append((w, b))
    return params


class ModalityWithProjectionPallas:
    """JAX/Pallas equivalent of ModalityWithProjection.forward.

    The synthetic modality is an identity feature extractor: modality(value) = value,
    so embedding_size = C*H*W of the NCHW input.
    """

    def __init__(self, embedding_size, hidden_size, num_patches_per_entry, key):
        self.embedding_size = embedding_size
        self.hidden_size = hidden_size
        self.num_patches_per_entry = num_patches_per_entry
        self.params_f32 = init_projection_params(
            key, embedding_size, hidden_size, num_patches_per_entry)
        # bf16 weight storage: halves HBM weight traffic (the bottleneck at small B) and is
        # the MXU-native input dtype on v5e/v6e/v7x.  Biases stay f32.
        self.weights_bf16 = tuple(w.astype(jnp.bfloat16) for (w, _) in self.params_f32)
        self.biases_f32 = tuple(b for (_, b) in self.params_f32)

    def __call__(self, value):
        # modality(value) -> cast to dtype -> flatten(start_dim=1)   [plain JAX glue]
        hidden_state = value.astype(jnp.float32).reshape(value.shape[0], -1)
        assert hidden_state.shape[1] == self.embedding_size
        # projection MLP (Pallas kernel)
        proj = projection_mlp(hidden_state, self.weights_bf16, self.biases_f32,
                              self.hidden_size * self.num_patches_per_entry)
        # view(-1, num_patches_per_entry, hidden_size)               [plain JAX glue]
        proj = proj.reshape(-1, self.num_patches_per_entry, self.hidden_size)
        return {"intermediate_state": hidden_state, "projection": proj}


if __name__ == "__main__":
    # Small shapes consistent with the module:
    #   value: NCHW (2, 4, 16, 16) -> embedding_size = 4*16*16 = 1024
    #   hidden_size = 32, num_patches_per_entry = 16 -> final linear out = 512
    B, C, H, W = 2, 4, 16, 16
    hidden_size = 32
    num_patches_per_entry = 16
    embedding_size = C * H * W

    key = jax.random.PRNGKey(0)
    key, kx, kp = jax.random.split(key, 3)
    value = jax.random.normal(kx, (B, C, H, W), jnp.float32)

    module = ModalityWithProjectionPallas(
        embedding_size, hidden_size, num_patches_per_entry, kp)

    out = module(value)
    jax.block_until_ready(out["projection"])
    jax.block_until_ready(out["intermediate_state"])

    # shapes match the PyTorch forward contract
    assert out["intermediate_state"].shape == (B, embedding_size)
    assert out["projection"].shape == (B, num_patches_per_entry, hidden_size)

    # Cross-check against a pure-JAX reference that emulates the kernel math
    # (bf16-quantized matmul inputs, f32 accumulation/bias/GELU).
    def ref_forward(x, weights_bf16, biases):
        h = x.reshape(x.shape[0], -1)
        for i, (w, b) in enumerate(zip(weights_bf16, biases)):
            h_q = h.astype(jnp.bfloat16).astype(jnp.float32)
            h = h_q @ w.astype(jnp.float32) + b
            if i < 3:
                h = 0.5 * h * (1.0 + jax.lax.erf(h / math.sqrt(2.0)))
        return h.reshape(-1, num_patches_per_entry, hidden_size)

    ref = ref_forward(value, module.weights_bf16, module.biases_f32)
    assert jnp.allclose(ref, out["projection"], atol=1e-3, rtol=1e-3)

    print("KERNEL_OK")
</pallas_src>

<mosaic_0001>
module attributes {stable_mosaic.version = 11 : i64} {
  func.func @_projection_mlp_kernel(%arg0: i32, %arg1: i32, %arg2: memref<8x1024xf32, #tpu.memory_space<vmem>>, %arg3: memref<1024x512xbf16, #tpu.memory_space<vmem>>, %arg4: memref<1x512xf32, #tpu.memory_space<vmem>>, %arg5: memref<512x512xbf16, #tpu.memory_space<vmem>>, %arg6: memref<1x512xf32, #tpu.memory_space<vmem>>, %arg7: memref<512x512xbf16, #tpu.memory_space<vmem>>, %arg8: memref<1x512xf32, #tpu.memory_space<vmem>>, %arg9: memref<512x512xbf16, #tpu.memory_space<vmem>>, %arg10: memref<1x512xf32, #tpu.memory_space<vmem>>, %arg11: memref<8x512xf32, #tpu.memory_space<vmem>>, %arg12: memref<8x512xf32, #tpu.memory_space<vmem>>) attributes {dimension_semantics = [#tpu.dimension_semantics<parallel>, #tpu.dimension_semantics<arbitrary>], iteration_bounds = array<i64: 1, 1>, scalar_prefetch = 0 : i64, scratch_operands = 1 : i64, tpu.core_type = #tpu.core_type<tc>, window_params = [{transform_indices = @transform_0, window_bounds = array<i64: 8, 1024>}, {transform_indices = @transform_1, window_bounds = array<i64: 1024, 512>}, {pipeline_mode = #tpu.pipeline_mode<synchronous>, transform_indices = @transform_2, window_bounds = array<i64: 1, 512>}, {pipeline_mode = #tpu.pipeline_mode<synchronous>, transform_indices = @transform_3, window_bounds = array<i64: 512, 512>}, {pipeline_mode = #tpu.pipeline_mode<synchronous>, transform_indices = @transform_4, window_bounds = array<i64: 1, 512>}, {pipeline_mode = #tpu.pipeline_mode<synchronous>, transform_indices = @transform_5, window_bounds = array<i64: 512, 512>}, {pipeline_mode = #tpu.pipeline_mode<synchronous>, transform_indices = @transform_6, window_bounds = array<i64: 1, 512>}, {pipeline_mode = #tpu.pipeline_mode<synchronous>, transform_indices = @transform_7, window_bounds = array<i64: 512, 512>}, {pipeline_mode = #tpu.pipeline_mode<synchronous>, transform_indices = @transform_8, window_bounds = array<i64: 1, 512>}, {transform_indices = @transform_9, window_bounds = array<i64: 8, 512>}]} {
    %c0_i32 = arith.constant 0 : i32
    %0 = arith.cmpi eq, %arg1, %c0_i32 : i32
    %1 = arith.extui %0 : i1 to i32
    %c0_i32_0 = arith.constant 0 : i32
    %2 = arith.cmpi ne, %1, %c0_i32_0 : i32
    scf.if %2 {
      %cst_10 = arith.constant 0.000000e+00 : f32
      %13 = vector.broadcast %cst_10 : f32 to vector<8x512xf32>
      %c0_11 = arith.constant 0 : index
      %c0_12 = arith.constant 0 : index
      %14 = vector.load %arg12[%c0_11, %c0_12] : memref<8x512xf32, #tpu.memory_space<vmem>>, vector<8x512xf32>
      tpu.vector_store %arg12[%c0_11, %c0_12], %13 {strides = array<i32>} : memref<8x512xf32, #tpu.memory_space<vmem>>, vector<8x512xf32>,
    } else {
    }
    %c0 = arith.constant 0 : index
    %c0_1 = arith.constant 0 : index
    %3 = vector.load %arg2[%c0, %c0_1] : memref<8x1024xf32, #tpu.memory_space<vmem>>, vector<8x1024xf32>
    %4 = arith.truncf %3 : vector<8x1024xf32> to vector<8x1024xbf16>
    %c0_2 = arith.constant 0 : index
    %c0_3 = arith.constant 0 : index
    %5 = vector.load %arg12[%c0_2, %c0_3] : memref<8x512xf32, #tpu.memory_space<vmem>>, vector<8x512xf32>
    %c0_4 = arith.constant 0 : index
    %c0_5 = arith.constant 0 : index
    %6 = vector.load %arg3[%c0_4, %c0_5] : memref<1024x512xbf16, #tpu.memory_space<vmem>>, vector<1024x512xbf16>
    %cst = arith.constant dense<0.000000e+00> : vector<8x512xf32>
    %7 = tpu.matmul %4, %6, %cst {dimension_numbers = #tpu.dot_dimension_numbers<[1], [0], [0], [1], [0, 0, 1, 1], [], []>} : vector<8x1024xbf16>, vector<1024x512xbf16>, vector<8x512xf32> -> vector<8x512xf32>
    %8 = arith.addf %5, %7 : vector<8x512xf32>
    %c0_6 = arith.constant 0 : index
    %c0_7 = arith.constant 0 : index
    %9 = vector.load %arg12[%c0_6, %c0_7] : memref<8x512xf32, #tpu.memory_space<vmem>>, vector<8x512xf32>
    tpu.vector_store %arg12[%c0_6, %c0_7], %8 {strides = array<i32>} : memref<8x512xf32, #tpu.memory_space<vmem>>, vector<8x512xf32>,
    %c0_i32_8 = arith.constant 0 : i32
    %10 = arith.cmpi eq, %arg1, %c0_i32_8 : i32
    %11 = arith.extui %10 : i1 to i32
    %c0_i32_9 = arith.constant 0 : i32
    %12 = arith.cmpi ne, %11, %c0_i32_9 : i32
    scf.if %12 {
      %c0_10 = arith.constant 0 : index
      %c0_11 = arith.constant 0 : index
      %13 = vector.load %arg12[%c0_10, %c0_11] : memref<8x512xf32, #tpu.memory_space<vmem>>, vector<8x512xf32>
      %c0_12 = arith.constant 0 : index
      %c0_13 = arith.constant 0 : index
      %14 = vector.load %arg4[%c0_12, %c0_13] : memref<1x512xf32, #tpu.memory_space<vmem>>, vector<1x512xf32>
      %15 = vector.broadcast %14 : vector<1x512xf32> to vector<8x512xf32>
      %16 = arith.addf %13, %15 : vector<8x512xf32>
      %cst_14 = arith.constant 5.000000e-01 : f32
      %17 = vector.broadcast %cst_14 : f32 to vector<8x512xf32>
      %18 = arith.mulf %17, %16 : vector<8x512xf32>
      %cst_15 = arith.constant 0.707106769 : f32
      %19 = vector.broadcast %cst_15 : f32 to vector<8x512xf32>
      %20 = arith.mulf %16, %19 : vector<8x512xf32>
      %21 = math.erf %20 : vector<8x512xf32>
      %cst_16 = arith.constant 1.000000e+00 : f32
      %22 = vector.broadcast %cst_16 : f32 to vector<8x512xf32>
      %23 = arith.addf %22, %21 : vector<8x512xf32>
      %24 = arith.mulf %18, %23 : vector<8x512xf32>
      %25 = arith.truncf %24 : vector<8x512xf32> to vector<8x512xbf16>
      %c0_17 = arith.constant 0 : index
      %c0_18 = arith.constant 0 : index
      %26 = vector.load %arg5[%c0_17, %c0_18] : memref<512x512xbf16, #tpu.memory_space<vmem>>, vector<512x512xbf16>
      %cst_19 = arith.constant dense<0.000000e+00> : vector<8x512xf32>
      %27 = tpu.matmul %25, %26, %cst_19 {dimension_numbers = #tpu.dot_dimension_numbers<[1], [0], [0], [1], [0, 0, 1, 1], [], []>} : vector<8x512xbf16>, vector<512x512xbf16>, vector<8x512xf32> -> vector<8x512xf32>
      %c0_20 = arith.constant 0 : index
      %c0_21 = arith.constant 0 : index
      %28 = vector.load %arg6[%c0_20, %c0_21] : memref<1x512xf32, #tpu.memory_space<vmem>>, vector<1x512xf32>
      %29 = vector.broadcast %28 : vector<1x512xf32> to vector<8x512xf32>
      %30 = arith.addf %27, %29 : vector<8x512xf32>
      %cst_22 = arith.constant 5.000000e-01 : f32
      %31 = vector.broadcast %cst_22 : f32 to vector<8x512xf32>
      %32 = arith.mulf %31, %30 : vector<8x512xf32>
      %cst_23 = arith.constant 0.707106769 : f32
      %33 = vector.broadcast %cst_23 : f32 to vector<8x512xf32>
      %34 = arith.mulf %30, %33 : vector<8x512xf32>
      %35 = math.erf %34 : vector<8x512xf32>
      %cst_24 = arith.constant 1.000000e+00 : f32
      %36 = vector.broadcast %cst_24 : f32 to vector<8x512xf32>
      %37 = arith.addf %36, %35 : vector<8x512xf32>
      %38 = arith.mulf %32, %37 : vector<8x512xf32>
      %39 = arith.truncf %38 : vector<8x512xf32> to vector<8x512xbf16>
      %c0_25 = arith.constant 0 : index
      %c0_26 = arith.constant 0 : index
      %40 = vector.load %arg7[%c0_25, %c0_26] : memref<512x512xbf16, #tpu.memory_space<vmem>>, vector<512x512xbf16>
      %cst_27 = arith.constant dense<0.000000e+00> : vector<8x512xf32>
      %41 = tpu.matmul %39, %40, %cst_27 {dimension_numbers = #tpu.dot_dimension_numbers<[1], [0], [0], [1], [0, 0, 1, 1], [], []>} : vector<8x512xbf16>, vector<512x512xbf16>, vector<8x512xf32> -> vector<8x512xf32>
      %c0_28 = arith.constant 0 : index
      %c0_29 = arith.constant 0 : index
      %42 = vector.load %arg8[%c0_28, %c0_29] : memref<1x512xf32, #tpu.memory_space<vmem>>, vector<1x512xf32>
      %43 = vector.broadcast %42 : vector<1x512xf32> to vector<8x512xf32>
      %44 = arith.addf %41, %43 : vector<8x512xf32>
      %cst_30 = arith.constant 5.000000e-01 : f32
      %45 = vector.broadcast %cst_30 : f32 to vector<8x512xf32>
      %46 = arith.mulf %45, %44 : vector<8x512xf32>
      %cst_31 = arith.constant 0.707106769 : f32
      %47 = vector.broadcast %cst_31 : f32 to vector<8x512xf32>
      %48 = arith.mulf %44, %47 : vector<8x512xf32>
      %49 = math.erf %48 : vector<8x512xf32>
      %cst_32 = arith.constant 1.000000e+00 : f32
      %50 = vector.broadcast %cst_32 : f32 to vector<8x512xf32>
      %51 = arith.addf %50, %49 : vector<8x512xf32>
      %52 = arith.mulf %46, %51 : vector<8x512xf32>
      %53 = arith.truncf %52 : vector<8x512xf32> to vector<8x512xbf16>
      %c0_33 = arith.constant 0 : index
      %c0_34 = arith.constant 0 : index
      %54 = vector.load %arg9[%c0_33, %c0_34] : memref<512x512xbf16, #tpu.memory_space<vmem>>, vector<512x512xbf16>
      %cst_35 = arith.constant dense<0.000000e+00> : vector<8x512xf32>
      %55 = tpu.matmul %53, %54, %cst_35 {dimension_numbers = #tpu.dot_dimension_numbers<[1], [0], [0], [1], [0, 0, 1, 1], [], []>} : vector<8x512xbf16>, vector<512x512xbf16>, vector<8x512xf32> -> vector<8x512xf32>
      %c0_36 = arith.constant 0 : index
      %c0_37 = arith.constant 0 : index
      %56 = vector.load %arg10[%c0_36, %c0_37] : memref<1x512xf32, #tpu.memory_space<vmem>>, vector<1x512xf32>
      %57 = vector.broadcast %56 : vector<1x512xf32> to vector<8x512xf32>
      %58 = arith.addf %55, %57 : vector<8x512xf32>
      %c0_38 = arith.constant 0 : index
      %c0_39 = arith.constant 0 : index
      %59 = vector.load %arg11[%c0_38, %c0_39] : memref<8x512xf32, #tpu.memory_space<vmem>>, vector<8x512xf32>
      tpu.vector_store %arg11[%c0_38, %c0_39], %58 {strides = array<i32>} : memref<8x512xf32, #tpu.memory_space<vmem>>, vector<8x512xf32>,
    } else {
    }
    return
  }
  func.func @transform_0(%arg0: i32, %arg1: i32) -> (i32, i32) {
    %c0_i32 = arith.constant 0 : i32
    return %arg0, %arg1 : i32, i32
  }
  func.func @transform_1(%arg0: i32, %arg1: i32) -> (i32, i32) {
    %c0_i32 = arith.constant 0 : i32
    %c0_i32_0 = arith.constant 0 : i32
    return %arg1, %c0_i32 : i32, i32
  }
  func.func @transform_2(%arg0: i32, %arg1: i32) -> (i32, i32) {
    %c0_i32 = arith.constant 0 : i32
    %c0_i32_0 = arith.constant 0 : i32
    %c0_i32_1 = arith.constant 0 : i32
    return %c0_i32, %c0_i32_0 : i32, i32
  }
  func.func @transform_3(%arg0: i32, %arg1: i32) -> (i32, i32) {
    %c0_i32 = arith.constant 0 : i32
    %c0_i32_0 = arith.constant 0 : i32
    %c0_i32_1 = arith.constant 0 : i32
    return %c0_i32, %c0_i32_0 : i32, i32
  }
  func.func @transform_4(%arg0: i32, %arg1: i32) -> (i32, i32) {
    %c0_i32 = arith.constant 0 : i32
    %c0_i32_0 = arith.constant 0 : i32
    %c0_i32_1 = arith.constant 0 : i32
    return %c0_i32, %c0_i32_0 : i32, i32
  }
  func.func @transform_5(%arg0: i32, %arg1: i32) -> (i32, i32) {
    %c0_i32 = arith.constant 0 : i32
    %c0_i32_0 = arith.constant 0 : i32
    %c0_i32_1 = arith.constant 0 : i32
    return %c0_i32, %c0_i32_0 : i32, i32
  }
  func.func @transform_6(%arg0: i32, %arg1: i32) -> (i32, i32) {
    %c0_i32 = arith.constant 0 : i32
    %c0_i32_0 = arith.constant 0 : i32
    %c0_i32_1 = arith.constant 0 : i32
    return %c0_i32, %c0_i32_0 : i32, i32
  }
  func.func @transform_7(%arg0: i32, %arg1: i32) -> (i32, i32) {
    %c0_i32 = arith.constant 0 : i32
    %c0_i32_0 = arith.constant 0 : i32
    %c0_i32_1 = arith.constant 0 : i32
    return %c0_i32, %c0_i32_0 : i32, i32
  }
  func.func @transform_8(%arg0: i32, %arg1: i32) -> (i32, i32) {
    %c0_i32 = arith.constant 0 : i32
    %c0_i32_0 = arith.constant 0 : i32
    %c0_i32_1 = arith.constant 0 : i32
    return %c0_i32, %c0_i32_0 : i32, i32
  }
  func.func @transform_9(%arg0: i32, %arg1: i32) -> (i32, i32) {
    %c0_i32 = arith.constant 0 : i32
    %c0_i32_0 = arith.constant 0 : i32
    return %arg0, %c0_i32 : i32, i32
  }
}

</mosaic_0001>

<llo_original>
// kernel: tpu_custom_call.1
$region0: #{tpu_custom_call.1}
  #allocation0 [shape = 'u32[]', space=smem, size = 0x4, offset = 0x4, fixed_abs, tag = 'smem constant byte address 0x4 - core index']
  #allocation1 [shape = 'u32[72,128]{1,0:T(1,128)}', space=vmem, size = 0x9000, scoped, tag = 'internal scratch']
  #allocation2 [shape = 'f32[8,512]{1,0:T(8,128)}', space=vmem, size = 0x4000, scoped, tag = 'scratch operand']
  %s0 = inlined_call_operand.hbm [shape: f32[8,1024], index: 0, kind: input, shape index: {}]
  %s1 = inlined_call_operand.hbm [shape: bf16[1024,512], index: 1, kind: input, shape index: {}]
  %s2 = inlined_call_operand.hbm [shape: f32[1,512], index: 2, kind: input, shape index: {}]
  %s3 = inlined_call_operand.hbm [shape: bf16[512,512], index: 3, kind: input, shape index: {}]
  %s4 = inlined_call_operand.hbm [shape: f32[1,512], index: 4, kind: input, shape index: {}]
  %s5 = inlined_call_operand.hbm [shape: bf16[512,512], index: 5, kind: input, shape index: {}]
  %s6 = inlined_call_operand.vmem [shape: f32[1,512], index: 6, kind: input, shape index: {}]
  %s7 = inlined_call_operand.hbm [shape: bf16[512,512], index: 7, kind: input, shape index: {}]
  %s8 = inlined_call_operand.hbm [shape: f32[1,512], index: 8, kind: input, shape index: {}]
  %s9 = inlined_call_operand.hbm [shape: f32[8,512], index: 9, kind: output, shape index: {}]
  %s10 = sld [smem:[#allocation0]]
  $region86: #{tpu_custom_call.1} parent=0
    _
  %s12 = ssub.s32 1, %s10
  %s13 = scalar_select 0, %s12, %s10
  $region1: #{tpu_custom_call.1} parent=0
    #allocation3 [shape = 'u8[32768]{0}', space=vmem, size = 0x8000, scoped, tag = 'input window, operand 0, single buffered']
    #allocation4 [shape = 's32[1]{0}', space=sflag, size = 0x4, scoped, tag = 'scoped memory for tpu_custom_call.1']
    #allocation5 [shape = 's32[1]{0}', space=sflag, size = 0x4, scoped, tag = 'scoped memory for tpu_custom_call.1']
    #allocation6 [shape = 'u8[1048576]{0}', space=vmem, size = 0x100000, scoped, tag = 'input window, operand 1, single buffered']
    #allocation7 [shape = 's32[1]{0}', space=sflag, size = 0x4, scoped, tag = 'scoped memory for tpu_custom_call.1']
    #allocation8 [shape = 'u8[2048]{0}', space=vmem, size = 0x800, scoped, tag = 'input window, operand 2, single buffered']
    #allocation9 [shape = 'u8[524288]{0}', space=vmem, size = 0x80000, scoped, tag = 'input window, operand 3, single buffered']
    #allocation10 [shape = 's32[1]{0}', space=sflag, size = 0x4, scoped, tag = 'scoped memory for tpu_custom_call.1']
    #allocation11 [shape = 'u8[2048]{0}', space=vmem, size = 0x800, scoped, tag = 'input window, operand 4, single buffered']
    #allocation12 [shape = 'u8[524288]{0}', space=vmem, size = 0x80000, scoped, tag = 'input window, operand 5, single buffered']
    #allocation13 [shape = 's32[1]{0}', space=sflag, size = 0x4, scoped, tag = 'scoped memory for tpu_custom_call.1']
    #allocation14 [shape = 'u8[524288]{0}', space=vmem, size = 0x80000, scoped, tag = 'input window, operand 7, single buffered']
    #allocation15 [shape = 'u8[2048]{0}', space=vmem, size = 0x800, scoped, tag = 'input window, operand 8, single buffered']
    #allocation16 [shape = 's32[1]{0}', space=sflag, size = 0x4, scoped, tag = 'scoped memory for tpu_custom_call.1']
    #allocation17 [shape = 'u8[16384]{0}', space=vmem, size = 0x4000, scoped, tag = 'output window, operand 0, single buffered']
    %14 = vsyncpa [#allocation4], 0
    %15 = vsyncpa [#allocation7], 0
    %16 = vsyncpa [#allocation10], 0
    %17 = vsyncpa [#allocation13], 0
    %18 = vsyncpa [#allocation16], 0
    %19 = vsyncpa [#allocation5], 0
    // Predicated region
    $region2: #{tpu_custom_call.1} parent=1 // pred_check
      _
    $region3: #{tpu_custom_call.1} parent=1 // pred_check_branch
      %21 = sbr.rel (0) target = $region5
    $region4: #{tpu_custom_call.1} parent=1 // pred_region
      %23 = vsyncadd [#allocation4], 0
      %s25 = sshll.u32 %s0, 4
      %s26 = int_to_ptr.hbm [resolvable:$true] %s25
      %s27 = sshll.u32 [#allocation3], 4
      %s28 = int_to_ptr.vmem [resolvable:$true] %s27
      %30 = dma.hbm_to_vmem [thread:$0]  %s26, 1024, %s28, [#allocation4]
    $region5: #{tpu_custom_call.1} parent=1 // pred_fallthru
      _
    // Predicated region
    $region6: #{tpu_custom_call.1} parent=1 // pred_check
      _
    $region7: #{tpu_custom_call.1} parent=1 // pred_check_branch
      %32 = sbr.rel (0) target = $region9
    $region8: #{tpu_custom_call.1} parent=1 // pred_region
      %34 = vsyncadd [#allocation7], 0
      %s35 = sshll.u32 %s1, 4
      %s36 = int_to_ptr.hbm [resolvable:$true] %s35
      %s37 = sshll.u32 [#allocation6], 4
      %s38 = int_to_ptr.vmem [resolvable:$true] %s37
      %43 = dma.hbm_to_vmem [thread:$0]  %s36, 32768, %s38, [#allocation7], 256, 256, 16
    $region9: #{tpu_custom_call.1} parent=1 // pred_fallthru
      _
    // Predicated region
    $region10: #{tpu_custom_call.1} parent=1 // pred_check
      _
    $region11: #{tpu_custom_call.1} parent=1 // pred_check_branch
      %45 = sbr.rel (0) target = $region13
    $region12: #{tpu_custom_call.1} parent=1 // pred_region
      %47 = vsyncadd [#allocation7], 0
      %s49 = sshll.u32 %s2, 4
      %s50 = int_to_ptr.hbm [resolvable:$true] %s49
      %s51 = sshll.u32 [#allocation8], 4
      %s52 = int_to_ptr.vmem [resolvable:$true] %s51
      %54 = dma.hbm_to_vmem [thread:$0]  %s50, 64, %s52, [#allocation7]
    $region13: #{tpu_custom_call.1} parent=1 // pred_fallthru
      _
    // Predicated region
    $region14: #{tpu_custom_call.1} parent=1 // pred_check
      _
    $region15: #{tpu_custom_call.1} parent=1 // pred_check_branch
      %56 = sbr.rel (0) target = $region17
    $region16: #{tpu_custom_call.1} parent=1 // pred_region
      %58 = vsyncadd [#allocation10], 0
      %s59 = sshll.u32 %s3, 4
      %s60 = int_to_ptr.hbm [resolvable:$true] %s59
      %s61 = sshll.u32 [#allocation9], 4
      %s62 = int_to_ptr.vmem [resolvable:$true] %s61
      %67 = dma.hbm_to_vmem [thread:$0]  %s60, 16384, %s62, [#allocation10], 256, 256, 16
    $region17: #{tpu_custom_call.1} parent=1 // pred_fallthru
      _
    // Predicated region
    $region18: #{tpu_custom_call.1} parent=1 // pred_check
      _
    $region19: #{tpu_custom_call.1} parent=1 // pred_check_branch
      %69 = sbr.rel (0) target = $region21
    $region20: #{tpu_custom_call.1} parent=1 // pred_region
      %71 = vsyncadd [#allocation10], 0
      %s73 = sshll.u32 %s4, 4
      %s74 = int_to_ptr.hbm [resolvable:$true] %s73
      %s75 = sshll.u32 [#allocation11], 4
      %s76 = int_to_ptr.vmem [resolvable:$true] %s75
      %78 = dma.hbm_to_vmem [thread:$0]  %s74, 64, %s76, [#allocation10]
    $region21: #{tpu_custom_call.1} parent=1 // pred_fallthru
      _
    // Predicated region
    $region22: #{tpu_custom_call.1} parent=1 // pred_check
      _
    $region23: #{tpu_custom_call.1} parent=1 // pred_check_branch
      %80 = sbr.rel (0) target = $region25
    $region24: #{tpu_custom_call.1} parent=1 // pred_region
      %82 = vsyncadd [#allocation13], 0
      %s83 = sshll.u32 %s5, 4
      %s84 = int_to_ptr.hbm [resolvable:$true] %s83
      %s85 = sshll.u32 [#allocation12], 4
      %s86 = int_to_ptr.vmem [resolvable:$true] %s85
      %91 = dma.hbm_to_vmem [thread:$0]  %s84, 16384, %s86, [#allocation13], 256, 256, 16
    $region25: #{tpu_custom_call.1} parent=1 // pred_fallthru
      _
    // Predicated region
    $region26: #{tpu_custom_call.1} parent=1 // pred_check
      _
    $region27: #{tpu_custom_call.1} parent=1 // pred_check_branch
      %93 = sbr.rel (0) target = $region29
    $region28: #{tpu_custom_call.1} parent=1 // pred_region
      _
    $region29: #{tpu_custom_call.1} parent=1 // pred_fallthru
      _
    // Predicated region
    $region30: #{tpu_custom_call.1} parent=1 // pred_check
      _
    $region31: #{tpu_custom_call.1} parent=1 // pred_check_branch
      %95 = sbr.rel (0) target = $region33
    $region32: #{tpu_custom_call.1} parent=1 // pred_region
      %97 = vsyncadd [#allocation13], 0
      %s98 = sshll.u32 %s7, 4
      %s99 = int_to_ptr.hbm [resolvable:$true] %s98
      %s100 = sshll.u32 [#allocation14], 4
      %s101 = int_to_ptr.vmem [resolvable:$true] %s100
      %106 = dma.hbm_to_vmem [thread:$0]  %s99, 16384, %s101, [#allocation13], 256, 256, 16
    $region33: #{tpu_custom_call.1} parent=1 // pred_fallthru
      _
    // Predicated region
    $region34: #{tpu_custom_call.1} parent=1 // pred_check
      _
    $region35: #{tpu_custom_call.1} parent=1 // pred_check_branch
      %108 = sbr.rel (0) target = $region37
    $region36: #{tpu_custom_call.1} parent=1 // pred_region
      %110 = vsyncadd [#allocation16], 0
      %s112 = sshll.u32 %s8, 4
      %s113 = int_to_ptr.hbm [resolvable:$true] %s112
      %s114 = sshll.u32 [#allocation15], 4
      %s115 = int_to_ptr.vmem [resolvable:$true] %s114
      %117 = dma.hbm_to_vmem [thread:$0]  %s113, 64, %s115, [#allocation16]
    $region37: #{tpu_custom_call.1} parent=1 // pred_fallthru
      _
    // Predicated region
    $region38: #{tpu_custom_call.1} parent=1 // pred_check
      _
    $region39: #{tpu_custom_call.1} parent=1 // pred_check_branch
      %119 = sbr.rel (0) target = $region41
    $region40: #{tpu_custom_call.1} parent=1 // pred_region
      %121 = dma.done [#allocation4], 1024
    $region41: #{tpu_custom_call.1} parent=1 // pred_fallthru
      _
    // Predicated region
    $region42: #{tpu_custom_call.1} parent=1 // pred_check
      _
    $region43: #{tpu_custom_call.1} parent=1 // pred_check_branch
      %123 = sbr.rel (0) target = $region45
    $region44: #{tpu_custom_call.1} parent=1 // pred_region
      %125 = dma.done [#allocation7], 32768
    $region45: #{tpu_custom_call.1} parent=1 // pred_fallthru
      _
    // Predicated region
    $region46: #{tpu_custom_call.1} parent=1 // pred_check
      _
    $region47: #{tpu_custom_call.1} parent=1 // pred_check_branch
      %127 = sbr.rel (0) target = $region49
    $region48: #{tpu_custom_call.1} parent=1 // pred_region
      %129 = dma.done [#allocation7], 64
    $region49: #{tpu_custom_call.1} parent=1 // pred_fallthru
      _
    // Predicated region
    $region50: #{tpu_custom_call.1} parent=1 // pred_check
      _
    $region51: #{tpu_custom_call.1} parent=1 // pred_check_branch
      %131 = sbr.rel (0) target = $region53
    $region52: #{tpu_custom_call.1} parent=1 // pred_region
      %133 = dma.done [#allocation10], 16384
    $region53: #{tpu_custom_call.1} parent=1 // pred_fallthru
      _
    // Predicated region
    $region54: #{tpu_custom_call.1} parent=1 // pred_check
      _
    $region55: #{tpu_custom_call.1} parent=1 // pred_check_branch
      %135 = sbr.rel (0) target = $region57
    $region56: #{tpu_custom_call.1} parent=1 // pred_region
      %137 = dma.done [#allocation10], 64
    $region57: #{tpu_custom_call.1} parent=1 // pred_fallthru
      _
    // Predicated region
    $region58: #{tpu_custom_call.1} parent=1 // pred_check
      _
    $region59: #{tpu_custom_call.1} parent=1 // pred_check_branch
      %139 = sbr.rel (0) target = $region61
    $region60: #{tpu_custom_call.1} parent=1 // pred_region
      %141 = dma.done [#allocation13], 16384
    $region61: #{tpu_custom_call.1} parent=1 // pred_fallthru
      _
    // Predicated region
    $region62: #{tpu_custom_call.1} parent=1 // pred_check
      _
    $region63: #{tpu_custom_call.1} parent=1 // pred_check_branch
      %143 = sbr.rel (0) target = $region65
    $region64: #{tpu_custom_call.1} parent=1 // pred_region
      %145 = dma.done [#allocation13], 16384
    $region65: #{tpu_custom_call.1} parent=1 // pred_fallthru
      _
    // Predicated region
    $region66: #{tpu_custom_call.1} parent=1 // pred_check
      _
    $region67: #{tpu_custom_call.1} parent=1 // pred_check_branch
      %147 = sbr.rel (0) target = $region69
    $region68: #{tpu_custom_call.1} parent=1 // pred_region
      %149 = dma.done [#allocation16], 64
    $region69: #{tpu_custom_call.1} parent=1 // pred_fallthru
      _
    %p150 = scmp.eq.s32.totalorder 0, 0
    // Predicated region
    $region70: #{tpu_custom_call.1} parent=1 // pred_check
      %p151 = pneg %p150
    $region71: #{tpu_custom_call.1} parent=1 // pred_check_branch
      %153 = sbr.rel (%p151) target = $region73
    $region72: #{tpu_custom_call.1} parent=1 // pred_region
      %154 = vst [vmem:[#allocation2] sm:$0xff] 0.0
      %155 = vst [vmem:[#allocation2 + $0x8] sm:$0xff] 0.0
      %156 = vst [vmem:[#allocation2 + $0x10] sm:$0xff] 0.0
      %157 = vst [vmem:[#allocation2 + $0x18] sm:$0xff] 0.0
    $region73: #{tpu_custom_call.1} parent=1 // pred_fallthru
      _
    %v158 = vld [vmem:[#allocation3] sm:$0xff]
    %v159 = vld [vmem:[#allocation3 + $0x8] sm:$0xff]
    %v160 = vld [vmem:[#allocation3 + $0x10] sm:$0xff]
    %v161 = vld [vmem:[#allocation3 + $0x18] sm:$0xff]
    %v162 = vld [vmem:[#allocation3 + $0x20] sm:$0xff]
    %v163 = vld [vmem:[#allocation3 + $0x28] sm:$0xff]
    %v164 = vld [vmem:[#allocation3 + $0x30] sm:$0xff]
    %v165 = vld [vmem:[#allocation3 + $0x38] sm:$0xff]
    %v166 = vpack.c.bf16 %v158, %v158
    %v167 = vpack.c.bf16 %v159, %v159
    %v168 = vpack.c.bf16 %v160, %v160
    %v169 = vpack.c.bf16 %v161, %v161
    %v170 = vpack.c.bf16 %v162, %v162
    %v171 = vpack.c.bf16 %v163, %v163
    %v172 = vpack.c.bf16 %v164, %v164
    %v173 = vpack.c.bf16 %v165, %v165
    %v174 = vld [vmem:[#allocation2] sm:$0xff]
    %v175 = vld [vmem:[#allocation2 + $0x8] sm:$0xff]
    %v176 = vld [vmem:[#allocation2 + $0x10] sm:$0xff]
    %v177 = vld [vmem:[#allocation2 + $0x18] sm:$0xff]
    %v178 = vld [vmem:[#allocation6] sm:$0xff]
    %v179 = vld [vmem:[#allocation6 + $0x8] sm:$0xff]
    %v180 = vld [vmem:[#allocation6 + $0x10] sm:$0xff]
    %v181 = vld [vmem:[#allocation6 + $0x18] sm:$0xff]
    %v182 = vld [vmem:[#allocation6 + $0x20] sm:$0xff]
    %v183 = vld [vmem:[#allocation6 + $0x28] sm:$0xff]
    %v184 = vld [vmem:[#allocation6 + $0x30] sm:$0xff]
    %v185 = vld [vmem:[#allocation6 + $0x38] sm:$0xff]
    %v186 = vld [vmem:[#allocation6 + $0x40] sm:$0xff]
    %v187 = vld [vmem:[#allocation6 + $0x48] sm:$0xff]
    %v188 = vld [vmem:[#allocation6 + $0x50] sm:$0xff]
    %v189 = vld [vmem:[#allocation6 + $0x58] sm:$0xff]
    %v190 = vld [vmem:[#allocation6 + $0x60] sm:$0xff]
    %v191 = vld [vmem:[#allocation6 + $0x68] sm:$0xff]
    %v192 = vld [vmem:[#allocation6 + $0x70] sm:$0xff]
    %v193 = vld [vmem:[#allocation6 + $0x78] sm:$0xff]
    %v194 = vld [vmem:[#allocation6 + $0x80] sm:$0xff]
    %v195 = vld [vmem:[#allocation6 + $0x88] sm:$0xff]
    %v196 = vld [vmem:[#allocation6 + $0x90] sm:$0xff]
    %v197 = vld [vmem:[#allocation6 + $0x98] sm:$0xff]
    %v198 = vld [vmem:[#allocation6 + $0xa0] sm:$0xff]
    %v199 = vld [vmem:[#allocation6 + $0xa8] sm:$0xff]
    %v200 = vld [vmem:[#allocation6 + $0xb0] sm:$0xff]
    %v201 = vld [vmem:[#allocation6 + $0xb8] sm:$0xff]
    %v202 = vld [vmem:[#allocation6 + $0xc0] sm:$0xff]
    %v203 = vld [vmem:[#allocation6 + $0xc8] sm:$0xff]
    %v204 = vld [vmem:[#allocation6 + $0xd0] sm:$0xff]
    %v205 = vld [vmem:[#allocation6 + $0xd8] sm:$0xff]
    %v206 = vld [vmem:[#allocation6 + $0xe0] sm:$0xff]
    %v207 = vld [vmem:[#allocation6 + $0xe8] sm:$0xff]
    %v208 = vld [vmem:[#allocation6 + $0xf0] sm:$0xff]
    %v209 = vld [vmem:[#allocation6 + $0xf8] sm:$0xff]
    %v210 = vld [vmem:[#allocation6 + $0x100] sm:$0xff]
    %v211 = vld [vmem:[#allocation6 + $0x108] sm:$0xff]
    %v212 = vld [vmem:[#allocation6 + $0x110] sm:$0xff]
    %v213 = vld [vmem:[#allocation6 + $0x118] sm:$0xff]
    %v214 = vld [vmem:[#allocation6 + $0x120] sm:$0xff]
    %v215 = vld [vmem:[#allocation6 + $0x128] sm:$0xff]
    %v216 = vld [vmem:[#allocation6 + $0x130] sm:$0xff]
    %v217 = vld [vmem:[#allocation6 + $0x138] sm:$0xff]
    %v218 = vld [vmem:[#allocation6 + $0x140] sm:$0xff]
    %v219 = vld [vmem:[#allocation6 + $0x148] sm:$0xff]
    %v220 = vld [vmem:[#allocation6 + $0x150] sm:$0xff]
    %v221 = vld [vmem:[#allocation6 + $0x158] sm:$0xff]
    %v222 = vld [vmem:[#allocation6 + $0x160] sm:$0xff]
    %v223 = vld [vmem:[#allocation6 + $0x168] sm:$0xff]
    %v224 = vld [vmem:[#allocation6 + $0x170] sm:$0xff]
    %v225 = vld [vmem:[#allocation6 + $0x178] sm:$0xff]
    %v226 = vld [vmem:[#allocation6 + $0x180] sm:$0xff]
    %v227 = vld [vmem:[#allocation6 + $0x188] sm:$0xff]
    %v228 = vld [vmem:[#allocation6 + $0x190] sm:$0xff]
    %v229 = vld [vmem:[#allocation6 + $0x198] sm:$0xff]
    %v230 = vld [vmem:[#allocation6 + $0x1a0] sm:$0xff]
    %v231 = vld [vmem:[#allocation6 + $0x1a8] sm:$0xff]
    %v232 = vld [vmem:[#allocation6 + $0x1b0] sm:$0xff]
    %v233 = vld [vmem:[#allocation6 + $0x1b8] sm:$0xff]
    %v234 = vld [vmem:[#allocation6 + $0x1c0] sm:$0xff]
    %v235 = vld [vmem:[#allocation6 + $0x1c8] sm:$0xff]
    %v236 = vld [vmem:[#allocation6 + $0x1d0] sm:$0xff]
    %v237 = vld [vmem:[#allocation6 + $0x1d8] sm:$0xff]
    %v238 = vld [vmem:[#allocation6 + $0x1e0] sm:$0xff]
    %v239 = vld [vmem:[#allocation6 + $0x1e8] sm:$0xff]
    %v240 = vld [vmem:[#allocation6 + $0x1f0] sm:$0xff]
    %v241 = vld [vmem:[#allocation6 + $0x1f8] sm:$0xff]
    %v242 = vld [vmem:[#allocation6 + $0x200] sm:$0xff]
    %v243 = vld [vmem:[#allocation6 + $0x208] sm:$0xff]
    %v244 = vld [vmem:[#allocation6 + $0x210] sm:$0xff]
    %v245 = vld [vmem:[#allocation6 + $0x218] sm:$0xff]
    %v246 = vld [vmem:[#allocation6 + $0x220] sm:$0xff]
    %v247 = vld [vmem:[#allocation6 + $0x228] sm:$0xff]
    %v248 = vld [vmem:[#allocation6 + $0x230] sm:$0xff]
    %v249 = vld [vmem:[#allocation6 + $0x238] sm:$0xff]
    %v250 = vld [vmem:[#allocation6 + $0x240] sm:$0xff]
    %v251 = vld [vmem:[#allocation6 + $0x248] sm:$0xff]
    %v252 = vld [vmem:[#allocation6 + $0x250] sm:$0xff]
    %v253 = vld [vmem:[#allocation6 + $0x258] sm:$0xff]
    %v254 = vld [vmem:[#allocation6 + $0x260] sm:$0xff]
    %v255 = vld [vmem:[#allocation6 + $0x268] sm:$0xff]
    %v256 = vld [vmem:[#allocation6 + $0x270] sm:$0xff]
    %v257 = vld [vmem:[#allocation6 + $0x278] sm:$0xff]
    %v258 = vld [vmem:[#allocation6 + $0x280] sm:$0xff]
    %v259 = vld [vmem:[#allocation6 + $0x288] sm:$0xff]
    %v260 = vld [vmem:[#allocation6 + $0x290] sm:$0xff]
    %v261 = vld [vmem:[#allocation6 + $0x298] sm:$0xff]
    %v262 = vld [vmem:[#allocation6 + $0x2a0] sm:$0xff]
    %v263 = vld [vmem:[#allocation6 + $0x2a8] sm:$0xff]
    %v264 = vld [vmem:[#allocation6 + $0x2b0] sm:$0xff]
    %v265 = vld [vmem:[#allocation6 + $0x2b8] sm:$0xff]
    %v266 = vld [vmem:[#allocation6 + $0x2c0] sm:$0xff]
    %v267 = vld [vmem:[#allocation6 + $0x2c8] sm:$0xff]
    %v268 = vld [vmem:[#allocation6 + $0x2d0] sm:$0xff]
    %v269 = vld [vmem:[#allocation6 + $0x2d8] sm:$0xff]
    %v270 = vld [vmem:[#allocation6 + $0x2e0] sm:$0xff]
    %v271 = vld [vmem:[#allocation6 + $0x2e8] sm:$0xff]
    %v272 = vld [vmem:[#allocation6 + $0x2f0] sm:$0xff]
    %v273 = vld [vmem:[#allocation6 + $0x2f8] sm:$0xff]
    %v274 = vld [vmem:[#allocation6 + $0x300] sm:$0xff]
    %v275 = vld [vmem:[#allocation6 + $0x308] sm:$0xff]
    %v276 = vld [vmem:[#allocation6 + $0x310] sm:$0xff]
    %v277 = vld [vmem:[#allocation6 + $0x318] sm:$0xff]
    %v278 = vld [vmem:[#allocation6 + $0x320] sm:$0xff]
    %v279 = vld [vmem:[#allocation6 + $0x328] sm:$0xff]
    %v280 = vld [vmem:[#allocation6 + $0x330] sm:$0xff]
    %v281 = vld [vmem:[#allocation6 + $0x338] sm:$0xff]
    %v282 = vld [vmem:[#allocation6 + $0x340] sm:$0xff]
    %v283 = vld [vmem:[#allocation6 + $0x348] sm:$0xff]
    %v284 = vld [vmem:[#allocation6 + $0x350] sm:$0xff]
    %v285 = vld [vmem:[#allocation6 + $0x358] sm:$0xff]
    %v286 = vld [vmem:[#allocation6 + $0x360] sm:$0xff]
    %v287 = vld [vmem:[#allocation6 + $0x368] sm:$0xff]
    %v288 = vld [vmem:[#allocation6 + $0x370] sm:$0xff]
    %v289 = vld [vmem:[#allocation6 + $0x378] sm:$0xff]
    %v290 = vld [vmem:[#allocation6 + $0x380] sm:$0xff]
    %v291 = vld [vmem:[#allocation6 + $0x388] sm:$0xff]
    %v292 = vld [vmem:[#allocation6 + $0x390] sm:$0xff]
    %v293 = vld [vmem:[#allocation6 + $0x398] sm:$0xff]
    %v294 = vld [vmem:[#allocation6 + $0x3a0] sm:$0xff]
    %v295 = vld [vmem:[#allocation6 + $0x3a8] sm:$0xff]
    %v296 = vld [vmem:[#allocation6 + $0x3b0] sm:$0xff]
    %v297 = vld [vmem:[#allocation6 + $0x3b8] sm:$0xff]
    %v298 = vld [vmem:[#allocation6 + $0x3c0] sm:$0xff]
    %v299 = vld [vmem:[#allocation6 + $0x3c8] sm:$0xff]
    %v300 = vld [vmem:[#allocation6 + $0x3d0] sm:$0xff]
    %v301 = vld [vmem:[#allocation6 + $0x3d8] sm:$0xff]
    %v302 = vld [vmem:[#allocation6 + $0x3e0] sm:$0xff]
    %v303 = vld [vmem:[#allocation6 + $0x3e8] sm:$0xff]
    %v304 = vld [vmem:[#allocation6 + $0x3f0] sm:$0xff]
    %v305 = vld [vmem:[#allocation6 + $0x3f8] sm:$0xff]
    %v306 = vld [vmem:[#allocation6 + $0x400] sm:$0xff]
    %v307 = vld [vmem:[#allocation6 + $0x408] sm:$0xff]
    %v308 = vld [vmem:[#allocation6 + $0x410] sm:$0xff]
    %v309 = vld [vmem:[#allocation6 + $0x418] sm:$0xff]
    %v310 = vld [vmem:[#allocation6 + $0x420] sm:$0xff]
    %v311 = vld [vmem:[#allocation6 + $0x428] sm:$0xff]
    %v312 = vld [vmem:[#allocation6 + $0x430] sm:$0xff]
    %v313 = vld [vmem:[#allocation6 + $0x438] sm:$0xff]
    %v314 = vld [vmem:[#allocation6 + $0x440] sm:$0xff]
    %v315 = vld [vmem:[#allocation6 + $0x448] sm:$0xff]
    %v316 = vld [vmem:[#allocation6 + $0x450] sm:$0xff]
    %v317 = vld [vmem:[#allocation6 + $0x458] sm:$0xff]
    %v318 = vld [vmem:[#allocation6 + $0x460] sm:$0xff]
    %v319 = vld [vmem:[#allocation6 + $0x468] sm:$0xff]
    %v320 = vld [vmem:[#allocation6 + $0x470] sm:$0xff]
    %v321 = vld [vmem:[#allocation6 + $0x478] sm:$0xff]
    %v322 = vld [vmem:[#allocation6 + $0x480] sm:$0xff]
    %v323 = vld [vmem:[#allocation6 + $0x488] sm:$0xff]
    %v324 = vld [vmem:[#allocation6 + $0x490] sm:$0xff]
    %v325 = vld [vmem:[#allocation6 + $0x498] sm:$0xff]
    %v326 = vld [vmem:[#allocation6 + $0x4a0] sm:$0xff]
    %v327 = vld [vmem:[#allocation6 + $0x4a8] sm:$0xff]
    %v328 = vld [vmem:[#allocation6 + $0x4b0] sm:$0xff]
    %v329 = vld [vmem:[#allocation6 + $0x4b8] sm:$0xff]
    %v330 = vld [vmem:[#allocation6 + $0x4c0] sm:$0xff]
    %v331 = vld [vmem:[#allocation6 + $0x4c8] sm:$0xff]
    %v332 = vld [vmem:[#allocation6 + $0x4d0] sm:$0xff]
    %v333 = vld [vmem:[#allocation6 + $0x4d8] sm:$0xff]
    %v334 = vld [vmem:[#allocation6 + $0x4e0] sm:$0xff]
    %v335 = vld [vmem:[#allocation6 + $0x4e8] sm:$0xff]
    %v336 = vld [vmem:[#allocation6 + $0x4f0] sm:$0xff]
    %v337 = vld [vmem:[#allocation6 + $0x4f8] sm:$0xff]
    %v338 = vld [vmem:[#allocation6 + $0x500] sm:$0xff]
    %v339 = vld [vmem:[#allocation6 + $0x508] sm:$0xff]
    %v340 = vld [vmem:[#allocation6 + $0x510] sm:$0xff]
    %v341 = vld [vmem:[#allocation6 + $0x518] sm:$0xff]
    %v342 = vld [vmem:[#allocation6 + $0x520] sm:$0xff]
    %v343 = vld [vmem:[#allocation6 + $0x528] sm:$0xff]
    %v344 = vld [vmem:[#allocation6 + $0x530] sm:$0xff]
    %v345 = vld [vmem:[#allocation6 + $0x538] sm:$0xff]
    %v346 = vld [vmem:[#allocation6 + $0x540] sm:$0xff]
    %v347 = vld [vmem:[#allocation6 + $0x548] sm:$0xff]
    %v348 = vld [vmem:[#allocation6 + $0x550] sm:$0xff]
    %v349 = vld [vmem:[#allocation6 + $0x558] sm:$0xff]
    %v350 = vld [vmem:[#allocation6 + $0x560] sm:$0xff]
    %v351 = vld [vmem:[#allocation6 + $0x568] sm:$0xff]
    %v352 = vld [vmem:[#allocation6 + $0x570] sm:$0xff]
    %v353 = vld [vmem:[#allocation6 + $0x578] sm:$0xff]
    %v354 = vld [vmem:[#allocation6 + $0x580] sm:$0xff]
    %v355 = vld [vmem:[#allocation6 + $0x588] sm:$0xff]
    %v356 = vld [vmem:[#allocation6 + $0x590] sm:$0xff]
    %v357 = vld [vmem:[#allocation6 + $0x598] sm:$0xff]
    %v358 = vld [vmem:[#allocation6 + $0x5a0] sm:$0xff]
    %v359 = vld [vmem:[#allocation6 + $0x5a8] sm:$0xff]
    %v360 = vld [vmem:[#allocation6 + $0x5b0] sm:$0xff]
    %v361 = vld [vmem:[#allocation6 + $0x5b8] sm:$0xff]
    %v362 = vld [vmem:[#allocation6 + $0x5c0] sm:$0xff]
    %v363 = vld [vmem:[#allocation6 + $0x5c8] sm:$0xff]
    %v364 = vld [vmem:[#allocation6 + $0x5d0] sm:$0xff]
    %v365 = vld [vmem:[#allocation6 + $0x5d8] sm:$0xff]
    %v366 = vld [vmem:[#allocation6 + $0x5e0] sm:$0xff]
    %v367 = vld [vmem:[#allocation6 + $0x5e8] sm:$0xff]
    %v368 = vld [vmem:[#allocation6 + $0x5f0] sm:$0xff]
    %v369 = vld [vmem:[#allocation6 + $0x5f8] sm:$0xff]
    %v370 = vld [vmem:[#allocation6 + $0x600] sm:$0xff]
    %v371 = vld [vmem:[#allocation6 + $0x608] sm:$0xff]
    %v372 = vld [vmem:[#allocation6 + $0x610] sm:$0xff]
    %v373 = vld [vmem:[#allocation6 + $0x618] sm:$0xff]
    %v374 = vld [vmem:[#allocation6 + $0x620] sm:$0xff]
    %v375 = vld [vmem:[#allocation6 + $0x628] sm:$0xff]
    %v376 = vld [vmem:[#allocation6 + $0x630] sm:$0xff]
    %v377 = vld [vmem:[#allocation6 + $0x638] sm:$0xff]
    %v378 = vld [vmem:[#allocation6 + $0x640] sm:$0xff]
    %v379 = vld [vmem:[#allocation6 + $0x648] sm:$0xff]
    %v380 = vld [vmem:[#allocation6 + $0x650] sm:$0xff]
    %v381 = vld [vmem:[#allocation6 + $0x658] sm:$0xff]
    %v382 = vld [vmem:[#allocation6 + $0x660] sm:$0xff]
    %v383 = vld [vmem:[#allocation6 + $0x668] sm:$0xff]
    %v384 = vld [vmem:[#allocation6 + $0x670] sm:$0xff]
    %v385 = vld [vmem:[#allocation6 + $0x678] sm:$0xff]
    %v386 = vld [vmem:[#allocation6 + $0x680] sm:$0xff]
    %v387 = vld [vmem:[#allocation6 + $0x688] sm:$0xff]
    %v388 = vld [vmem:[#allocation6 + $0x690] sm:$0xff]
    %v389 = vld [vmem:[#allocation6 + $0x698] sm:$0xff]
    %v390 = vld [vmem:[#allocation6 + $0x6a0] sm:$0xff]
    %v391 = vld [vmem:[#allocation6 + $0x6a8] sm:$0xff]
    %v392 = vld [vmem:[#allocation6 + $0x6b0] sm:$0xff]
    %v393 = vld [vmem:[#allocation6 + $0x6b8] sm:$0xff]
    %v394 = vld [vmem:[#allocation6 + $0x6c0] sm:$0xff]
    %v395 = vld [vmem:[#allocation6 + $0x6c8] sm:$0xff]
    %v396 = vld [vmem:[#allocation6 + $0x6d0] sm:$0xff]
    %v397 = vld [vmem:[#allocation6 + $0x6d8] sm:$0xff]
    %v398 = vld [vmem:[#allocation6 + $0x6e0] sm:$0xff]
    %v399 = vld [vmem:[#allocation6 + $0x6e8] sm:$0xff]
    %v400 = vld [vmem:[#allocation6 + $0x6f0] sm:$0xff]
    %v401 = vld [vmem:[#allocation6 + $0x6f8] sm:$0xff]
    %v402 = vld [vmem:[#allocation6 + $0x700] sm:$0xff]
    %v403 = vld [vmem:[#allocation6 + $0x708] sm:$0xff]
    %v404 = vld [vmem:[#allocation6 + $0x710] sm:$0xff]
    %v405 = vld [vmem:[#allocation6 + $0x718] sm:$0xff]
    %v406 = vld [vmem:[#allocation6 + $0x720] sm:$0xff]
    %v407 = vld [vmem:[#allocation6 + $0x728] sm:$0xff]
    %v408 = vld [vmem:[#allocation6 + $0x730] sm:$0xff]
    %v409 = vld [vmem:[#allocation6 + $0x738] sm:$0xff]
    %v410 = vld [vmem:[#allocation6 + $0x740] sm:$0xff]
    %v411 = vld [vmem:[#allocation6 + $0x748] sm:$0xff]
    %v412 = vld [vmem:[#allocation6 + $0x750] sm:$0xff]
    %v413 = vld [vmem:[#allocation6 + $0x758] sm:$0xff]
    %v414 = vld [vmem:[#allocation6 + $0x760] sm:$0xff]
    %v415 = vld [vmem:[#allocation6 + $0x768] sm:$0xff]
    %v416 = vld [vmem:[#allocation6 + $0x770] sm:$0xff]
    %v417 = vld [vmem:[#allocation6 + $0x778] sm:$0xff]
    %v418 = vld [vmem:[#allocation6 + $0x780] sm:$0xff]
    %v419 = vld [vmem:[#allocation6 + $0x788] sm:$0xff]
    %v420 = vld [vmem:[#allocation6 + $0x790] sm:$0xff]
    %v421 = vld [vmem:[#allocation6 + $0x798] sm:$0xff]
    %v422 = vld [vmem:[#allocation6 + $0x7a0] sm:$0xff]
    %v423 = vld [vmem:[#allocation6 + $0x7a8] sm:$0xff]
    %v424 = vld [vmem:[#allocation6 + $0x7b0] sm:$0xff]
    %v425 = vld [vmem:[#allocation6 + $0x7b8] sm:$0xff]
    %v426 = vld [vmem:[#allocation6 + $0x7c0] sm:$0xff]
    %v427 = vld [vmem:[#allocation6 + $0x7c8] sm:$0xff]
    %v428 = vld [vmem:[#allocation6 + $0x7d0] sm:$0xff]
    %v429 = vld [vmem:[#allocation6 + $0x7d8] sm:$0xff]
    %v430 = vld [vmem:[#allocation6 + $0x7e0] sm:$0xff]
    %v431 = vld [vmem:[#allocation6 + $0x7e8] sm:$0xff]
    %v432 = vld [vmem:[#allocation6 + $0x7f0] sm:$0xff]
    %v433 = vld [vmem:[#allocation6 + $0x7f8] sm:$0xff]
    %v690 = vunpack.c.l.b16 %v178
    %v691 = vunpack.c.h.b16 %v178
    %v692 = vunpack.c.l.b16 %v179
    %v693 = vunpack.c.h.b16 %v179
    %v694 = vunpack.c.l.b16 %v180
    %v695 = vunpack.c.h.b16 %v180
    %v696 = vunpack.c.l.b16 %v181
    %v697 = vunpack.c.h.b16 %v181
    %v698 = vunpack.c.l.b16 %v182
    %v699 = vunpack.c.h.b16 %v182
    %v700 = vunpack.c.l.b16 %v183
    %v701 = vunpack.c.h.b16 %v183
    %v702 = vunpack.c.l.b16 %v184
    %v703 = vunpack.c.h.b16 %v184
    %v704 = vunpack.c.l.b16 %v185
    %v705 = vunpack.c.h.b16 %v185
    %v706 = vunpack.c.l.b16 %v186
    %v707 = vunpack.c.h.b16 %v186
    %v708 = vunpack.c.l.b16 %v187
    %v709 = vunpack.c.h.b16 %v187
    %v710 = vunpack.c.l.b16 %v188
    %v711 = vunpack.c.h.b16 %v188
    %v712 = vunpack.c.l.b16 %v189
    %v713 = vunpack.c.h.b16 %v189
    %v714 = vunpack.c.l.b16 %v190
    %v715 = vunpack.c.h.b16 %v190
    %v716 = vunpack.c.l.b16 %v191
    %v717 = vunpack.c.h.b16 %v191
    %v718 = vunpack.c.l.b16 %v192
    %v719 = vunpack.c.h.b16 %v192
    %v720 = vunpack.c.l.b16 %v193
    %v721 = vunpack.c.h.b16 %v193
    %v722 = vunpack.c.l.b16 %v194
    %v723 = vunpack.c.h.b16 %v194
    %v724 = vunpack.c.l.b16 %v195
    %v725 = vunpack.c.h.b16 %v195
    %v726 = vunpack.c.l.b16 %v196
    %v727 = vunpack.c.h.b16 %v196
    %v728 = vunpack.c.l.b16 %v197
    %v729 = vunpack.c.h.b16 %v197
    %v730 = vunpack.c.l.b16 %v198
    %v731 = vunpack.c.h.b16 %v198
    %v732 = vunpack.c.l.b16 %v199
    %v733 = vunpack.c.h.b16 %v199
    %v734 = vunpack.c.l.b16 %v200
    %v735 = vunpack.c.h.b16 %v200
    %v736 = vunpack.c.l.b16 %v201
    %v737 = vunpack.c.h.b16 %v201
    %v738 = vunpack.c.l.b16 %v202
    %v739 = vunpack.c.h.b16 %v202
    %v740 = vunpack.c.l.b16 %v203
    %v741 = vunpack.c.h.b16 %v203
    %v742 = vunpack.c.l.b16 %v204
    %v743 = vunpack.c.h.b16 %v204
    %v744 = vunpack.c.l.b16 %v205
    %v745 = vunpack.c.h.b16 %v205
    %v746 = vunpack.c.l.b16 %v206
    %v747 = vunpack.c.h.b16 %v206
    %v748 = vunpack.c.l.b16 %v207
    %v749 = vunpack.c.h.b16 %v207
    %v750 = vunpack.c.l.b16 %v208
    %v751 = vunpack.c.h.b16 %v208
    %v752 = vunpack.c.l.b16 %v209
    %v753 = vunpack.c.h.b16 %v209
    %v754 = vunpack.c.l.b16 %v210
    %v755 = vunpack.c.h.b16 %v210
    %v756 = vunpack.c.l.b16 %v211
    %v757 = vunpack.c.h.b16 %v211
    %v758 = vunpack.c.l.b16 %v212
    %v759 = vunpack.c.h.b16 %v212
    %v760 = vunpack.c.l.b16 %v213
    %v761 = vunpack.c.h.b16 %v213
    %v762 = vunpack.c.l.b16 %v214
    %v763 = vunpack.c.h.b16 %v214
    %v764 = vunpack.c.l.b16 %v215
    %v765 = vunpack.c.h.b16 %v215
    %v766 = vunpack.c.l.b16 %v216
    %v767 = vunpack.c.h.b16 %v216
    %v768 = vunpack.c.l.b16 %v217
    %v769 = vunpack.c.h.b16 %v217
    %v770 = vunpack.c.l.b16 %v218
    %v771 = vunpack.c.h.b16 %v218
    %v772 = vunpack.c.l.b16 %v219
    %v773 = vunpack.c.h.b16 %v219
    %v774 = vunpack.c.l.b16 %v220
    %v775 = vunpack.c.h.b16 %v220
    %v776 = vunpack.c.l.b16 %v221
    %v777 = vunpack.c.h.b16 %v221
    %v778 = vunpack.c.l.b16 %v222
    %v779 = vunpack.c.h.b16 %v222
    %v780 = vunpack.c.l.b16 %v223
    %v781 = vunpack.c.h.b16 %v223
    %v782 = vunpack.c.l.b16 %v224
    %v783 = vunpack.c.h.b16 %v224
    %v784 = vunpack.c.l.b16 %v225
    %v785 = vunpack.c.h.b16 %v225
    %v786 = vunpack.c.l.b16 %v226
    %v787 = vunpack.c.h.b16 %v226
    %v788 = vunpack.c.l.b16 %v227
    %v789 = vunpack.c.h.b16 %v227
    %v790 = vunpack.c.l.b16 %v228
    %v791 = vunpack.c.h.b16 %v228
    %v792 = vunpack.c.l.b16 %v229
    %v793 = vunpack.c.h.b16 %v229
    %v794 = vunpack.c.l.b16 %v230
    %v795 = vunpack.c.h.b16 %v230
    %v796 = vunpack.c.l.b16 %v231
    %v797 = vunpack.c.h.b16 %v231
    %v798 = vunpack.c.l.b16 %v232
    %v799 = vunpack.c.h.b16 %v232
    %v800 = vunpack.c.l.b16 %v233
    %v801 = vunpack.c.h.b16 %v233
    %v802 = vunpack.c.l.b16 %v234
    %v803 = vunpack.c.h.b16 %v234
    %v804 = vunpack.c.l.b16 %v235
    %v805 = vunpack.c.h.b16 %v235
    %v806 = vunpack.c.l.b16 %v236
    %v807 = vunpack.c.h.b16 %v236
    %v808 = vunpack.c.l.b16 %v237
    %v809 = vunpack.c.h.b16 %v237
    %v810 = vunpack.c.l.b16 %v238
    %v811 = vunpack.c.h.b16 %v238
    %v812 = vunpack.c.l.b16 %v239
    %v813 = vunpack.c.h.b16 %v239
    %v814 = vunpack.c.l.b16 %v240
    %v815 = vunpack.c.h.b16 %v240
    %v816 = vunpack.c.l.b16 %v241
    %v817 = vunpack.c.h.b16 %v241
    %v818 = vunpack.c.l.b16 %v242
    %v819 = vunpack.c.h.b16 %v242
    %v820 = vunpack.c.l.b16 %v243
    %v821 = vunpack.c.h.b16 %v243
    %v822 = vunpack.c.l.b16 %v244
    %v823 = vunpack.c.h.b16 %v244
    %v824 = vunpack.c.l.b16 %v245
    %v825 = vunpack.c.h.b16 %v245
    %v826 = vunpack.c.l.b16 %v246
    %v827 = vunpack.c.h.b16 %v246
    %v828 = vunpack.c.l.b16 %v247
    %v829 = vunpack.c.h.b16 %v247
    %v830 = vunpack.c.l.b16 %v248
    %v831 = vunpack.c.h.b16 %v248
    %v832 = vunpack.c.l.b16 %v249
    %v833 = vunpack.c.h.b16 %v249
    %v834 = vunpack.c.l.b16 %v250
    %v835 = vunpack.c.h.b16 %v250
    %v836 = vunpack.c.l.b16 %v251
    %v837 = vunpack.c.h.b16 %v251
    %v838 = vunpack.c.l.b16 %v252
    %v839 = vunpack.c.h.b16 %v252
    %v840 = vunpack.c.l.b16 %v253
    %v841 = vunpack.c.h.b16 %v253
    %v842 = vunpack.c.l.b16 %v254
    %v843 = vunpack.c.h.b16 %v254
    %v844 = vunpack.c.l.b16 %v255
    %v845 = vunpack.c.h.b16 %v255
    %v846 = vunpack.c.l.b16 %v256
    %v847 = vunpack.c.h.b16 %v256
    %v848 = vunpack.c.l.b16 %v257
    %v849 = vunpack.c.h.b16 %v257
    %v850 = vunpack.c.l.b16 %v258
    %v851 = vunpack.c.h.b16 %v258
    %v852 = vunpack.c.l.b16 %v259
    %v853 = vunpack.c.h.b16 %v259
    %v854 = vunpack.c.l.b16 %v260
    %v855 = vunpack.c.h.b16 %v260
    %v856 = vunpack.c.l.b16 %v261
    %v857 = vunpack.c.h.b16 %v261
    %v858 = vunpack.c.l.b16 %v262
    %v859 = vunpack.c.h.b16 %v262
    %v860 = vunpack.c.l.b16 %v263
    %v861 = vunpack.c.h.b16 %v263
    %v862 = vunpack.c.l.b16 %v264
    %v863 = vunpack.c.h.b16 %v264
    %v864 = vunpack.c.l.b16 %v265
    %v865 = vunpack.c.h.b16 %v265
    %v866 = vunpack.c.l.b16 %v266
    %v867 = vunpack.c.h.b16 %v266
    %v868 = vunpack.c.l.b16 %v267
    %v869 = vunpack.c.h.b16 %v267
    %v870 = vunpack.c.l.b16 %v268
    %v871 = vunpack.c.h.b16 %v268
    %v872 = vunpack.c.l.b16 %v269
    %v873 = vunpack.c.h.b16 %v269
    %v874 = vunpack.c.l.b16 %v270
    %v875 = vunpack.c.h.b16 %v270
    %v876 = vunpack.c.l.b16 %v271
    %v877 = vunpack.c.h.b16 %v271
    %v878 = vunpack.c.l.b16 %v272
    %v879 = vunpack.c.h.b16 %v272
    %v880 = vunpack.c.l.b16 %v273
    %v881 = vunpack.c.h.b16 %v273
    %v882 = vunpack.c.l.b16 %v274
    %v883 = vunpack.c.h.b16 %v274
    %v884 = vunpack.c.l.b16 %v275
    %v885 = vunpack.c.h.b16 %v275
    %v886 = vunpack.c.l.b16 %v276
    %v887 = vunpack.c.h.b16 %v276
    %v888 = vunpack.c.l.b16 %v277
    %v889 = vunpack.c.h.b16 %v277
    %v890 = vunpack.c.l.b16 %v278
    %v891 = vunpack.c.h.b16 %v278
    %v892 = vunpack.c.l.b16 %v279
    %v893 = vunpack.c.h.b16 %v279
    %v894 = vunpack.c.l.b16 %v280
    %v895 = vunpack.c.h.b16 %v280
    %v896 = vunpack.c.l.b16 %v281
    %v897 = vunpack.c.h.b16 %v281
    %v898 = vunpack.c.l.b16 %v282
    %v899 = vunpack.c.h.b16 %v282
    %v900 = vunpack.c.l.b16 %v283
    %v901 = vunpack.c.h.b16 %v283
    %v902 = vunpack.c.l.b16 %v284
    %v903 = vunpack.c.h.b16 %v284
    %v904 = vunpack.c.l.b16 %v285
    %v905 = vunpack.c.h.b16 %v285
    %v906 = vunpack.c.l.b16 %v286
    %v907 = vunpack.c.h.b16 %v286
    %v908 = vunpack.c.l.b16 %v287
    %v909 = vunpack.c.h.b16 %v287
    %v910 = vunpack.c.l.b16 %v288
    %v911 = vunpack.c.h.b16 %v288
    %v912 = vunpack.c.l.b16 %v289
    %v913 = vunpack.c.h.b16 %v289
    %v914 = vunpack.c.l.b16 %v290
    %v915 = vunpack.c.h.b16 %v290
    %v916 = vunpack.c.l.b16 %v291
    %v917 = vunpack.c.h.b16 %v291
    %v918 = vunpack.c.l.b16 %v292
    %v919 = vunpack.c.h.b16 %v292
    %v920 = vunpack.c.l.b16 %v293
    %v921 = vunpack.c.h.b16 %v293
    %v922 = vunpack.c.l.b16 %v294
    %v923 = vunpack.c.h.b16 %v294
    %v924 = vunpack.c.l.b16 %v295
    %v925 = vunpack.c.h.b16 %v295
    %v926 = vunpack.c.l.b16 %v296
    %v927 = vunpack.c.h.b16 %v296
    %v928 = vunpack.c.l.b16 %v297
    %v929 = vunpack.c.h.b16 %v297
    %v930 = vunpack.c.l.b16 %v298
    %v931 = vunpack.c.h.b16 %v298
    %v932 = vunpack.c.l.b16 %v299
    %v933 = vunpack.c.h.b16 %v299
    %v934 = vunpack.c.l.b16 %v300
    %v935 = vunpack.c.h.b16 %v300
    %v936 = vunpack.c.l.b16 %v301
    %v937 = vunpack.c.h.b16 %v301
    %v938 = vunpack.c.l.b16 %v302
    %v939 = vunpack.c.h.b16 %v302
    %v940 = vunpack.c.l.b16 %v303
    %v941 = vunpack.c.h.b16 %v303
    %v942 = vunpack.c.l.b16 %v304
    %v943 = vunpack.c.h.b16 %v304
    %v944 = vunpack.c.l.b16 %v305
    %v945 = vunpack.c.h.b16 %v305
    %v946 = vunpack.c.l.b16 %v306
    %v947 = vunpack.c.h.b16 %v306
    %v948 = vunpack.c.l.b16 %v307
    %v949 = vunpack.c.h.b16 %v307
    %v950 = vunpack.c.l.b16 %v308
    %v951 = vunpack.c.h.b16 %v308
    %v952 = vunpack.c.l.b16 %v309
    %v953 = vunpack.c.h.b16 %v309
    %v954 = vunpack.c.l.b16 %v310
    %v955 = vunpack.c.h.b16 %v310
    %v956 = vunpack.c.l.b16 %v311
    %v957 = vunpack.c.h.b16 %v311
    %v958 = vunpack.c.l.b16 %v312
    %v959 = vunpack.c.h.b16 %v312
    %v960 = vunpack.c.l.b16 %v313
    %v961 = vunpack.c.h.b16 %v313
    %v962 = vunpack.c.l.b16 %v314
    %v963 = vunpack.c.h.b16 %v314
    %v964 = vunpack.c.l.b16 %v315
    %v965 = vunpack.c.h.b16 %v315
    %v966 = vunpack.c.l.b16 %v316
    %v967 = vunpack.c.h.b16 %v316
    %v968 = vunpack.c.l.b16 %v317
    %v969 = vunpack.c.h.b16 %v317
    %v970 = vunpack.c.l.b16 %v318
    %v971 = vunpack.c.h.b16 %v318
    %v972 = vunpack.c.l.b16 %v319
    %v973 = vunpack.c.h.b16 %v319
    %v974 = vunpack.c.l.b16 %v320
    %v975 = vunpack.c.h.b16 %v320
    %v976 = vunpack.c.l.b16 %v321
    %v977 = vunpack.c.h.b16 %v321
    %v978 = vunpack.c.l.b16 %v322
    %v979 = vunpack.c.h.b16 %v322
    %v980 = vunpack.c.l.b16 %v323
    %v981 = vunpack.c.h.b16 %v323
    %v982 = vunpack.c.l.b16 %v324
    %v983 = vunpack.c.h.b16 %v324
    %v984 = vunpack.c.l.b16 %v325
    %v985 = vunpack.c.h.b16 %v325
    %v986 = vunpack.c.l.b16 %v326
    %v987 = vunpack.c.h.b16 %v326
    %v988 = vunpack.c.l.b16 %v327
    %v989 = vunpack.c.h.b16 %v327
    %v990 = vunpack.c.l.b16 %v328
    %v991 = vunpack.c.h.b16 %v328
    %v992 = vunpack.c.l.b16 %v329
    %v993 = vunpack.c.h.b16 %v329
    %v994 = vunpack.c.l.b16 %v330
    %v995 = vunpack.c.h.b16 %v330
    %v996 = vunpack.c.l.b16 %v331
    %v997 = vunpack.c.h.b16 %v331
    %v998 = vunpack.c.l.b16 %v332
    %v999 = vunpack.c.h.b16 %v332
    %v1000 = vunpack.c.l.b16 %v333
    %v1001 = vunpack.c.h.b16 %v333
    %v1002 = vunpack.c.l.b16 %v334
    %v1003 = vunpack.c.h.b16 %v334
    %v1004 = vunpack.c.l.b16 %v335
    %v1005 = vunpack.c.h.b16 %v335
    %v1006 = vunpack.c.l.b16 %v336
    %v1007 = vunpack.c.h.b16 %v336
    %v1008 = vunpack.c.l.b16 %v337
    %v1009 = vunpack.c.h.b16 %v337
    %v1010 = vunpack.c.l.b16 %v338
    %v1011 = vunpack.c.h.b16 %v338
    %v1012 = vunpack.c.l.b16 %v339
    %v1013 = vunpack.c.h.b16 %v339
    %v1014 = vunpack.c.l.b16 %v340
    %v1015 = vunpack.c.h.b16 %v340
    %v1016 = vunpack.c.l.b16 %v341
    %v1017 = vunpack.c.h.b16 %v341
    %v1018 = vunpack.c.l.b16 %v342
    %v1019 = vunpack.c.h.b16 %v342
    %v1020 = vunpack.c.l.b16 %v343
    %v1021 = vunpack.c.h.b16 %v343
    %v1022 = vunpack.c.l.b16 %v344
    %v1023 = vunpack.c.h.b16 %v344
    %v1024 = vunpack.c.l.b16 %v345
    %v1025 = vunpack.c.h.b16 %v345
    %v1026 = vunpack.c.l.b16 %v346
    %v1027 = vunpack.c.h.b16 %v346
    %v1028 = vunpack.c.l.b16 %v347
    %v1029 = vunpack.c.h.b16 %v347
    %v1030 = vunpack.c.l.b16 %v348
    %v1031 = vunpack.c.h.b16 %v348
    %v1032 = vunpack.c.l.b16 %v349
    %v1033 = vunpack.c.h.b16 %v349
    %v1034 = vunpack.c.l.b16 %v350
    %v1035 = vunpack.c.h.b16 %v350
    %v1036 = vunpack.c.l.b16 %v351
    %v1037 = vunpack.c.h.b16 %v351
    %v1038 = vunpack.c.l.b16 %v352
    %v1039 = vunpack.c.h.b16 %v352
    %v1040 = vunpack.c.l.b16 %v353
    %v1041 = vunpack.c.h.b16 %v353
    %v1042 = vunpack.c.l.b16 %v354
    %v1043 = vunpack.c.h.b16 %v354
    %v1044 = vunpack.c.l.b16 %v355
    %v1045 = vunpack.c.h.b16 %v355
    %v1046 = vunpack.c.l.b16 %v356
    %v1047 = vunpack.c.h.b16 %v356
    %v1048 = vunpack.c.l.b16 %v357
    %v1049 = vunpack.c.h.b16 %v357
    %v1050 = vunpack.c.l.b16 %v358
    %v1051 = vunpack.c.h.b16 %v358
    %v1052 = vunpack.c.l.b16 %v359
    %v1053 = vunpack.c.h.b16 %v359
    %v1054 = vunpack.c.l.b16 %v360
    %v1055 = vunpack.c.h.b16 %v360
    %v1056 = vunpack.c.l.b16 %v361
    %v1057 = vunpack.c.h.b16 %v361
    %v1058 = vunpack.c.l.b16 %v362
    %v1059 = vunpack.c.h.b16 %v362
    %v1060 = vunpack.c.l.b16 %v363
    %v1061 = vunpack.c.h.b16 %v363
    %v1062 = vunpack.c.l.b16 %v364
    %v1063 = vunpack.c.h.b16 %v364
    %v1064 = vunpack.c.l.b16 %v365
    %v1065 = vunpack.c.h.b16 %v365
    %v1066 = vunpack.c.l.b16 %v366
    %v1067 = vunpack.c.h.b16 %v366
    %v1068 = vunpack.c.l.b16 %v367
    %v1069 = vunpack.c.h.b16 %v367
    %v1070 = vunpack.c.l.b16 %v368
    %v1071 = vunpack.c.h.b16 %v368
    %v1072 = vunpack.c.l.b16 %v369
    %v1073 = vunpack.c.h.b16 %v369
    %v1074 = vunpack.c.l.b16 %v370
    %v1075 = vunpack.c.h.b16 %v370
    %v1076 = vunpack.c.l.b16 %v371
    %v1077 = vunpack.c.h.b16 %v371
    %v1078 = vunpack.c.l.b16 %v372
    %v1079 = vunpack.c.h.b16 %v372
    %v1080 = vunpack.c.l.b16 %v373
    %v1081 = vunpack.c.h.b16 %v373
    %v1082 = vunpack.c.l.b16 %v374
    %v1083 = vunpack.c.h.b16 %v374
    %v1084 = vunpack.c.l.b16 %v375
    %v1085 = vunpack.c.h.b16 %v375
    %v1086 = vunpack.c.l.b16 %v376
    %v1087 = vunpack.c.h.b16 %v376
    %v1088 = vunpack.c.l.b16 %v377
    %v1089 = vunpack.c.h.b16 %v377
    %v1090 = vunpack.c.l.b16 %v378
    %v1091 = vunpack.c.h.b16 %v378
    %v1092 = vunpack.c.l.b16 %v379
    %v1093 = vunpack.c.h.b16 %v379
    %v1094 = vunpack.c.l.b16 %v380
    %v1095 = vunpack.c.h.b16 %v380
    %v1096 = vunpack.c.l.b16 %v381
    %v1097 = vunpack.c.h.b16 %v381
    %v1098 = vunpack.c.l.b16 %v382
    %v1099 = vunpack.c.h.b16 %v382
    %v1100 = vunpack.c.l.b16 %v383
    %v1101 = vunpack.c.h.b16 %v383
    %v1102 = vunpack.c.l.b16 %v384
    %v1103 = vunpack.c.h.b16 %v384
    %v1104 = vunpack.c.l.b16 %v385
    %v1105 = vunpack.c.h.b16 %v385
    %v1106 = vunpack.c.l.b16 %v386
    %v1107 = vunpack.c.h.b16 %v386
    %v1108 = vunpack.c.l.b16 %v387
    %v1109 = vunpack.c.h.b16 %v387
    %v1110 = vunpack.c.l.b16 %v388
    %v1111 = vunpack.c.h.b16 %v388
    %v1112 = vunpack.c.l.b16 %v389
    %v1113 = vunpack.c.h.b16 %v389
    %v1114 = vunpack.c.l.b16 %v390
    %v1115 = vunpack.c.h.b16 %v390
    %v1116 = vunpack.c.l.b16 %v391
    %v1117 = vunpack.c.h.b16 %v391
    %v1118 = vunpack.c.l.b16 %v392
    %v1119 = vunpack.c.h.b16 %v392
    %v1120 = vunpack.c.l.b16 %v393
    %v1121 = vunpack.c.h.b16 %v393
    %v1122 = vunpack.c.l.b16 %v394
    %v1123 = vunpack.c.h.b16 %v394
    %v1124 = vunpack.c.l.b16 %v395
    %v1125 = vunpack.c.h.b16 %v395
    %v1126 = vunpack.c.l.b16 %v396
    %v1127 = vunpack.c.h.b16 %v396
    %v1128 = vunpack.c.l.b16 %v397
    %v1129 = vunpack.c.h.b16 %v397
    %v1130 = vunpack.c.l.b16 %v398
    %v1131 = vunpack.c.h.b16 %v398
    %v1132 = vunpack.c.l.b16 %v399
    %v1133 = vunpack.c.h.b16 %v399
    %v1134 = vunpack.c.l.b16 %v400
    %v1135 = vunpack.c.h.b16 %v400
    %v1136 = vunpack.c.l.b16 %v401
    %v1137 = vunpack.c.h.b16 %v401
    %v1138 = vunpack.c.l.b16 %v402
    %v1139 = vunpack.c.h.b16 %v402
    %v1140 = vunpack.c.l.b16 %v403
    %v1141 = vunpack.c.h.b16 %v403
    %v1142 = vunpack.c.l.b16 %v404
    %v1143 = vunpack.c.h.b16 %v404
    %v1144 = vunpack.c.l.b16 %v405
    %v1145 = vunpack.c.h.b16 %v405
    %v1146 = vunpack.c.l.b16 %v406
    %v1147 = vunpack.c.h.b16 %v406
    %v1148 = vunpack.c.l.b16 %v407
    %v1149 = vunpack.c.h.b16 %v407
    %v1150 = vunpack.c.l.b16 %v408
    %v1151 = vunpack.c.h.b16 %v408
    %v1152 = vunpack.c.l.b16 %v409
    %v1153 = vunpack.c.h.b16 %v409
    %v1154 = vunpack.c.l.b16 %v410
    %v1155 = vunpack.c.h.b16 %v410
    %v1156 = vunpack.c.l.b16 %v411
    %v1157 = vunpack.c.h.b16 %v411
    %v1158 = vunpack.c.l.b16 %v412
    %v1159 = vunpack.c.h.b16 %v412
    %v1160 = vunpack.c.l.b16 %v413
    %v1161 = vunpack.c.h.b16 %v413
    %v1162 = vunpack.c.l.b16 %v414
    %v1163 = vunpack.c.h.b16 %v414
    %v1164 = vunpack.c.l.b16 %v415
    %v1165 = vunpack.c.h.b16 %v415
    %v1166 = vunpack.c.l.b16 %v416
    %v1167 = vunpack.c.h.b16 %v416
    %v1168 = vunpack.c.l.b16 %v417
    %v1169 = vunpack.c.h.b16 %v417
    %v1170 = vunpack.c.l.b16 %v418
    %v1171 = vunpack.c.h.b16 %v418
    %v1172 = vunpack.c.l.b16 %v419
    %v1173 = vunpack.c.h.b16 %v419
    %v1174 = vunpack.c.l.b16 %v420
    %v1175 = vunpack.c.h.b16 %v420
    %v1176 = vunpack.c.l.b16 %v421
    %v1177 = vunpack.c.h.b16 %v421
    %v1178 = vunpack.c.l.b16 %v422
    %v1179 = vunpack.c.h.b16 %v422
    %v1180 = vunpack.c.l.b16 %v423
    %v1181 = vunpack.c.h.b16 %v423
    %v1182 = vunpack.c.l.b16 %v424
    %v1183 = vunpack.c.h.b16 %v424
    %v1184 = vunpack.c.l.b16 %v425
    %v1185 = vunpack.c.h.b16 %v425
    %v1186 = vunpack.c.l.b16 %v426
    %v1187 = vunpack.c.h.b16 %v426
    %v1188 = vunpack.c.l.b16 %v427
    %v1189 = vunpack.c.h.b16 %v427
    %v1190 = vunpack.c.l.b16 %v428
    %v1191 = vunpack.c.h.b16 %v428
    %v1192 = vunpack.c.l.b16 %v429
    %v1193 = vunpack.c.h.b16 %v429
    %v1194 = vunpack.c.l.b16 %v430
    %v1195 = vunpack.c.h.b16 %v430
    %v1196 = vunpack.c.l.b16 %v431
    %v1197 = vunpack.c.h.b16 %v431
    %v1198 = vunpack.c.l.b16 %v432
    %v1199 = vunpack.c.h.b16 %v432
    %v1200 = vunpack.c.l.b16 %v433
    %v1201 = vunpack.c.h.b16 %v433
    %v1202 = vpack.c.b16 %v694, %v690
    %v1203 = vpack.c.b16 %v695, %v691
    %v1204 = vpack.c.b16 %v696, %v692
    %v1205 = vpack.c.b16 %v697, %v693
    %v1206 = vpack.c.b16 %v702, %v698
    %v1207 = vpack.c.b16 %v703, %v699
    %v1208 = vpack.c.b16 %v704, %v700
    %v1209 = vpack.c.b16 %v705, %v701
    %v1210 = vpack.c.b16 %v710, %v706
    %v1211 = vpack.c.b16 %v711, %v707
    %v1212 = vpack.c.b16 %v712, %v708
    %v1213 = vpack.c.b16 %v713, %v709
    %v1214 = vpack.c.b16 %v718, %v714
    %v1215 = vpack.c.b16 %v719, %v715
    %v1216 = vpack.c.b16 %v720, %v716
    %v1217 = vpack.c.b16 %v721, %v717
    %v1218 = vpack.c.b16 %v726, %v722
    %v1219 = vpack.c.b16 %v727, %v723
    %v1220 = vpack.c.b16 %v728, %v724
    %v1221 = vpack.c.b16 %v729, %v725
    %v1222 = vpack.c.b16 %v734, %v730
    %v1223 = vpack.c.b16 %v735, %v731
    %v1224 = vpack.c.b16 %v736, %v732
    %v1225 = vpack.c.b16 %v737, %v733
    %v1226 = vpack.c.b16 %v742, %v738
    %v1227 = vpack.c.b16 %v743, %v739
    %v1228 = vpack.c.b16 %v744, %v740
    %v1229 = vpack.c.b16 %v745, %v741
    %v1230 = vpack.c.b16 %v750, %v746
    %v1231 = vpack.c.b16 %v751, %v747
    %v1232 = vpack.c.b16 %v752, %v748
    %v1233 = vpack.c.b16 %v753, %v749
    %v1234 = vpack.c.b16 %v758, %v754
    %v1235 = vpack.c.b16 %v759, %v755
    %v1236 = vpack.c.b16 %v760, %v756
    %v1237 = vpack.c.b16 %v761, %v757
    %v1238 = vpack.c.b16 %v766, %v762
    %v1239 = vpack.c.b16 %v767, %v763
    %v1240 = vpack.c.b16 %v768, %v764
    %v1241 = vpack.c.b16 %v769, %v765
    %v1242 = vpack.c.b16 %v774, %v770
    %v1243 = vpack.c.b16 %v775, %v771
    %v1244 = vpack.c.b16 %v776, %v772
    %v1245 = vpack.c.b16 %v777, %v773
    %v1246 = vpack.c.b16 %v782, %v778
    %v1247 = vpack.c.b16 %v783, %v779
    %v1248 = vpack.c.b16 %v784, %v780
    %v1249 = vpack.c.b16 %v785, %v781
    %v1250 = vpack.c.b16 %v790, %v786
    %v1251 = vpack.c.b16 %v791, %v787
    %v1252 = vpack.c.b16 %v792, %v788
    %v1253 = vpack.c.b16 %v793, %v789
    %v1254 = vpack.c.b16 %v798, %v794
    %v1255 = vpack.c.b16 %v799, %v795
    %v1256 = vpack.c.b16 %v800, %v796
    %v1257 = vpack.c.b16 %v801, %v797
    %v1258 = vpack.c.b16 %v806, %v802
    %v1259 = vpack.c.b16 %v807, %v803
    %v1260 = vpack.c.b16 %v808, %v804
    %v1261 = vpack.c.b16 %v809, %v805
    %v1262 = vpack.c.b16 %v814, %v810
    %v1263 = vpack.c.b16 %v815, %v811
    %v1264 = vpack.c.b16 %v816, %v812
    %v1265 = vpack.c.b16 %v817, %v813
    %v1266 = vpack.c.b16 %v822, %v818
    %v1267 = vpack.c.b16 %v823, %v819
    %v1268 = vpack.c.b16 %v824, %v820
    %v1269 = vpack.c.b16 %v825, %v821
    %v1270 = vpack.c.b16 %v830, %v826
    %v1271 = vpack.c.b16 %v831, %v827
    %v1272 = vpack.c.b16 %v832, %v828
    %v1273 = vpack.c.b16 %v833, %v829
    %v1274 = vpack.c.b16 %v838, %v834
    %v1275 = vpack.c.b16 %v839, %v835
    %v1276 = vpack.c.b16 %v840, %v836
    %v1277 = vpack.c.b16 %v841, %v837
    %v1278 = vpack.c.b16 %v846, %v842
    %v1279 = vpack.c.b16 %v847, %v843
    %v1280 = vpack.c.b16 %v848, %v844
    %v1281 = vpack.c.b16 %v849, %v845
    %v1282 = vpack.c.b16 %v854, %v850
    %v1283 = vpack.c.b16 %v855, %v851
    %v1284 = vpack.c.b16 %v856, %v852
    %v1285 = vpack.c.b16 %v857, %v853
    %v1286 = vpack.c.b16 %v862, %v858
    %v1287 = vpack.c.b16 %v863, %v859
    %v1288 = vpack.c.b16 %v864, %v860
    %v1289 = vpack.c.b16 %v865, %v861
    %v1290 = vpack.c.b16 %v870, %v866
    %v1291 = vpack.c.b16 %v871, %v867
    %v1292 = vpack.c.b16 %v872, %v868
    %v1293 = vpack.c.b16 %v873, %v869
    %v1294 = vpack.c.b16 %v878, %v874
    %v1295 = vpack.c.b16 %v879, %v875
    %v1296 = vpack.c.b16 %v880, %v876
    %v1297 = vpack.c.b16 %v881, %v877
    %v1298 = vpack.c.b16 %v886, %v882
    %v1299 = vpack.c.b16 %v887, %v883
    %v1300 = vpack.c.b16 %v888, %v884
    %v1301 = vpack.c.b16 %v889, %v885
    %v1302 = vpack.c.b16 %v894, %v890
    %v1303 = vpack.c.b16 %v895, %v891
    %v1304 = vpack.c.b16 %v896, %v892
    %v1305 = vpack.c.b16 %v897, %v893
    %v1306 = vpack.c.b16 %v902, %v898
    %v1307 = vpack.c.b16 %v903, %v899
    %v1308 = vpack.c.b16 %v904, %v900
    %v1309 = vpack.c.b16 %v905, %v901
    %v1310 = vpack.c.b16 %v910, %v906
    %v1311 = vpack.c.b16 %v911, %v907
    %v1312 = vpack.c.b16 %v912, %v908
    %v1313 = vpack.c.b16 %v913, %v909
    %v1314 = vpack.c.b16 %v918, %v914
    %v1315 = vpack.c.b16 %v919, %v915
    %v1316 = vpack.c.b16 %v920, %v916
    %v1317 = vpack.c.b16 %v921, %v917
    %v1318 = vpack.c.b16 %v926, %v922
    %v1319 = vpack.c.b16 %v927, %v923
    %v1320 = vpack.c.b16 %v928, %v924
    %v1321 = vpack.c.b16 %v929, %v925
    %v1322 = vpack.c.b16 %v934, %v930
    %v1323 = vpack.c.b16 %v935, %v931
    %v1324 = vpack.c.b16 %v936, %v932
    %v1325 = vpack.c.b16 %v937, %v933
    %v1326 = vpack.c.b16 %v942, %v938
    %v1327 = vpack.c.b16 %v943, %v939
    %v1328 = vpack.c.b16 %v944, %v940
    %v1329 = vpack.c.b16 %v945, %v941
    %v1330 = vpack.c.b16 %v950, %v946
    %v1331 = vpack.c.b16 %v951, %v947
    %v1332 = vpack.c.b16 %v952, %v948
    %v1333 = vpack.c.b16 %v953, %v949
    %v1334 = vpack.c.b16 %v958, %v954
    %v1335 = vpack.c.b16 %v959, %v955
    %v1336 = vpack.c.b16 %v960, %v956
    %v1337 = vpack.c.b16 %v961, %v957
    %v1338 = vpack.c.b16 %v966, %v962
    %v1339 = vpack.c.b16 %v967, %v963
    %v1340 = vpack.c.b16 %v968, %v964
    %v1341 = vpack.c.b16 %v969, %v965
    %v1342 = vpack.c.b16 %v974, %v970
    %v1343 = vpack.c.b16 %v975, %v971
    %v1344 = vpack.c.b16 %v976, %v972
    %v1345 = vpack.c.b16 %v977, %v973
    %v1346 = vpack.c.b16 %v982, %v978
    %v1347 = vpack.c.b16 %v983, %v979
    %v1348 = vpack.c.b16 %v984, %v980
    %v1349 = vpack.c.b16 %v985, %v981
    %v1350 = vpack.c.b16 %v990, %v986
    %v1351 = vpack.c.b16 %v991, %v987
    %v1352 = vpack.c.b16 %v992, %v988
    %v1353 = vpack.c.b16 %v993, %v989
    %v1354 = vpack.c.b16 %v998, %v994
    %v1355 = vpack.c.b16 %v999, %v995
    %v1356 = vpack.c.b16 %v1000, %v996
    %v1357 = vpack.c.b16 %v1001, %v997
    %v1358 = vpack.c.b16 %v1006, %v1002
    %v1359 = vpack.c.b16 %v1007, %v1003
    %v1360 = vpack.c.b16 %v1008, %v1004
    %v1361 = vpack.c.b16 %v1009, %v1005
    %v1362 = vpack.c.b16 %v1014, %v1010
    %v1363 = vpack.c.b16 %v1015, %v1011
    %v1364 = vpack.c.b16 %v1016, %v1012
    %v1365 = vpack.c.b16 %v1017, %v1013
    %v1366 = vpack.c.b16 %v1022, %v1018
    %v1367 = vpack.c.b16 %v1023, %v1019
    %v1368 = vpack.c.b16 %v1024, %v1020
    %v1369 = vpack.c.b16 %v1025, %v1021
    %v1370 = vpack.c.b16 %v1030, %v1026
    %v1371 = vpack.c.b16 %v1031, %v1027
    %v1372 = vpack.c.b16 %v1032, %v1028
    %v1373 = vpack.c.b16 %v1033, %v1029
    %v1374 = vpack.c.b16 %v1038, %v1034
    %v1375 = vpack.c.b16 %v1039, %v1035
    %v1376 = vpack.c.b16 %v1040, %v1036
    %v1377 = vpack.c.b16 %v1041, %v1037
    %v1378 = vpack.c.b16 %v1046, %v1042
    %v1379 = vpack.c.b16 %v1047, %v1043
    %v1380 = vpack.c.b16 %v1048, %v1044
    %v1381 = vpack.c.b16 %v1049, %v1045
    %v1382 = vpack.c.b16 %v1054, %v1050
    %v1383 = vpack.c.b16 %v1055, %v1051
    %v1384 = vpack.c.b16 %v1056, %v1052
    %v1385 = vpack.c.b16 %v1057, %v1053
    %v1386 = vpack.c.b16 %v1062, %v1058
    %v1387 = vpack.c.b16 %v1063, %v1059
    %v1388 = vpack.c.b16 %v1064, %v1060
    %v1389 = vpack.c.b16 %v1065, %v1061
    %v1390 = vpack.c.b16 %v1070, %v1066
    %v1391 = vpack.c.b16 %v1071, %v1067
    %v1392 = vpack.c.b16 %v1072, %v1068
    %v1393 = vpack.c.b16 %v1073, %v1069
    %v1394 = vpack.c.b16 %v1078, %v1074
    %v1395 = vpack.c.b16 %v1079, %v1075
    %v1396 = vpack.c.b16 %v1080, %v1076
    %v1397 = vpack.c.b16 %v1081, %v1077
    %v1398 = vpack.c.b16 %v1086, %v1082
    %v1399 = vpack.c.b16 %v1087, %v1083
    %v1400 = vpack.c.b16 %v1088, %v1084
    %v1401 = vpack.c.b16 %v1089, %v1085
    %v1402 = vpack.c.b16 %v1094, %v1090
    %v1403 = vpack.c.b16 %v1095, %v1091
    %v1404 = vpack.c.b16 %v1096, %v1092
    %v1405 = vpack.c.b16 %v1097, %v1093
    %v1406 = vpack.c.b16 %v1102, %v1098
    %v1407 = vpack.c.b16 %v1103, %v1099
    %v1408 = vpack.c.b16 %v1104, %v1100
    %v1409 = vpack.c.b16 %v1105, %v1101
    %v1410 = vpack.c.b16 %v1110, %v1106
    %v1411 = vpack.c.b16 %v1111, %v1107
    %v1412 = vpack.c.b16 %v1112, %v1108
    %v1413 = vpack.c.b16 %v1113, %v1109
    %v1414 = vpack.c.b16 %v1118, %v1114
    %v1415 = vpack.c.b16 %v1119, %v1115
    %v1416 = vpack.c.b16 %v1120, %v1116
    %v1417 = vpack.c.b16 %v1121, %v1117
    %v1418 = vpack.c.b16 %v1126, %v1122
    %v1419 = vpack.c.b16 %v1127, %v1123
    %v1420 = vpack.c.b16 %v1128, %v1124
    %v1421 = vpack.c.b16 %v1129, %v1125
    %v1422 = vpack.c.b16 %v1134, %v1130
    %v1423 = vpack.c.b16 %v1135, %v1131
    %v1424 = vpack.c.b16 %v1136, %v1132
    %v1425 = vpack.c.b16 %v1137, %v1133
    %v1426 = vpack.c.b16 %v1142, %v1138
    %v1427 = vpack.c.b16 %v1143, %v1139
    %v1428 = vpack.c.b16 %v1144, %v1140
    %v1429 = vpack.c.b16 %v1145, %v1141
    %v1430 = vpack.c.b16 %v1150, %v1146
    %v1431 = vpack.c.b16 %v1151, %v1147
    %v1432 = vpack.c.b16 %v1152, %v1148
    %v1433 = vpack.c.b16 %v1153, %v1149
    %v1434 = vpack.c.b16 %v1158, %v1154
    %v1435 = vpack.c.b16 %v1159, %v1155
    %v1436 = vpack.c.b16 %v1160, %v1156
    %v1437 = vpack.c.b16 %v1161, %v1157
    %v1438 = vpack.c.b16 %v1166, %v1162
    %v1439 = vpack.c.b16 %v1167, %v1163
    %v1440 = vpack.c.b16 %v1168, %v1164
    %v1441 = vpack.c.b16 %v1169, %v1165
    %v1442 = vpack.c.b16 %v1174, %v1170
    %v1443 = vpack.c.b16 %v1175, %v1171
    %v1444 = vpack.c.b16 %v1176, %v1172
    %v1445 = vpack.c.b16 %v1177, %v1173
    %v1446 = vpack.c.b16 %v1182, %v1178
    %v1447 = vpack.c.b16 %v1183, %v1179
    %v1448 = vpack.c.b16 %v1184, %v1180
    %v1449 = vpack.c.b16 %v1185, %v1181
    %v1450 = vpack.c.b16 %v1190, %v1186
    %v1451 = vpack.c.b16 %v1191, %v1187
    %v1452 = vpack.c.b16 %v1192, %v1188
    %v1453 = vpack.c.b16 %v1193, %v1189
    %v1454 = vpack.c.b16 %v1198, %v1194
    %v1455 = vpack.c.b16 %v1199, %v1195
    %v1456 = vpack.c.b16 %v1200, %v1196
    %v1457 = vpack.c.b16 %v1201, %v1197
    %1714 = vmatpush.bf16.msra.mxu0 %v1230
    %1715 = vmatpush.bf16.msra.mxu0 %v1226
    %1716 = vmatpush.bf16.msra.mxu0 %v1222
    %1717 = vmatpush.bf16.msra.mxu0 %v1218
    %1718 = vmatpush.bf16.msra.mxu0 %v1214
    %1719 = vmatpush.bf16.msra.mxu0 %v1210
    %1720 = vmatpush.bf16.msra.mxu0 %v1206
    %1721 = vmatpush.bf16.msra.mxu0 %v1202
    %1722 = vmatmul.bf16.gmra.mxu0 %v166
    %v1723 = vpop.f32.mrf.mxu0
    %v1724 = vadd.f32 0.0, %v1723
    %v1725 = vpop.f32.mrf.mxu0
    %1726 = vdwg.mxu0
    %1727 = vmatpush.bf16.msra.mxu0 %v1262
    %1728 = vmatpush.bf16.msra.mxu0 %v1258
    %1729 = vmatpush.bf16.msra.mxu0 %v1254
    %1730 = vmatpush.bf16.msra.mxu0 %v1250
    %1731 = vmatpush.bf16.msra.mxu0 %v1246
    %1732 = vmatpush.bf16.msra.mxu0 %v1242
    %1733 = vmatpush.bf16.msra.mxu0 %v1238
    %1734 = vmatpush.bf16.msra.mxu0 %v1234
    %1735 = vmatmul.bf16.gmra.mxu0 %v167
    %v1736 = vpop.f32.mrf.mxu0
    %v1737 = vadd.f32 %v1724, %v1736
    %v1738 = vpop.f32.mrf.mxu0
    %1739 = vdwg.mxu0
    %1740 = vmatpush.bf16.msra.mxu0 %v1294
    %1741 = vmatpush.bf16.msra.mxu0 %v1290
    %1742 = vmatpush.bf16.msra.mxu0 %v1286
    %1743 = vmatpush.bf16.msra.mxu0 %v1282
    %1744 = vmatpush.bf16.msra.mxu0 %v1278
    %1745 = vmatpush.bf16.msra.mxu0 %v1274
    %1746 = vmatpush.bf16.msra.mxu0 %v1270
    %1747 = vmatpush.bf16.msra.mxu0 %v1266
    %1748 = vmatmul.bf16.gmra.mxu0 %v168
    %v1749 = vpop.f32.mrf.mxu0
    %v1750 = vadd.f32 %v1737, %v1749
    %v1751 = vpop.f32.mrf.mxu0
    %1752 = vdwg.mxu0
    %1753 = vmatpush.bf16.msra.mxu0 %v1326
    %1754 = vmatpush.bf16.msra.mxu0 %v1322
    %1755 = vmatpush.bf16.msra.mxu0 %v1318
    %1756 = vmatpush.bf16.msra.mxu0 %v1314
    %1757 = vmatpush.bf16.msra.mxu0 %v1310
    %1758 = vmatpush.bf16.msra.mxu0 %v1306
    %1759 = vmatpush.bf16.msra.mxu0 %v1302
    %1760 = vmatpush.bf16.msra.mxu0 %v1298
    %1761 = vmatmul.bf16.gmra.mxu0 %v169
    %v1762 = vpop.f32.mrf.mxu0
    %v1763 = vadd.f32 %v1750, %v1762
    %v1764 = vpop.f32.mrf.mxu0
    %1765 = vdwg.mxu0
    %1766 = vmatpush.bf16.msra.mxu0 %v1358
    %1767 = vmatpush.bf16.msra.mxu0 %v1354
    %1768 = vmatpush.bf16.msra.mxu0 %v1350
    %1769 = vmatpush.bf16.msra.mxu0 %v1346
    %1770 = vmatpush.bf16.msra.mxu0 %v1342
    %1771 = vmatpush.bf16.msra.mxu0 %v1338
    %1772 = vmatpush.bf16.msra.mxu0 %v1334
    %1773 = vmatpush.bf16.msra.mxu0 %v1330
    %1774 = vmatmul.bf16.gmra.mxu0 %v170
    %v1775 = vpop.f32.mrf.mxu0
    %v1776 = vadd.f32 %v1763, %v1775
    %v1777 = vpop.f32.mrf.mxu0
    %1778 = vdwg.mxu0
    %1779 = vmatpush.bf16.msra.mxu0 %v1390
    %1780 = vmatpush.bf16.msra.mxu0 %v1386
    %1781 = vmatpush.bf16.msra.mxu0 %v1382
    %1782 = vmatpush.bf16.msra.mxu0 %v1378
    %1783 = vmatpush.bf16.msra.mxu0 %v1374
    %1784 = vmatpush.bf16.msra.mxu0 %v1370
    %1785 = vmatpush.bf16.msra.mxu0 %v1366
    %1786 = vmatpush.bf16.msra.mxu0 %v1362
    %1787 = vmatmul.bf16.gmra.mxu0 %v171
    %v1788 = vpop.f32.mrf.mxu0
    %v1789 = vadd.f32 %v1776, %v1788
    %v1790 = vpop.f32.mrf.mxu0
    %1791 = vdwg.mxu0
    %1792 = vmatpush.bf16.msra.mxu0 %v1422
    %1793 = vmatpush.bf16.msra.mxu0 %v1418
    %1794 = vmatpush.bf16.msra.mxu0 %v1414
    %1795 = vmatpush.bf16.msra.mxu0 %v1410
    %1796 = vmatpush.bf16.msra.mxu0 %v1406
    %1797 = vmatpush.bf16.msra.mxu0 %v1402
    %1798 = vmatpush.bf16.msra.mxu0 %v1398
    %1799 = vmatpush.bf16.msra.mxu0 %v1394
    %1800 = vmatmul.bf16.gmra.mxu0 %v172
    %v1801 = vpop.f32.mrf.mxu0
    %v1802 = vadd.f32 %v1789, %v1801
    %v1803 = vpop.f32.mrf.mxu0
    %1804 = vdwg.mxu0
    %1805 = vmatpush.bf16.msra.mxu0 %v1454
    %1806 = vmatpush.bf16.msra.mxu0 %v1450
    %1807 = vmatpush.bf16.msra.mxu0 %v1446
    %1808 = vmatpush.bf16.msra.mxu0 %v1442
    %1809 = vmatpush.bf16.msra.mxu0 %v1438
    %1810 = vmatpush.bf16.msra.mxu0 %v1434
    %1811 = vmatpush.bf16.msra.mxu0 %v1430
    %1812 = vmatpush.bf16.msra.mxu0 %v1426
    %1813 = vmatmul.bf16.gmra.mxu0 %v173
    %v1814 = vpop.f32.mrf.mxu0
    %v1815 = vadd.f32 %v1802, %v1814
    %v1816 = vpop.f32.mrf.mxu0
    %1817 = vdwg.mxu0
    %1818 = vmatpush.bf16.msra.mxu0 %v1231
    %1819 = vmatpush.bf16.msra.mxu0 %v1227
    %1820 = vmatpush.bf16.msra.mxu0 %v1223
    %1821 = vmatpush.bf16.msra.mxu0 %v1219
    %1822 = vmatpush.bf16.msra.mxu0 %v1215
    %1823 = vmatpush.bf16.msra.mxu0 %v1211
    %1824 = vmatpush.bf16.msra.mxu0 %v1207
    %1825 = vmatpush.bf16.msra.mxu0 %v1203
    %1826 = vmatmul.bf16.gmra.mxu0 %v166
    %v1827 = vpop.f32.mrf.mxu0
    %v1828 = vadd.f32 0.0, %v1827
    %v1829 = vpop.f32.mrf.mxu0
    %1830 = vdwg.mxu0
    %1831 = vmatpush.bf16.msra.mxu0 %v1263
    %1832 = vmatpush.bf16.msra.mxu0 %v1259
    %1833 = vmatpush.bf16.msra.mxu0 %v1255
    %1834 = vmatpush.bf16.msra.mxu0 %v1251
    %1835 = vmatpush.bf16.msra.mxu0 %v1247
    %1836 = vmatpush.bf16.msra.mxu0 %v1243
    %1837 = vmatpush.bf16.msra.mxu0 %v1239
    %1838 = vmatpush.bf16.msra.mxu0 %v1235
    %1839 = vmatmul.bf16.gmra.mxu0 %v167
    %v1840 = vpop.f32.mrf.mxu0
    %v1841 = vadd.f32 %v1828, %v1840
    %v1842 = vpop.f32.mrf.mxu0
    %1843 = vdwg.mxu0
    %1844 = vmatpush.bf16.msra.mxu0 %v1295
    %1845 = vmatpush.bf16.msra.mxu0 %v1291
    %1846 = vmatpush.bf16.msra.mxu0 %v1287
    %1847 = vmatpush.bf16.msra.mxu0 %v1283
    %1848 = vmatpush.bf16.msra.mxu0 %v1279
    %1849 = vmatpush.bf16.msra.mxu0 %v1275
    %1850 = vmatpush.bf16.msra.mxu0 %v1271
    %1851 = vmatpush.bf16.msra.mxu0 %v1267
    %1852 = vmatmul.bf16.gmra.mxu0 %v168
    %v1853 = vpop.f32.mrf.mxu0
    %v1854 = vadd.f32 %v1841, %v1853
    %v1855 = vpop.f32.mrf.mxu0
    %1856 = vdwg.mxu0
    %1857 = vmatpush.bf16.msra.mxu0 %v1327
    %1858 = vmatpush.bf16.msra.mxu0 %v1323
    %1859 = vmatpush.bf16.msra.mxu0 %v1319
    %1860 = vmatpush.bf16.msra.mxu0 %v1315
    %1861 = vmatpush.bf16.msra.mxu0 %v1311
    %1862 = vmatpush.bf16.msra.mxu0 %v1307
    %1863 = vmatpush.bf16.msra.mxu0 %v1303
    %1864 = vmatpush.bf16.msra.mxu0 %v1299
    %1865 = vmatmul.bf16.gmra.mxu0 %v169
    %v1866 = vpop.f32.mrf.mxu0
    %v1867 = vadd.f32 %v1854, %v1866
    %v1868 = vpop.f32.mrf.mxu0
    %1869 = vdwg.mxu0
    %1870 = vmatpush.bf16.msra.mxu0 %v1359
    %1871 = vmatpush.bf16.msra.mxu0 %v1355
    %1872 = vmatpush.bf16.msra.mxu0 %v1351
    %1873 = vmatpush.bf16.msra.mxu0 %v1347
    %1874 = vmatpush.bf16.msra.mxu0 %v1343
    %1875 = vmatpush.bf16.msra.mxu0 %v1339
    %1876 = vmatpush.bf16.msra.mxu0 %v1335
    %1877 = vmatpush.bf16.msra.mxu0 %v1331
    %1878 = vmatmul.bf16.gmra.mxu0 %v170
    %v1879 = vpop.f32.mrf.mxu0
    %v1880 = vadd.f32 %v1867, %v1879
    %v1881 = vpop.f32.mrf.mxu0
    %1882 = vdwg.mxu0
    %1883 = vmatpush.bf16.msra.mxu0 %v1391
    %1884 = vmatpush.bf16.msra.mxu0 %v1387
    %1885 = vmatpush.bf16.msra.mxu0 %v1383
    %1886 = vmatpush.bf16.msra.mxu0 %v1379
    %1887 = vmatpush.bf16.msra.mxu0 %v1375
    %1888 = vmatpush.bf16.msra.mxu0 %v1371
    %1889 = vmatpush.bf16.msra.mxu0 %v1367
    %1890 = vmatpush.bf16.msra.mxu0 %v1363
    %1891 = vmatmul.bf16.gmra.mxu0 %v171
    %v1892 = vpop.f32.mrf.mxu0
    %v1893 = vadd.f32 %v1880, %v1892
    %v1894 = vpop.f32.mrf.mxu0
    %1895 = vdwg.mxu0
    %1896 = vmatpush.bf16.msra.mxu0 %v1423
    %1897 = vmatpush.bf16.msra.mxu0 %v1419
    %1898 = vmatpush.bf16.msra.mxu0 %v1415
    %1899 = vmatpush.bf16.msra.mxu0 %v1411
    %1900 = vmatpush.bf16.msra.mxu0 %v1407
    %1901 = vmatpush.bf16.msra.mxu0 %v1403
    %1902 = vmatpush.bf16.msra.mxu0 %v1399
    %1903 = vmatpush.bf16.msra.mxu0 %v1395
    %1904 = vmatmul.bf16.gmra.mxu0 %v172
    %v1905 = vpop.f32.mrf.mxu0
    %v1906 = vadd.f32 %v1893, %v1905
    %v1907 = vpop.f32.mrf.mxu0
    %1908 = vdwg.mxu0
    %1909 = vmatpush.bf16.msra.mxu0 %v1455
    %1910 = vmatpush.bf16.msra.mxu0 %v1451
    %1911 = vmatpush.bf16.msra.mxu0 %v1447
    %1912 = vmatpush.bf16.msra.mxu0 %v1443
    %1913 = vmatpush.bf16.msra.mxu0 %v1439
    %1914 = vmatpush.bf16.msra.mxu0 %v1435
    %1915 = vmatpush.bf16.msra.mxu0 %v1431
    %1916 = vmatpush.bf16.msra.mxu0 %v1427
    %1917 = vmatmul.bf16.gmra.mxu0 %v173
    %v1918 = vpop.f32.mrf.mxu0
    %v1919 = vadd.f32 %v1906, %v1918
    %v1920 = vpop.f32.mrf.mxu0
    %1921 = vdwg.mxu0
    %1922 = vmatpush.bf16.msra.mxu0 %v1232
    %1923 = vmatpush.bf16.msra.mxu0 %v1228
    %1924 = vmatpush.bf16.msra.mxu0 %v1224
    %1925 = vmatpush.bf16.msra.mxu0 %v1220
    %1926 = vmatpush.bf16.msra.mxu0 %v1216
    %1927 = vmatpush.bf16.msra.mxu0 %v1212
    %1928 = vmatpush.bf16.msra.mxu0 %v1208
    %1929 = vmatpush.bf16.msra.mxu0 %v1204
    %1930 = vmatmul.bf16.gmra.mxu0 %v166
    %v1931 = vpop.f32.mrf.mxu0
    %v1932 = vadd.f32 0.0, %v1931
    %v1933 = vpop.f32.mrf.mxu0
    %1934 = vdwg.mxu0
    %1935 = vmatpush.bf16.msra.mxu0 %v1264
    %1936 = vmatpush.bf16.msra.mxu0 %v1260
    %1937 = vmatpush.bf16.msra.mxu0 %v1256
    %1938 = vmatpush.bf16.msra.mxu0 %v1252
    %1939 = vmatpush.bf16.msra.mxu0 %v1248
    %1940 = vmatpush.bf16.msra.mxu0 %v1244
    %1941 = vmatpush.bf16.msra.mxu0 %v1240
    %1942 = vmatpush.bf16.msra.mxu0 %v1236
    %1943 = vmatmul.bf16.gmra.mxu0 %v167
    %v1944 = vpop.f32.mrf.mxu0
    %v1945 = vadd.f32 %v1932, %v1944
    %v1946 = vpop.f32.mrf.mxu0
    %1947 = vdwg.mxu0
    %1948 = vmatpush.bf16.msra.mxu0 %v1296
    %1949 = vmatpush.bf16.msra.mxu0 %v1292
    %1950 = vmatpush.bf16.msra.mxu0 %v1288
    %1951 = vmatpush.bf16.msra.mxu0 %v1284
    %1952 = vmatpush.bf16.msra.mxu0 %v1280
    %1953 = vmatpush.bf16.msra.mxu0 %v1276
    %1954 = vmatpush.bf16.msra.mxu0 %v1272
    %1955 = vmatpush.bf16.msra.mxu0 %v1268
    %1956 = vmatmul.bf16.gmra.mxu0 %v168
    %v1957 = vpop.f32.mrf.mxu0
    %v1958 = vadd.f32 %v1945, %v1957
    %v1959 = vpop.f32.mrf.mxu0
    %1960 = vdwg.mxu0
    %1961 = vmatpush.bf16.msra.mxu0 %v1328
    %1962 = vmatpush.bf16.msra.mxu0 %v1324
    %1963 = vmatpush.bf16.msra.mxu0 %v1320
    %1964 = vmatpush.bf16.msra.mxu0 %v1316
    %1965 = vmatpush.bf16.msra.mxu0 %v1312
    %1966 = vmatpush.bf16.msra.mxu0 %v1308
    %1967 = vmatpush.bf16.msra.mxu0 %v1304
    %1968 = vmatpush.bf16.msra.mxu0 %v1300
    %1969 = vmatmul.bf16.gmra.mxu0 %v169
    %v1970 = vpop.f32.mrf.mxu0
    %v1971 = vadd.f32 %v1958, %v1970
    %v1972 = vpop.f32.mrf.mxu0
    %1973 = vdwg.mxu0
    %1974 = vmatpush.bf16.msra.mxu0 %v1360
    %1975 = vmatpush.bf16.msra.mxu0 %v1356
    %1976 = vmatpush.bf16.msra.mxu0 %v1352
    %1977 = vmatpush.bf16.msra.mxu0 %v1348
    %1978 = vmatpush.bf16.msra.mxu0 %v1344
    %1979 = vmatpush.bf16.msra.mxu0 %v1340
    %1980 = vmatpush.bf16.msra.mxu0 %v1336
    %1981 = vmatpush.bf16.msra.mxu0 %v1332
    %1982 = vmatmul.bf16.gmra.mxu0 %v170
    %v1983 = vpop.f32.mrf.mxu0
    %v1984 = vadd.f32 %v1971, %v1983
    %v1985 = vpop.f32.mrf.mxu0
    %1986 = vdwg.mxu0
    %1987 = vmatpush.bf16.msra.mxu0 %v1392
    %1988 = vmatpush.bf16.msra.mxu0 %v1388
    %1989 = vmatpush.bf16.msra.mxu0 %v1384
    %1990 = vmatpush.bf16.msra.mxu0 %v1380
    %1991 = vmatpush.bf16.msra.mxu0 %v1376
    %1992 = vmatpush.bf16.msra.mxu0 %v1372
    %1993 = vmatpush.bf16.msra.mxu0 %v1368
    %1994 = vmatpush.bf16.msra.mxu0 %v1364
    %1995 = vmatmul.bf16.gmra.mxu0 %v171
    %v1996 = vpop.f32.mrf.mxu0
    %v1997 = vadd.f32 %v1984, %v1996
    %v1998 = vpop.f32.mrf.mxu0
    %1999 = vdwg.mxu0
    %2000 = vmatpush.bf16.msra.mxu0 %v1424
    %2001 = vmatpush.bf16.msra.mxu0 %v1420
    %2002 = vmatpush.bf16.msra.mxu0 %v1416
    %2003 = vmatpush.bf16.msra.mxu0 %v1412
    %2004 = vmatpush.bf16.msra.mxu0 %v1408
    %2005 = vmatpush.bf16.msra.mxu0 %v1404
    %2006 = vmatpush.bf16.msra.mxu0 %v1400
    %2007 = vmatpush.bf16.msra.mxu0 %v1396
    %2008 = vmatmul.bf16.gmra.mxu0 %v172
    %v2009 = vpop.f32.mrf.mxu0
    %v2010 = vadd.f32 %v1997, %v2009
    %v2011 = vpop.f32.mrf.mxu0
    %2012 = vdwg.mxu0
    %2013 = vmatpush.bf16.msra.mxu0 %v1456
    %2014 = vmatpush.bf16.msra.mxu0 %v1452
    %2015 = vmatpush.bf16.msra.mxu0 %v1448
    %2016 = vmatpush.bf16.msra.mxu0 %v1444
    %2017 = vmatpush.bf16.msra.mxu0 %v1440
    %2018 = vmatpush.bf16.msra.mxu0 %v1436
    %2019 = vmatpush.bf16.msra.mxu0 %v1432
    %2020 = vmatpush.bf16.msra.mxu0 %v1428
    %2021 = vmatmul.bf16.gmra.mxu0 %v173
    %v2022 = vpop.f32.mrf.mxu0
    %v2023 = vadd.f32 %v2010, %v2022
    %v2024 = vpop.f32.mrf.mxu0
    %2025 = vdwg.mxu0
    %2026 = vmatpush.bf16.msra.mxu0 %v1233
    %2027 = vmatpush.bf16.msra.mxu0 %v1229
    %2028 = vmatpush.bf16.msra.mxu0 %v1225
    %2029 = vmatpush.bf16.msra.mxu0 %v1221
    %2030 = vmatpush.bf16.msra.mxu0 %v1217
    %2031 = vmatpush.bf16.msra.mxu0 %v1213
    %2032 = vmatpush.bf16.msra.mxu0 %v1209
    %2033 = vmatpush.bf16.msra.mxu0 %v1205
    %2034 = vmatmul.bf16.gmra.mxu0 %v166
    %v2035 = vpop.f32.mrf.mxu0
    %v2036 = vadd.f32 0.0, %v2035
    %v2037 = vpop.f32.mrf.mxu0
    %2038 = vdwg.mxu0
    %2039 = vmatpush.bf16.msra.mxu0 %v1265
    %2040 = vmatpush.bf16.msra.mxu0 %v1261
    %2041 = vmatpush.bf16.msra.mxu0 %v1257
    %2042 = vmatpush.bf16.msra.mxu0 %v1253
    %2043 = vmatpush.bf16.msra.mxu0 %v1249
    %2044 = vmatpush.bf16.msra.mxu0 %v1245
    %2045 = vmatpush.bf16.msra.mxu0 %v1241
    %2046 = vmatpush.bf16.msra.mxu0 %v1237
    %2047 = vmatmul.bf16.gmra.mxu0 %v167
    %v2048 = vpop.f32.mrf.mxu0
    %v2049 = vadd.f32 %v2036, %v2048
    %v2050 = vpop.f32.mrf.mxu0
    %2051 = vdwg.mxu0
    %2052 = vmatpush.bf16.msra.mxu0 %v1297
    %2053 = vmatpush.bf16.msra.mxu0 %v1293
    %2054 = vmatpush.bf16.msra.mxu0 %v1289
    %2055 = vmatpush.bf16.msra.mxu0 %v1285
    %2056 = vmatpush.bf16.msra.mxu0 %v1281
    %2057 = vmatpush.bf16.msra.mxu0 %v1277
    %2058 = vmatpush.bf16.msra.mxu0 %v1273
    %2059 = vmatpush.bf16.msra.mxu0 %v1269
    %2060 = vmatmul.bf16.gmra.mxu0 %v168
    %v2061 = vpop.f32.mrf.mxu0
    %v2062 = vadd.f32 %v2049, %v2061
    %v2063 = vpop.f32.mrf.mxu0
    %2064 = vdwg.mxu0
    %2065 = vmatpush.bf16.msra.mxu0 %v1329
    %2066 = vmatpush.bf16.msra.mxu0 %v1325
    %2067 = vmatpush.bf16.msra.mxu0 %v1321
    %2068 = vmatpush.bf16.msra.mxu0 %v1317
    %2069 = vmatpush.bf16.msra.mxu0 %v1313
    %2070 = vmatpush.bf16.msra.mxu0 %v1309
    %2071 = vmatpush.bf16.msra.mxu0 %v1305
    %2072 = vmatpush.bf16.msra.mxu0 %v1301
    %2073 = vmatmul.bf16.gmra.mxu0 %v169
    %v2074 = vpop.f32.mrf.mxu0
    %v2075 = vadd.f32 %v2062, %v2074
    %v2076 = vpop.f32.mrf.mxu0
    %2077 = vdwg.mxu0
    %2078 = vmatpush.bf16.msra.mxu0 %v1361
    %2079 = vmatpush.bf16.msra.mxu0 %v1357
    %2080 = vmatpush.bf16.msra.mxu0 %v1353
    %2081 = vmatpush.bf16.msra.mxu0 %v1349
    %2082 = vmatpush.bf16.msra.mxu0 %v1345
    %2083 = vmatpush.bf16.msra.mxu0 %v1341
    %2084 = vmatpush.bf16.msra.mxu0 %v1337
    %2085 = vmatpush.bf16.msra.mxu0 %v1333
    %2086 = vmatmul.bf16.gmra.mxu0 %v170
    %v2087 = vpop.f32.mrf.mxu0
    %v2088 = vadd.f32 %v2075, %v2087
    %v2089 = vpop.f32.mrf.mxu0
    %2090 = vdwg.mxu0
    %2091 = vmatpush.bf16.msra.mxu0 %v1393
    %2092 = vmatpush.bf16.msra.mxu0 %v1389
    %2093 = vmatpush.bf16.msra.mxu0 %v1385
    %2094 = vmatpush.bf16.msra.mxu0 %v1381
    %2095 = vmatpush.bf16.msra.mxu0 %v1377
    %2096 = vmatpush.bf16.msra.mxu0 %v1373
    %2097 = vmatpush.bf16.msra.mxu0 %v1369
    %2098 = vmatpush.bf16.msra.mxu0 %v1365
    %2099 = vmatmul.bf16.gmra.mxu0 %v171
    %v2100 = vpop.f32.mrf.mxu0
    %v2101 = vadd.f32 %v2088, %v2100
    %v2102 = vpop.f32.mrf.mxu0
    %2103 = vdwg.mxu0
    %2104 = vmatpush.bf16.msra.mxu0 %v1425
    %2105 = vmatpush.bf16.msra.mxu0 %v1421
    %2106 = vmatpush.bf16.msra.mxu0 %v1417
    %2107 = vmatpush.bf16.msra.mxu0 %v1413
    %2108 = vmatpush.bf16.msra.mxu0 %v1409
    %2109 = vmatpush.bf16.msra.mxu0 %v1405
    %2110 = vmatpush.bf16.msra.mxu0 %v1401
    %2111 = vmatpush.bf16.msra.mxu0 %v1397
    %2112 = vmatmul.bf16.gmra.mxu0 %v172
    %v2113 = vpop.f32.mrf.mxu0
    %v2114 = vadd.f32 %v2101, %v2113
    %v2115 = vpop.f32.mrf.mxu0
    %2116 = vdwg.mxu0
    %2117 = vmatpush.bf16.msra.mxu0 %v1457
    %2118 = vmatpush.bf16.msra.mxu0 %v1453
    %2119 = vmatpush.bf16.msra.mxu0 %v1449
    %2120 = vmatpush.bf16.msra.mxu0 %v1445
    %2121 = vmatpush.bf16.msra.mxu0 %v1441
    %2122 = vmatpush.bf16.msra.mxu0 %v1437
    %2123 = vmatpush.bf16.msra.mxu0 %v1433
    %2124 = vmatpush.bf16.msra.mxu0 %v1429
    %2125 = vmatmul.bf16.gmra.mxu0 %v173
    %v2126 = vpop.f32.mrf.mxu0
    %v2127 = vadd.f32 %v2114, %v2126
    %v2128 = vpop.f32.mrf.mxu0
    %2129 = vdwg.mxu0
    %v2130 = vadd.f32 %v174, %v1815
    %v2131 = vadd.f32 %v175, %v1919
    %v2132 = vadd.f32 %v176, %v2023
    %v2133 = vadd.f32 %v177, %v2127
    %2134 = vst [vmem:[#allocation2] sm:$0xff] %v2130
    %2135 = vst [vmem:[#allocation2 + $0x8] sm:$0xff] %v2131
    %2136 = vst [vmem:[#allocation2 + $0x10] sm:$0xff] %v2132
    %2137 = vst [vmem:[#allocation2 + $0x18] sm:$0xff] %v2133
    // Predicated region
    $region74: #{tpu_custom_call.1} parent=1 // pred_check
      %p2138 = pneg %p150
    $region75: #{tpu_custom_call.1} parent=1 // pred_check_branch
      %2140 = sbr.rel (%p2138) target = $region77
    $region76: #{tpu_custom_call.1} parent=1 // pred_region
      %v2141 = vld [vmem:[#allocation2] sm:$0xff]
      %v2142 = vld [vmem:[#allocation2 + $0x8] sm:$0xff]
      %v2143 = vld [vmem:[#allocation2 + $0x10] sm:$0xff]
      %v2144 = vld [vmem:[#allocation2 + $0x18] sm:$0xff]
      %v2145 = vld [vmem:[#allocation8] sm:$0xf]
      %v2147 = vperm.slane %v2145, 0
      %v2148 = vperm.slane %v2145, 1
      %v2149 = vperm.slane %v2145, 2
      %v2150 = vperm.slane %v2145, 3
      %v2155 = vadd.f32 %v2141, %v2147
      %v2156 = vadd.f32 %v2142, %v2148
      %v2157 = vadd.f32 %v2143, %v2149
      %v2158 = vadd.f32 %v2144, %v2150
      %v2159 = vmul.f32 %v2155, 0.5
      %v2160 = vmul.f32 %v2156, 0.5
      %v2161 = vmul.f32 %v2157, 0.5
      %v2162 = vmul.f32 %v2158, 0.5
      %v2163 = vmul.f32 %v2155, 0.70710677
      %v2164 = vmul.f32 %v2156, 0.70710677
      %v2165 = vmul.f32 %v2157, 0.70710677
      %v2166 = vmul.f32 %v2158, 0.70710677
      %v2167 = vmul.f32 %v2163, %v2163
      %v2168 = vmin.f32 16.0, %v2167
      %v2169 = vmul.f32 %v2168, 2.1237322e-06
      %v2170 = vadd.f32 %v2169, 0.00028619796
      %v2171 = vmul.f32 %v2168, %v2170
      %v2172 = vadd.f32 %v2171, 0.0036580483
      %v2173 = vmul.f32 %v2168, %v2172
      %v2174 = vadd.f32 %v2173, 0.05243302
      %v2175 = vmul.f32 %v2168, %v2174
      %v2176 = vadd.f32 %v2175, 0.18741608
      %v2177 = vmul.f32 %v2168, %v2176
      %v2178 = vadd.f32 %v2177, 1.1283791
      %v2179 = vmul.f32 %v2163, %v2178
      %v2180 = vmul.f32 %v2168, 3.8918573e-05
      %v2181 = vadd.f32 %v2180, 0.001143296
      %v2182 = vmul.f32 %v2168, %v2181
      %v2183 = vadd.f32 %v2182, 0.014752088
      %v2184 = vmul.f32 %v2168, %v2183
      %v2185 = vadd.f32 %v2184, 0.112945676
      %v2186 = vmul.f32 %v2168, %v2185
      %v2187 = vadd.f32 %v2186, 0.4994258
      %v2188 = vmul.f32 %v2168, %v2187
      %v2189 = vadd.f32 %v2188, 1.0
      %v2190 = vrcp.pop %v2189
      %v2191 = vmul.f32 %v2189, %v2190
      %v2192 = vsub.f32 1.0, %v2191
      %v2193 = vmul.f32 %v2190, %v2192
      %v2194 = vadd.f32 %v2190, %v2193
      %vm2195 = vweird.f32 %v2189
      %vm2196 = vweird.f32 %v2190
      %vm2197 = vmor %vm2195, %vm2196
      %v2198 = vsel %vm2197, %v2190, %v2194
      %v2199 = vand.u32 2147483647, %v2189
      %vm2200 = vcmp.eq.f32.partialorder %v2199, 8.507059e+37
      %v2201 = vand.u32 %v2189, 2147483648
      %v2202 = vor.u32 1.1754944e-38, %v2201
      %v2203 = vsel %vm2200, %v2202, %v2198
      %v2204 = vmul.f32 %v2179, %v2203
      %v2205 = vmin.f32 %v2204, 1.0
      %v2206 = vmax.f32 %v2205, -1.0
      %v2207 = vmul.f32 %v2164, %v2164
      %v2208 = vmin.f32 16.0, %v2207
      %v2209 = vmul.f32 %v2208, 2.1237322e-06
      %v2210 = vadd.f32 %v2209, 0.00028619796
      %v2211 = vmul.f32 %v2208, %v2210
      %v2212 = vadd.f32 %v2211, 0.0036580483
      %v2213 = vmul.f32 %v2208, %v2212
      %v2214 = vadd.f32 %v2213, 0.05243302
      %v2215 = vmul.f32 %v2208, %v2214
      %v2216 = vadd.f32 %v2215, 0.18741608
      %v2217 = vmul.f32 %v2208, %v2216
      %v2218 = vadd.f32 %v2217, 1.1283791
      %v2219 = vmul.f32 %v2164, %v2218
      %v2220 = vmul.f32 %v2208, 3.8918573e-05
      %v2221 = vadd.f32 %v2220, 0.001143296
      %v2222 = vmul.f32 %v2208, %v2221
      %v2223 = vadd.f32 %v2222, 0.014752088
      %v2224 = vmul.f32 %v2208, %v2223
      %v2225 = vadd.f32 %v2224, 0.112945676
      %v2226 = vmul.f32 %v2208, %v2225
      %v2227 = vadd.f32 %v2226, 0.4994258
      %v2228 = vmul.f32 %v2208, %v2227
      %v2229 = vadd.f32 %v2228, 1.0
      %v2230 = vrcp.pop %v2229
      %v2231 = vmul.f32 %v2229, %v2230
      %v2232 = vsub.f32 1.0, %v2231
      %v2233 = vmul.f32 %v2230, %v2232
      %v2234 = vadd.f32 %v2230, %v2233
      %vm2235 = vweird.f32 %v2229
      %vm2236 = vweird.f32 %v2230
      %vm2237 = vmor %vm2235, %vm2236
      %v2238 = vsel %vm2237, %v2230, %v2234
      %v2239 = vand.u32 2147483647, %v2229
      %vm2240 = vcmp.eq.f32.partialorder %v2239, 8.507059e+37
      %v2241 = vand.u32 %v2229, 2147483648
      %v2242 = vor.u32 1.1754944e-38, %v2241
      %v2243 = vsel %vm2240, %v2242, %v2238
      %v2244 = vmul.f32 %v2219, %v2243
      %v2245 = vmin.f32 %v2244, 1.0
      %v2246 = vmax.f32 %v2245, -1.0
      %v2247 = vmul.f32 %v2165, %v2165
      %v2248 = vmin.f32 16.0, %v2247
      %v2249 = vmul.f32 %v2248, 2.1237322e-06
      %v2250 = vadd.f32 %v2249, 0.00028619796
      %v2251 = vmul.f32 %v2248, %v2250
      %v2252 = vadd.f32 %v2251, 0.0036580483
      %v2253 = vmul.f32 %v2248, %v2252
      %v2254 = vadd.f32 %v2253, 0.05243302
      %v2255 = vmul.f32 %v2248, %v2254
      %v2256 = vadd.f32 %v2255, 0.18741608
      %v2257 = vmul.f32 %v2248, %v2256
      %v2258 = vadd.f32 %v2257, 1.1283791
      %v2259 = vmul.f32 %v2165, %v2258
      %v2260 = vmul.f32 %v2248, 3.8918573e-05
      %v2261 = vadd.f32 %v2260, 0.001143296
      %v2262 = vmul.f32 %v2248, %v2261
      %v2263 = vadd.f32 %v2262, 0.014752088
      %v2264 = vmul.f32 %v2248, %v2263
      %v2265 = vadd.f32 %v2264, 0.112945676
      %v2266 = vmul.f32 %v2248, %v2265
      %v2267 = vadd.f32 %v2266, 0.4994258
      %v2268 = vmul.f32 %v2248, %v2267
      %v2269 = vadd.f32 %v2268, 1.0
      %v2270 = vrcp.pop %v2269
      %v2271 = vmul.f32 %v2269, %v2270
      %v2272 = vsub.f32 1.0, %v2271
      %v2273 = vmul.f32 %v2270, %v2272
      %v2274 = vadd.f32 %v2270, %v2273
      %vm2275 = vweird.f32 %v2269
      %vm2276 = vweird.f32 %v2270
      %vm2277 = vmor %vm2275, %vm2276
      %v2278 = vsel %vm2277, %v2270, %v2274
      %v2279 = vand.u32 2147483647, %v2269
      %vm2280 = vcmp.eq.f32.partialorder %v2279, 8.507059e+37
      %v2281 = vand.u32 %v2269, 2147483648
      %v2282 = vor.u32 1.1754944e-38, %v2281
      %v2283 = vsel %vm2280, %v2282, %v2278
      %v2284 = vmul.f32 %v2259, %v2283
      %v2285 = vmin.f32 %v2284, 1.0
      %v2286 = vmax.f32 %v2285, -1.0
      %v2287 = vmul.f32 %v2166, %v2166
      %v2288 = vmin.f32 16.0, %v2287
      %v2289 = vmul.f32 %v2288, 2.1237322e-06
      %v2290 = vadd.f32 %v2289, 0.00028619796
      %v2291 = vmul.f32 %v2288, %v2290
      %v2292 = vadd.f32 %v2291, 0.0036580483
      %v2293 = vmul.f32 %v2288, %v2292
      %v2294 = vadd.f32 %v2293, 0.05243302
      %v2295 = vmul.f32 %v2288, %v2294
      %v2296 = vadd.f32 %v2295, 0.18741608
      %v2297 = vmul.f32 %v2288, %v2296
      %v2298 = vadd.f32 %v2297, 1.1283791
      %v2299 = vmul.f32 %v2166, %v2298
      %v2300 = vmul.f32 %v2288, 3.8918573e-05
      %v2301 = vadd.f32 %v2300, 0.001143296
      %v2302 = vmul.f32 %v2288, %v2301
      %v2303 = vadd.f32 %v2302, 0.014752088
      %v2304 = vmul.f32 %v2288, %v2303
      %v2305 = vadd.f32 %v2304, 0.112945676
      %v2306 = vmul.f32 %v2288, %v2305
      %v2307 = vadd.f32 %v2306, 0.4994258
      %v2308 = vmul.f32 %v2288, %v2307
      %v2309 = vadd.f32 %v2308, 1.0
      %v2310 = vrcp.pop %v2309
      %v2311 = vmul.f32 %v2309, %v2310
      %v2312 = vsub.f32 1.0, %v2311
      %v2313 = vmul.f32 %v2310, %v2312
      %v2314 = vadd.f32 %v2310, %v2313
      %vm2315 = vweird.f32 %v2309
      %vm2316 = vweird.f32 %v2310
      %vm2317 = vmor %vm2315, %vm2316
      %v2318 = vsel %vm2317, %v2310, %v2314
      %v2319 = vand.u32 2147483647, %v2309
      %vm2320 = vcmp.eq.f32.partialorder %v2319, 8.507059e+37
      %v2321 = vand.u32 %v2309, 2147483648
      %v2322 = vor.u32 1.1754944e-38, %v2321
      %v2323 = vsel %vm2320, %v2322, %v2318
      %v2324 = vmul.f32 %v2299, %v2323
      %v2325 = vmin.f32 %v2324, 1.0
      %v2326 = vmax.f32 %v2325, -1.0
      %v2327 = vadd.f32 %v2206, 1.0
      %v2328 = vadd.f32 %v2246, 1.0
      %v2329 = vadd.f32 %v2286, 1.0
      %v2330 = vadd.f32 %v2326, 1.0
      %v2331 = vmul.f32 %v2159, %v2327
      %v2332 = vmul.f32 %v2160, %v2328
      %v2333 = vmul.f32 %v2161, %v2329
      %v2334 = vmul.f32 %v2162, %v2330
      %v2335 = vpack.c.bf16 %v2331, %v2331
      %v2336 = vpack.c.bf16 %v2332, %v2332
      %v2337 = vpack.c.bf16 %v2333, %v2333
      %v2338 = vpack.c.bf16 %v2334, %v2334
      %v2339 = vld [vmem:[#allocation9] sm:$0xff]
      %v2340 = vld [vmem:[#allocation9 + $0x8] sm:$0xff]
      %v2341 = vld [vmem:[#allocation9 + $0x10] sm:$0xff]
      %v2342 = vld [vmem:[#allocation9 + $0x18] sm:$0xff]
      %v2343 = vld [vmem:[#allocation9 + $0x20] sm:$0xff]
      %v2344 = vld [vmem:[#allocation9 + $0x28] sm:$0xff]
      %v2345 = vld [vmem:[#allocation9 + $0x30] sm:$0xff]
      %v2346 = vld [vmem:[#allocation9 + $0x38] sm:$0xff]
      %v2347 = vld [vmem:[#allocation9 + $0x40] sm:$0xff]
      %v2348 = vld [vmem:[#allocation9 + $0x48] sm:$0xff]
      %v2349 = vld [vmem:[#allocation9 + $0x50] sm:$0xff]
      %v2350 = vld [vmem:[#allocation9 + $0x58] sm:$0xff]
      %v2351 = vld [vmem:[#allocation9 + $0x60] sm:$0xff]
      %v2352 = vld [vmem:[#allocation9 + $0x68] sm:$0xff]
      %v2353 = vld [vmem:[#allocation9 + $0x70] sm:$0xff]
      %v2354 = vld [vmem:[#allocation9 + $0x78] sm:$0xff]
      %v2355 = vld [vmem:[#allocation9 + $0x80] sm:$0xff]
      %v2356 = vld [vmem:[#allocation9 + $0x88] sm:$0xff]
      %v2357 = vld [vmem:[#allocation9 + $0x90] sm:$0xff]
      %v2358 = vld [vmem:[#allocation9 + $0x98] sm:$0xff]
      %v2359 = vld [vmem:[#allocation9 + $0xa0] sm:$0xff]
      %v2360 = vld [vmem:[#allocation9 + $0xa8] sm:$0xff]
      %v2361 = vld [vmem:[#allocation9 + $0xb0] sm:$0xff]
      %v2362 = vld [vmem:[#allocation9 + $0xb8] sm:$0xff]
      %v2363 = vld [vmem:[#allocation9 + $0xc0] sm:$0xff]
      %v2364 = vld [vmem:[#allocation9 + $0xc8] sm:$0xff]
      %v2365 = vld [vmem:[#allocation9 + $0xd0] sm:$0xff]
      %v2366 = vld [vmem:[#allocation9 + $0xd8] sm:$0xff]
      %v2367 = vld [vmem:[#allocation9 + $0xe0] sm:$0xff]
      %v2368 = vld [vmem:[#allocation9 + $0xe8] sm:$0xff]
      %v2369 = vld [vmem:[#allocation9 + $0xf0] sm:$0xff]
      %v2370 = vld [vmem:[#allocation9 + $0xf8] sm:$0xff]
      %v2371 = vld [vmem:[#allocation9 + $0x100] sm:$0xff]
      %v2372 = vld [vmem:[#allocation9 + $0x108] sm:$0xff]
      %v2373 = vld [vmem:[#allocation9 + $0x110] sm:$0xff]
      %v2374 = vld [vmem:[#allocation9 + $0x118] sm:$0xff]
      %v2375 = vld [vmem:[#allocation9 + $0x120] sm:$0xff]
      %v2376 = vld [vmem:[#allocation9 + $0x128] sm:$0xff]
      %v2377 = vld [vmem:[#allocation9 + $0x130] sm:$0xff]
      %v2378 = vld [vmem:[#allocation9 + $0x138] sm:$0xff]
      %v2379 = vld [vmem:[#allocation9 + $0x140] sm:$0xff]
      %v2380 = vld [vmem:[#allocation9 + $0x148] sm:$0xff]
      %v2381 = vld [vmem:[#allocation9 + $0x150] sm:$0xff]
      %v2382 = vld [vmem:[#allocation9 + $0x158] sm:$0xff]
      %v2383 = vld [vmem:[#allocation9 + $0x160] sm:$0xff]
      %v2384 = vld [vmem:[#allocation9 + $0x168] sm:$0xff]
      %v2385 = vld [vmem:[#allocation9 + $0x170] sm:$0xff]
      %v2386 = vld [vmem:[#allocation9 + $0x178] sm:$0xff]
      %v2387 = vld [vmem:[#allocation9 + $0x180] sm:$0xff]
      %v2388 = vld [vmem:[#allocation9 + $0x188] sm:$0xff]
      %v2389 = vld [vmem:[#allocation9 + $0x190] sm:$0xff]
      %v2390 = vld [vmem:[#allocation9 + $0x198] sm:$0xff]
      %v2391 = vld [vmem:[#allocation9 + $0x1a0] sm:$0xff]
      %v2392 = vld [vmem:[#allocation9 + $0x1a8] sm:$0xff]
      %v2393 = vld [vmem:[#allocation9 + $0x1b0] sm:$0xff]
      %v2394 = vld [vmem:[#allocation9 + $0x1b8] sm:$0xff]
      %v2395 = vld [vmem:[#allocation9 + $0x1c0] sm:$0xff]
      %v2396 = vld [vmem:[#allocation9 + $0x1c8] sm:$0xff]
      %v2397 = vld [vmem:[#allocation9 + $0x1d0] sm:$0xff]
      %v2398 = vld [vmem:[#allocation9 + $0x1d8] sm:$0xff]
      %v2399 = vld [vmem:[#allocation9 + $0x1e0] sm:$0xff]
      %v2400 = vld [vmem:[#allocation9 + $0x1e8] sm:$0xff]
      %v2401 = vld [vmem:[#allocation9 + $0x1f0] sm:$0xff]
      %v2402 = vld [vmem:[#allocation9 + $0x1f8] sm:$0xff]
      %v2403 = vld [vmem:[#allocation9 + $0x200] sm:$0xff]
      %v2404 = vld [vmem:[#allocation9 + $0x208] sm:$0xff]
      %v2405 = vld [vmem:[#allocation9 + $0x210] sm:$0xff]
      %v2406 = vld [vmem:[#allocation9 + $0x218] sm:$0xff]
      %v2407 = vld [vmem:[#allocation9 + $0x220] sm:$0xff]
      %v2408 = vld [vmem:[#allocation9 + $0x228] sm:$0xff]
      %v2409 = vld [vmem:[#allocation9 + $0x230] sm:$0xff]
      %v2410 = vld [vmem:[#allocation9 + $0x238] sm:$0xff]
      %v2411 = vld [vmem:[#allocation9 + $0x240] sm:$0xff]
      %v2412 = vld [vmem:[#allocation9 + $0x248] sm:$0xff]
      %v2413 = vld [vmem:[#allocation9 + $0x250] sm:$0xff]
      %v2414 = vld [vmem:[#allocation9 + $0x258] sm:$0xff]
      %v2415 = vld [vmem:[#allocation9 + $0x260] sm:$0xff]
      %v2416 = vld [vmem:[#allocation9 + $0x268] sm:$0xff]
      %v2417 = vld [vmem:[#allocation9 + $0x270] sm:$0xff]
      %v2418 = vld [vmem:[#allocation9 + $0x278] sm:$0xff]
      %v2419 = vld [vmem:[#allocation9 + $0x280] sm:$0xff]
      %v2420 = vld [vmem:[#allocation9 + $0x288] sm:$0xff]
      %v2421 = vld [vmem:[#allocation9 + $0x290] sm:$0xff]
      %v2422 = vld [vmem:[#allocation9 + $0x298] sm:$0xff]
      %v2423 = vld [vmem:[#allocation9 + $0x2a0] sm:$0xff]
      %v2424 = vld [vmem:[#allocation9 + $0x2a8] sm:$0xff]
      %v2425 = vld [vmem:[#allocation9 + $0x2b0] sm:$0xff]
      %v2426 = vld [vmem:[#allocation9 + $0x2b8] sm:$0xff]
      %v2427 = vld [vmem:[#allocation9 + $0x2c0] sm:$0xff]
      %v2428 = vld [vmem:[#allocation9 + $0x2c8] sm:$0xff]
      %v2429 = vld [vmem:[#allocation9 + $0x2d0] sm:$0xff]
      %v2430 = vld [vmem:[#allocation9 + $0x2d8] sm:$0xff]
      %v2431 = vld [vmem:[#allocation9 + $0x2e0] sm:$0xff]
      %v2432 = vld [vmem:[#allocation9 + $0x2e8] sm:$0xff]
      %v2433 = vld [vmem:[#allocation9 + $0x2f0] sm:$0xff]
      %v2434 = vld [vmem:[#allocation9 + $0x2f8] sm:$0xff]
      %v2435 = vld [vmem:[#allocation9 + $0x300] sm:$0xff]
      %v2436 = vld [vmem:[#allocation9 + $0x308] sm:$0xff]
      %v2437 = vld [vmem:[#allocation9 + $0x310] sm:$0xff]
      %v2438 = vld [vmem:[#allocation9 + $0x318] sm:$0xff]
      %v2439 = vld [vmem:[#allocation9 + $0x320] sm:$0xff]
      %v2440 = vld [vmem:[#allocation9 + $0x328] sm:$0xff]
      %v2441 = vld [vmem:[#allocation9 + $0x330] sm:$0xff]
      %v2442 = vld [vmem:[#allocation9 + $0x338] sm:$0xff]
      %v2443 = vld [vmem:[#allocation9 + $0x340] sm:$0xff]
      %v2444 = vld [vmem:[#allocation9 + $0x348] sm:$0xff]
      %v2445 = vld [vmem:[#allocation9 + $0x350] sm:$0xff]
      %v2446 = vld [vmem:[#allocation9 + $0x358] sm:$0xff]
      %v2447 = vld [vmem:[#allocation9 + $0x360] sm:$0xff]
      %v2448 = vld [vmem:[#allocation9 + $0x368] sm:$0xff]
      %v2449 = vld [vmem:[#allocation9 + $0x370] sm:$0xff]
      %v2450 = vld [vmem:[#allocation9 + $0x378] sm:$0xff]
      %v2451 = vld [vmem:[#allocation9 + $0x380] sm:$0xff]
      %v2452 = vld [vmem:[#allocation9 + $0x388] sm:$0xff]
      %v2453 = vld [vmem:[#allocation9 + $0x390] sm:$0xff]
      %v2454 = vld [vmem:[#allocation9 + $0x398] sm:$0xff]
      %v2455 = vld [vmem:[#allocation9 + $0x3a0] sm:$0xff]
      %v2456 = vld [vmem:[#allocation9 + $0x3a8] sm:$0xff]
      %v2457 = vld [vmem:[#allocation9 + $0x3b0] sm:$0xff]
      %v2458 = vld [vmem:[#allocation9 + $0x3b8] sm:$0xff]
      %v2459 = vld [vmem:[#allocation9 + $0x3c0] sm:$0xff]
      %v2460 = vld [vmem:[#allocation9 + $0x3c8] sm:$0xff]
      %v2461 = vld [vmem:[#allocation9 + $0x3d0] sm:$0xff]
      %v2462 = vld [vmem:[#allocation9 + $0x3d8] sm:$0xff]
      %v2463 = vld [vmem:[#allocation9 + $0x3e0] sm:$0xff]
      %v2464 = vld [vmem:[#allocation9 + $0x3e8] sm:$0xff]
      %v2465 = vld [vmem:[#allocation9 + $0x3f0] sm:$0xff]
      %v2466 = vld [vmem:[#allocation9 + $0x3f8] sm:$0xff]
      %v2467 = vld [vmem:[#allocation11] sm:$0xf]
      %v2469 = vperm.slane %v2467, 0
      %v2470 = vperm.slane %v2467, 1
      %v2471 = vperm.slane %v2467, 2
      %v2472 = vperm.slane %v2467, 3
      %v2605 = vunpack.c.l.b16 %v2339
      %v2606 = vunpack.c.h.b16 %v2339
      %v2607 = vunpack.c.l.b16 %v2340
      %v2608 = vunpack.c.h.b16 %v2340
      %v2609 = vunpack.c.l.b16 %v2341
      %v2610 = vunpack.c.h.b16 %v2341
      %v2611 = vunpack.c.l.b16 %v2342
      %v2612 = vunpack.c.h.b16 %v2342
      %v2613 = vunpack.c.l.b16 %v2343
      %v2614 = vunpack.c.h.b16 %v2343
      %v2615 = vunpack.c.l.b16 %v2344
      %v2616 = vunpack.c.h.b16 %v2344
      %v2617 = vunpack.c.l.b16 %v2345
      %v2618 = vunpack.c.h.b16 %v2345
      %v2619 = vunpack.c.l.b16 %v2346
      %v2620 = vunpack.c.h.b16 %v2346
      %v2621 = vunpack.c.l.b16 %v2347
      %v2622 = vunpack.c.h.b16 %v2347
      %v2623 = vunpack.c.l.b16 %v2348
      %v2624 = vunpack.c.h.b16 %v2348
      %v2625 = vunpack.c.l.b16 %v2349
      %v2626 = vunpack.c.h.b16 %v2349
      %v2627 = vunpack.c.l.b16 %v2350
      %v2628 = vunpack.c.h.b16 %v2350
      %v2629 = vunpack.c.l.b16 %v2351
      %v2630 = vunpack.c.h.b16 %v2351
      %v2631 = vunpack.c.l.b16 %v2352
      %v2632 = vunpack.c.h.b16 %v2352
      %v2633 = vunpack.c.l.b16 %v2353
      %v2634 = vunpack.c.h.b16 %v2353
      %v2635 = vunpack.c.l.b16 %v2354
      %v2636 = vunpack.c.h.b16 %v2354
      %v2637 = vunpack.c.l.b16 %v2355
      %v2638 = vunpack.c.h.b16 %v2355
      %v2639 = vunpack.c.l.b16 %v2356
      %v2640 = vunpack.c.h.b16 %v2356
      %v2641 = vunpack.c.l.b16 %v2357
      %v2642 = vunpack.c.h.b16 %v2357
      %v2643 = vunpack.c.l.b16 %v2358
      %v2644 = vunpack.c.h.b16 %v2358
      %v2645 = vunpack.c.l.b16 %v2359
      %v2646 = vunpack.c.h.b16 %v2359
      %v2647 = vunpack.c.l.b16 %v2360
      %v2648 = vunpack.c.h.b16 %v2360
      %v2649 = vunpack.c.l.b16 %v2361
      %v2650 = vunpack.c.h.b16 %v2361
      %v2651 = vunpack.c.l.b16 %v2362
      %v2652 = vunpack.c.h.b16 %v2362
      %v2653 = vunpack.c.l.b16 %v2363
      %v2654 = vunpack.c.h.b16 %v2363
      %v2655 = vunpack.c.l.b16 %v2364
      %v2656 = vunpack.c.h.b16 %v2364
      %v2657 = vunpack.c.l.b16 %v2365
      %v2658 = vunpack.c.h.b16 %v2365
      %v2659 = vunpack.c.l.b16 %v2366
      %v2660 = vunpack.c.h.b16 %v2366
      %v2661 = vunpack.c.l.b16 %v2367
      %v2662 = vunpack.c.h.b16 %v2367
      %v2663 = vunpack.c.l.b16 %v2368
      %v2664 = vunpack.c.h.b16 %v2368
      %v2665 = vunpack.c.l.b16 %v2369
      %v2666 = vunpack.c.h.b16 %v2369
      %v2667 = vunpack.c.l.b16 %v2370
      %v2668 = vunpack.c.h.b16 %v2370
      %v2669 = vunpack.c.l.b16 %v2371
      %v2670 = vunpack.c.h.b16 %v2371
      %v2671 = vunpack.c.l.b16 %v2372
      %v2672 = vunpack.c.h.b16 %v2372
      %v2673 = vunpack.c.l.b16 %v2373
      %v2674 = vunpack.c.h.b16 %v2373
      %v2675 = vunpack.c.l.b16 %v2374
      %v2676 = vunpack.c.h.b16 %v2374
      %v2677 = vunpack.c.l.b16 %v2375
      %v2678 = vunpack.c.h.b16 %v2375
      %v2679 = vunpack.c.l.b16 %v2376
      %v2680 = vunpack.c.h.b16 %v2376
      %v2681 = vunpack.c.l.b16 %v2377
      %v2682 = vunpack.c.h.b16 %v2377
      %v2683 = vunpack.c.l.b16 %v2378
      %v2684 = vunpack.c.h.b16 %v2378
      %v2685 = vunpack.c.l.b16 %v2379
      %v2686 = vunpack.c.h.b16 %v2379
      %v2687 = vunpack.c.l.b16 %v2380
      %v2688 = vunpack.c.h.b16 %v2380
      %v2689 = vunpack.c.l.b16 %v2381
      %v2690 = vunpack.c.h.b16 %v2381
      %v2691 = vunpack.c.l.b16 %v2382
      %v2692 = vunpack.c.h.b16 %v2382
      %v2693 = vunpack.c.l.b16 %v2383
      %v2694 = vunpack.c.h.b16 %v2383
      %v2695 = vunpack.c.l.b16 %v2384
      %v2696 = vunpack.c.h.b16 %v2384
      %v2697 = vunpack.c.l.b16 %v2385
      %v2698 = vunpack.c.h.b16 %v2385
      %v2699 = vunpack.c.l.b16 %v2386
      %v2700 = vunpack.c.h.b16 %v2386
      %v2701 = vunpack.c.l.b16 %v2387
      %v2702 = vunpack.c.h.b16 %v2387
      %v2703 = vunpack.c.l.b16 %v2388
      %v2704 = vunpack.c.h.b16 %v2388
      %v2705 = vunpack.c.l.b16 %v2389
      %v2706 = vunpack.c.h.b16 %v2389
      %v2707 = vunpack.c.l.b16 %v2390
      %v2708 = vunpack.c.h.b16 %v2390
      %v2709 = vunpack.c.l.b16 %v2391
      %v2710 = vunpack.c.h.b16 %v2391
      %v2711 = vunpack.c.l.b16 %v2392
      %v2712 = vunpack.c.h.b16 %v2392
      %v2713 = vunpack.c.l.b16 %v2393
      %v2714 = vunpack.c.h.b16 %v2393
      %v2715 = vunpack.c.l.b16 %v2394
      %v2716 = vunpack.c.h.b16 %v2394
      %v2717 = vunpack.c.l.b16 %v2395
      %v2718 = vunpack.c.h.b16 %v2395
      %v2719 = vunpack.c.l.b16 %v2396
      %v2720 = vunpack.c.h.b16 %v2396
      %v2721 = vunpack.c.l.b16 %v2397
      %v2722 = vunpack.c.h.b16 %v2397
      %v2723 = vunpack.c.l.b16 %v2398
      %v2724 = vunpack.c.h.b16 %v2398
      %v2725 = vunpack.c.l.b16 %v2399
      %v2726 = vunpack.c.h.b16 %v2399
      %v2727 = vunpack.c.l.b16 %v2400
      %v2728 = vunpack.c.h.b16 %v2400
      %v2729 = vunpack.c.l.b16 %v2401
      %v2730 = vunpack.c.h.b16 %v2401
      %v2731 = vunpack.c.l.b16 %v2402
      %v2732 = vunpack.c.h.b16 %v2402
      %v2733 = vunpack.c.l.b16 %v2403
      %v2734 = vunpack.c.h.b16 %v2403
      %v2735 = vunpack.c.l.b16 %v2404
      %v2736 = vunpack.c.h.b16 %v2404
      %v2737 = vunpack.c.l.b16 %v2405
      %v2738 = vunpack.c.h.b16 %v2405
      %v2739 = vunpack.c.l.b16 %v2406
      %v2740 = vunpack.c.h.b16 %v2406
      %v2741 = vunpack.c.l.b16 %v2407
      %v2742 = vunpack.c.h.b16 %v2407
      %v2743 = vunpack.c.l.b16 %v2408
      %v2744 = vunpack.c.h.b16 %v2408
      %v2745 = vunpack.c.l.b16 %v2409
      %v2746 = vunpack.c.h.b16 %v2409
      %v2747 = vunpack.c.l.b16 %v2410
      %v2748 = vunpack.c.h.b16 %v2410
      %v2749 = vunpack.c.l.b16 %v2411
      %v2750 = vunpack.c.h.b16 %v2411
      %v2751 = vunpack.c.l.b16 %v2412
      %v2752 = vunpack.c.h.b16 %v2412
      %v2753 = vunpack.c.l.b16 %v2413
      %v2754 = vunpack.c.h.b16 %v2413
      %v2755 = vunpack.c.l.b16 %v2414
      %v2756 = vunpack.c.h.b16 %v2414
      %v2757 = vunpack.c.l.b16 %v2415
      %v2758 = vunpack.c.h.b16 %v2415
      %v2759 = vunpack.c.l.b16 %v2416
      %v2760 = vunpack.c.h.b16 %v2416
      %v2761 = vunpack.c.l.b16 %v2417
      %v2762 = vunpack.c.h.b16 %v2417
      %v2763 = vunpack.c.l.b16 %v2418
      %v2764 = vunpack.c.h.b16 %v2418
      %v2765 = vunpack.c.l.b16 %v2419
      %v2766 = vunpack.c.h.b16 %v2419
      %v2767 = vunpack.c.l.b16 %v2420
      %v2768 = vunpack.c.h.b16 %v2420
      %v2769 = vunpack.c.l.b16 %v2421
      %v2770 = vunpack.c.h.b16 %v2421
      %v2771 = vunpack.c.l.b16 %v2422
      %v2772 = vunpack.c.h.b16 %v2422
      %v2773 = vunpack.c.l.b16 %v2423
      %v2774 = vunpack.c.h.b16 %v2423
      %v2775 = vunpack.c.l.b16 %v2424
      %v2776 = vunpack.c.h.b16 %v2424
      %v2777 = vunpack.c.l.b16 %v2425
      %v2778 = vunpack.c.h.b16 %v2425
      %v2779 = vunpack.c.l.b16 %v2426
      %v2780 = vunpack.c.h.b16 %v2426
      %v2781 = vunpack.c.l.b16 %v2427
      %v2782 = vunpack.c.h.b16 %v2427
      %v2783 = vunpack.c.l.b16 %v2428
      %v2784 = vunpack.c.h.b16 %v2428
      %v2785 = vunpack.c.l.b16 %v2429
      %v2786 = vunpack.c.h.b16 %v2429
      %v2787 = vunpack.c.l.b16 %v2430
      %v2788 = vunpack.c.h.b16 %v2430
      %v2789 = vunpack.c.l.b16 %v2431
      %v2790 = vunpack.c.h.b16 %v2431
      %v2791 = vunpack.c.l.b16 %v2432
      %v2792 = vunpack.c.h.b16 %v2432
      %v2793 = vunpack.c.l.b16 %v2433
      %v2794 = vunpack.c.h.b16 %v2433
      %v2795 = vunpack.c.l.b16 %v2434
      %v2796 = vunpack.c.h.b16 %v2434
      %v2797 = vunpack.c.l.b16 %v2435
      %v2798 = vunpack.c.h.b16 %v2435
      %v2799 = vunpack.c.l.b16 %v2436
      %v2800 = vunpack.c.h.b16 %v2436
      %v2801 = vunpack.c.l.b16 %v2437
      %v2802 = vunpack.c.h.b16 %v2437
      %v2803 = vunpack.c.l.b16 %v2438
      %v2804 = vunpack.c.h.b16 %v2438
      %v2805 = vunpack.c.l.b16 %v2439
      %v2806 = vunpack.c.h.b16 %v2439
      %v2807 = vunpack.c.l.b16 %v2440
      %v2808 = vunpack.c.h.b16 %v2440
      %v2809 = vunpack.c.l.b16 %v2441
      %v2810 = vunpack.c.h.b16 %v2441
      %v2811 = vunpack.c.l.b16 %v2442
      %v2812 = vunpack.c.h.b16 %v2442
      %v2813 = vunpack.c.l.b16 %v2443
      %v2814 = vunpack.c.h.b16 %v2443
      %v2815 = vunpack.c.l.b16 %v2444
      %v2816 = vunpack.c.h.b16 %v2444
      %v2817 = vunpack.c.l.b16 %v2445
      %v2818 = vunpack.c.h.b16 %v2445
      %v2819 = vunpack.c.l.b16 %v2446
      %v2820 = vunpack.c.h.b16 %v2446
      %v2821 = vunpack.c.l.b16 %v2447
      %v2822 = vunpack.c.h.b16 %v2447
      %v2823 = vunpack.c.l.b16 %v2448
      %v2824 = vunpack.c.h.b16 %v2448
      %v2825 = vunpack.c.l.b16 %v2449
      %v2826 = vunpack.c.h.b16 %v2449
      %v2827 = vunpack.c.l.b16 %v2450
      %v2828 = vunpack.c.h.b16 %v2450
      %v2829 = vunpack.c.l.b16 %v2451
      %v2830 = vunpack.c.h.b16 %v2451
      %v2831 = vunpack.c.l.b16 %v2452
      %v2832 = vunpack.c.h.b16 %v2452
      %v2833 = vunpack.c.l.b16 %v2453
      %v2834 = vunpack.c.h.b16 %v2453
      %v2835 = vunpack.c.l.b16 %v2454
      %v2836 = vunpack.c.h.b16 %v2454
      %v2837 = vunpack.c.l.b16 %v2455
      %v2838 = vunpack.c.h.b16 %v2455
      %v2839 = vunpack.c.l.b16 %v2456
      %v2840 = vunpack.c.h.b16 %v2456
      %v2841 = vunpack.c.l.b16 %v2457
      %v2842 = vunpack.c.h.b16 %v2457
      %v2843 = vunpack.c.l.b16 %v2458
      %v2844 = vunpack.c.h.b16 %v2458
      %v2845 = vunpack.c.l.b16 %v2459
      %v2846 = vunpack.c.h.b16 %v2459
      %v2847 = vunpack.c.l.b16 %v2460
      %v2848 = vunpack.c.h.b16 %v2460
      %v2849 = vunpack.c.l.b16 %v2461
      %v2850 = vunpack.c.h.b16 %v2461
      %v2851 = vunpack.c.l.b16 %v2462
      %v2852 = vunpack.c.h.b16 %v2462
      %v2853 = vunpack.c.l.b16 %v2463
      %v2854 = vunpack.c.h.b16 %v2463
      %v2855 = vunpack.c.l.b16 %v2464
      %v2856 = vunpack.c.h.b16 %v2464
      %v2857 = vunpack.c.l.b16 %v2465
      %v2858 = vunpack.c.h.b16 %v2465
      %v2859 = vunpack.c.l.b16 %v2466
      %v2860 = vunpack.c.h.b16 %v2466
      %v2861 = vpack.c.b16 %v2609, %v2605
      %v2862 = vpack.c.b16 %v2610, %v2606
      %v2863 = vpack.c.b16 %v2611, %v2607
      %v2864 = vpack.c.b16 %v2612, %v2608
      %v2865 = vpack.c.b16 %v2617, %v2613
      %v2866 = vpack.c.b16 %v2618, %v2614
      %v2867 = vpack.c.b16 %v2619, %v2615
      %v2868 = vpack.c.b16 %v2620, %v2616
      %v2869 = vpack.c.b16 %v2625, %v2621
      %v2870 = vpack.c.b16 %v2626, %v2622
      %v2871 = vpack.c.b16 %v2627, %v2623
      %v2872 = vpack.c.b16 %v2628, %v2624
      %v2873 = vpack.c.b16 %v2633, %v2629
      %v2874 = vpack.c.b16 %v2634, %v2630
      %v2875 = vpack.c.b16 %v2635, %v2631
      %v2876 = vpack.c.b16 %v2636, %v2632
      %v2877 = vpack.c.b16 %v2641, %v2637
      %v2878 = vpack.c.b16 %v2642, %v2638
      %v2879 = vpack.c.b16 %v2643, %v2639
      %v2880 = vpack.c.b16 %v2644, %v2640
      %v2881 = vpack.c.b16 %v2649, %v2645
      %v2882 = vpack.c.b16 %v2650, %v2646
      %v2883 = vpack.c.b16 %v2651, %v2647
      %v2884 = vpack.c.b16 %v2652, %v2648
      %v2885 = vpack.c.b16 %v2657, %v2653
      %v2886 = vpack.c.b16 %v2658, %v2654
      %v2887 = vpack.c.b16 %v2659, %v2655
      %v2888 = vpack.c.b16 %v2660, %v2656
      %v2889 = vpack.c.b16 %v2665, %v2661
      %v2890 = vpack.c.b16 %v2666, %v2662
      %v2891 = vpack.c.b16 %v2667, %v2663
      %v2892 = vpack.c.b16 %v2668, %v2664
      %v2893 = vpack.c.b16 %v2673, %v2669
      %v2894 = vpack.c.b16 %v2674, %v2670
      %v2895 = vpack.c.b16 %v2675, %v2671
      %v2896 = vpack.c.b16 %v2676, %v2672
      %v2897 = vpack.c.b16 %v2681, %v2677
      %v2898 = vpack.c.b16 %v2682, %v2678
      %v2899 = vpack.c.b16 %v2683, %v2679
      %v2900 = vpack.c.b16 %v2684, %v2680
      %v2901 = vpack.c.b16 %v2689, %v2685
      %v2902 = vpack.c.b16 %v2690, %v2686
      %v2903 = vpack.c.b16 %v2691, %v2687
      %v2904 = vpack.c.b16 %v2692, %v2688
      %v2905 = vpack.c.b16 %v2697, %v2693
      %v2906 = vpack.c.b16 %v2698, %v2694
      %v2907 = vpack.c.b16 %v2699, %v2695
      %v2908 = vpack.c.b16 %v2700, %v2696
      %v2909 = vpack.c.b16 %v2705, %v2701
      %v2910 = vpack.c.b16 %v2706, %v2702
      %v2911 = vpack.c.b16 %v2707, %v2703
      %v2912 = vpack.c.b16 %v2708, %v2704
      %v2913 = vpack.c.b16 %v2713, %v2709
      %v2914 = vpack.c.b16 %v2714, %v2710
      %v2915 = vpack.c.b16 %v2715, %v2711
      %v2916 = vpack.c.b16 %v2716, %v2712
      %v2917 = vpack.c.b16 %v2721, %v2717
      %v2918 = vpack.c.b16 %v2722, %v2718
      %v2919 = vpack.c.b16 %v2723, %v2719
      %v2920 = vpack.c.b16 %v2724, %v2720
      %v2921 = vpack.c.b16 %v2729, %v2725
      %v2922 = vpack.c.b16 %v2730, %v2726
      %v2923 = vpack.c.b16 %v2731, %v2727
      %v2924 = vpack.c.b16 %v2732, %v2728
      %v2925 = vpack.c.b16 %v2737, %v2733
      %v2926 = vpack.c.b16 %v2738, %v2734
      %v2927 = vpack.c.b16 %v2739, %v2735
      %v2928 = vpack.c.b16 %v2740, %v2736
      %v2929 = vpack.c.b16 %v2745, %v2741
      %v2930 = vpack.c.b16 %v2746, %v2742
      %v2931 = vpack.c.b16 %v2747, %v2743
      %v2932 = vpack.c.b16 %v2748, %v2744
      %v2933 = vpack.c.b16 %v2753, %v2749
      %v2934 = vpack.c.b16 %v2754, %v2750
      %v2935 = vpack.c.b16 %v2755, %v2751
      %v2936 = vpack.c.b16 %v2756, %v2752
      %v2937 = vpack.c.b16 %v2761, %v2757
      %v2938 = vpack.c.b16 %v2762, %v2758
      %v2939 = vpack.c.b16 %v2763, %v2759
      %v2940 = vpack.c.b16 %v2764, %v2760
      %v2941 = vpack.c.b16 %v2769, %v2765
      %v2942 = vpack.c.b16 %v2770, %v2766
      %v2943 = vpack.c.b16 %v2771, %v2767
      %v2944 = vpack.c.b16 %v2772, %v2768
      %v2945 = vpack.c.b16 %v2777, %v2773
      %v2946 = vpack.c.b16 %v2778, %v2774
      %v2947 = vpack.c.b16 %v2779, %v2775
      %v2948 = vpack.c.b16 %v2780, %v2776
      %v2949 = vpack.c.b16 %v2785, %v2781
      %v2950 = vpack.c.b16 %v2786, %v2782
      %v2951 = vpack.c.b16 %v2787, %v2783
      %v2952 = vpack.c.b16 %v2788, %v2784
      %v2953 = vpack.c.b16 %v2793, %v2789
      %v2954 = vpack.c.b16 %v2794, %v2790
      %v2955 = vpack.c.b16 %v2795, %v2791
      %v2956 = vpack.c.b16 %v2796, %v2792
      %v2957 = vpack.c.b16 %v2801, %v2797
      %v2958 = vpack.c.b16 %v2802, %v2798
      %v2959 = vpack.c.b16 %v2803, %v2799
      %v2960 = vpack.c.b16 %v2804, %v2800
      %v2961 = vpack.c.b16 %v2809, %v2805
      %v2962 = vpack.c.b16 %v2810, %v2806
      %v2963 = vpack.c.b16 %v2811, %v2807
      %v2964 = vpack.c.b16 %v2812, %v2808
      %v2965 = vpack.c.b16 %v2817, %v2813
      %v2966 = vpack.c.b16 %v2818, %v2814
      %v2967 = vpack.c.b16 %v2819, %v2815
      %v2968 = vpack.c.b16 %v2820, %v2816
      %v2969 = vpack.c.b16 %v2825, %v2821
      %v2970 = vpack.c.b16 %v2826, %v2822
      %v2971 = vpack.c.b16 %v2827, %v2823
      %v2972 = vpack.c.b16 %v2828, %v2824
      %v2973 = vpack.c.b16 %v2833, %v2829
      %v2974 = vpack.c.b16 %v2834, %v2830
      %v2975 = vpack.c.b16 %v2835, %v2831
      %v2976 = vpack.c.b16 %v2836, %v2832
      %v2977 = vpack.c.b16 %v2841, %v2837
      %v2978 = vpack.c.b16 %v2842, %v2838
      %v2979 = vpack.c.b16 %v2843, %v2839
      %v2980 = vpack.c.b16 %v2844, %v2840
      %v2981 = vpack.c.b16 %v2849, %v2845
      %v2982 = vpack.c.b16 %v2850, %v2846
      %v2983 = vpack.c.b16 %v2851, %v2847
      %v2984 = vpack.c.b16 %v2852, %v2848
      %v2985 = vpack.c.b16 %v2857, %v2853
      %v2986 = vpack.c.b16 %v2858, %v2854
      %v2987 = vpack.c.b16 %v2859, %v2855
      %v2988 = vpack.c.b16 %v2860, %v2856
      %3117 = vmatpush.bf16.msra.mxu0 %v2889
      %3118 = vmatpush.bf16.msra.mxu0 %v2885
      %3119 = vmatpush.bf16.msra.mxu0 %v2881
      %3120 = vmatpush.bf16.msra.mxu0 %v2877
      %3121 = vmatpush.bf16.msra.mxu0 %v2873
      %3122 = vmatpush.bf16.msra.mxu0 %v2869
      %3123 = vmatpush.bf16.msra.mxu0 %v2865
      %3124 = vmatpush.bf16.msra.mxu0 %v2861
      %3125 = vmatmul.bf16.gmra.mxu0 %v2335
      %v3126 = vpop.f32.mrf.mxu0
      %v3127 = vadd.f32 %v2469, %v3126
      %v3128 = vpop.f32.mrf.mxu0
      %3129 = vdwg.mxu0
      %3130 = vmatpush.bf16.msra.mxu0 %v2921
      %3131 = vmatpush.bf16.msra.mxu0 %v2917
      %3132 = vmatpush.bf16.msra.mxu0 %v2913
      %3133 = vmatpush.bf16.msra.mxu0 %v2909
      %3134 = vmatpush.bf16.msra.mxu0 %v2905
      %3135 = vmatpush.bf16.msra.mxu0 %v2901
      %3136 = vmatpush.bf16.msra.mxu0 %v2897
      %3137 = vmatpush.bf16.msra.mxu0 %v2893
      %3138 = vmatmul.bf16.gmra.mxu0 %v2336
      %v3139 = vpop.f32.mrf.mxu0
      %v3140 = vadd.f32 %v3127, %v3139
      %v3141 = vpop.f32.mrf.mxu0
      %3142 = vdwg.mxu0
      %3143 = vmatpush.bf16.msra.mxu0 %v2953
      %3144 = vmatpush.bf16.msra.mxu0 %v2949
      %3145 = vmatpush.bf16.msra.mxu0 %v2945
      %3146 = vmatpush.bf16.msra.mxu0 %v2941
      %3147 = vmatpush.bf16.msra.mxu0 %v2937
      %3148 = vmatpush.bf16.msra.mxu0 %v2933
      %3149 = vmatpush.bf16.msra.mxu0 %v2929
      %3150 = vmatpush.bf16.msra.mxu0 %v2925
      %3151 = vmatmul.bf16.gmra.mxu0 %v2337
      %v3152 = vpop.f32.mrf.mxu0
      %v3153 = vadd.f32 %v3140, %v3152
      %v3154 = vpop.f32.mrf.mxu0
      %3155 = vdwg.mxu0
      %3156 = vmatpush.bf16.msra.mxu0 %v2985
      %3157 = vmatpush.bf16.msra.mxu0 %v2981
      %3158 = vmatpush.bf16.msra.mxu0 %v2977
      %3159 = vmatpush.bf16.msra.mxu0 %v2973
      %3160 = vmatpush.bf16.msra.mxu0 %v2969
      %3161 = vmatpush.bf16.msra.mxu0 %v2965
      %3162 = vmatpush.bf16.msra.mxu0 %v2961
      %3163 = vmatpush.bf16.msra.mxu0 %v2957
      %3164 = vmatmul.bf16.gmra.mxu0 %v2338
      %v3165 = vpop.f32.mrf.mxu0
      %v3166 = vadd.f32 %v3153, %v3165
      %v3167 = vpop.f32.mrf.mxu0
      %3168 = vdwg.mxu0
      %3169 = vmatpush.bf16.msra.mxu0 %v2890
      %3170 = vmatpush.bf16.msra.mxu0 %v2886
      %3171 = vmatpush.bf16.msra.mxu0 %v2882
      %3172 = vmatpush.bf16.msra.mxu0 %v2878
      %3173 = vmatpush.bf16.msra.mxu0 %v2874
      %3174 = vmatpush.bf16.msra.mxu0 %v2870
      %3175 = vmatpush.bf16.msra.mxu0 %v2866
      %3176 = vmatpush.bf16.msra.mxu0 %v2862
      %3177 = vmatmul.bf16.gmra.mxu0 %v2335
      %v3178 = vpop.f32.mrf.mxu0
      %v3179 = vadd.f32 %v2470, %v3178
      %v3180 = vpop.f32.mrf.mxu0
      %3181 = vdwg.mxu0
      %3182 = vmatpush.bf16.msra.mxu0 %v2922
      %3183 = vmatpush.bf16.msra.mxu0 %v2918
      %3184 = vmatpush.bf16.msra.mxu0 %v2914
      %3185 = vmatpush.bf16.msra.mxu0 %v2910
      %3186 = vmatpush.bf16.msra.mxu0 %v2906
      %3187 = vmatpush.bf16.msra.mxu0 %v2902
      %3188 = vmatpush.bf16.msra.mxu0 %v2898
      %3189 = vmatpush.bf16.msra.mxu0 %v2894
      %3190 = vmatmul.bf16.gmra.mxu0 %v2336
      %v3191 = vpop.f32.mrf.mxu0
      %v3192 = vadd.f32 %v3179, %v3191
      %v3193 = vpop.f32.mrf.mxu0
      %3194 = vdwg.mxu0
      %3195 = vmatpush.bf16.msra.mxu0 %v2954
      %3196 = vmatpush.bf16.msra.mxu0 %v2950
      %3197 = vmatpush.bf16.msra.mxu0 %v2946
      %3198 = vmatpush.bf16.msra.mxu0 %v2942
      %3199 = vmatpush.bf16.msra.mxu0 %v2938
      %3200 = vmatpush.bf16.msra.mxu0 %v2934
      %3201 = vmatpush.bf16.msra.mxu0 %v2930
      %3202 = vmatpush.bf16.msra.mxu0 %v2926
      %3203 = vmatmul.bf16.gmra.mxu0 %v2337
      %v3204 = vpop.f32.mrf.mxu0
      %v3205 = vadd.f32 %v3192, %v3204
      %v3206 = vpop.f32.mrf.mxu0
      %3207 = vdwg.mxu0
      %3208 = vmatpush.bf16.msra.mxu0 %v2986
      %3209 = vmatpush.bf16.msra.mxu0 %v2982
      %3210 = vmatpush.bf16.msra.mxu0 %v2978
      %3211 = vmatpush.bf16.msra.mxu0 %v2974
      %3212 = vmatpush.bf16.msra.mxu0 %v2970
      %3213 = vmatpush.bf16.msra.mxu0 %v2966
      %3214 = vmatpush.bf16.msra.mxu0 %v2962
      %3215 = vmatpush.bf16.msra.mxu0 %v2958
      %3216 = vmatmul.bf16.gmra.mxu0 %v2338
      %v3217 = vpop.f32.mrf.mxu0
      %v3218 = vadd.f32 %v3205, %v3217
      %v3219 = vpop.f32.mrf.mxu0
      %3220 = vdwg.mxu0
      %3221 = vmatpush.bf16.msra.mxu0 %v2891
      %3222 = vmatpush.bf16.msra.mxu0 %v2887
      %3223 = vmatpush.bf16.msra.mxu0 %v2883
      %3224 = vmatpush.bf16.msra.mxu0 %v2879
      %3225 = vmatpush.bf16.msra.mxu0 %v2875
      %3226 = vmatpush.bf16.msra.mxu0 %v2871
      %3227 = vmatpush.bf16.msra.mxu0 %v2867
      %3228 = vmatpush.bf16.msra.mxu0 %v2863
      %3229 = vmatmul.bf16.gmra.mxu0 %v2335
      %v3230 = vpop.f32.mrf.mxu0
      %v3231 = vadd.f32 %v2471, %v3230
      %v3232 = vpop.f32.mrf.mxu0
      %3233 = vdwg.mxu0
      %3234 = vmatpush.bf16.msra.mxu0 %v2923
      %3235 = vmatpush.bf16.msra.mxu0 %v2919
      %3236 = vmatpush.bf16.msra.mxu0 %v2915
      %3237 = vmatpush.bf16.msra.mxu0 %v2911
      %3238 = vmatpush.bf16.msra.mxu0 %v2907
      %3239 = vmatpush.bf16.msra.mxu0 %v2903
      %3240 = vmatpush.bf16.msra.mxu0 %v2899
      %3241 = vmatpush.bf16.msra.mxu0 %v2895
      %3242 = vmatmul.bf16.gmra.mxu0 %v2336
      %v3243 = vpop.f32.mrf.mxu0
      %v3244 = vadd.f32 %v3231, %v3243
      %v3245 = vpop.f32.mrf.mxu0
      %3246 = vdwg.mxu0
      %3247 = vmatpush.bf16.msra.mxu0 %v2955
      %3248 = vmatpush.bf16.msra.mxu0 %v2951
      %3249 = vmatpush.bf16.msra.mxu0 %v2947
      %3250 = vmatpush.bf16.msra.mxu0 %v2943
      %3251 = vmatpush.bf16.msra.mxu0 %v2939
      %3252 = vmatpush.bf16.msra.mxu0 %v2935
      %3253 = vmatpush.bf16.msra.mxu0 %v2931
      %3254 = vmatpush.bf16.msra.mxu0 %v2927
      %3255 = vmatmul.bf16.gmra.mxu0 %v2337
      %v3256 = vpop.f32.mrf.mxu0
      %v3257 = vadd.f32 %v3244, %v3256
      %v3258 = vpop.f32.mrf.mxu0
      %3259 = vdwg.mxu0
      %3260 = vmatpush.bf16.msra.mxu0 %v2987
      %3261 = vmatpush.bf16.msra.mxu0 %v2983
      %3262 = vmatpush.bf16.msra.mxu0 %v2979
      %3263 = vmatpush.bf16.msra.mxu0 %v2975
      %3264 = vmatpush.bf16.msra.mxu0 %v2971
      %3265 = vmatpush.bf16.msra.mxu0 %v2967
      %3266 = vmatpush.bf16.msra.mxu0 %v2963
      %3267 = vmatpush.bf16.msra.mxu0 %v2959
      %3268 = vmatmul.bf16.gmra.mxu0 %v2338
      %v3269 = vpop.f32.mrf.mxu0
      %v3270 = vadd.f32 %v3257, %v3269
      %v3271 = vpop.f32.mrf.mxu0
      %3272 = vdwg.mxu0
      %3273 = vmatpush.bf16.msra.mxu0 %v2892
      %3274 = vmatpush.bf16.msra.mxu0 %v2888
      %3275 = vmatpush.bf16.msra.mxu0 %v2884
      %3276 = vmatpush.bf16.msra.mxu0 %v2880
      %3277 = vmatpush.bf16.msra.mxu0 %v2876
      %3278 = vmatpush.bf16.msra.mxu0 %v2872
      %3279 = vmatpush.bf16.msra.mxu0 %v2868
      %3280 = vmatpush.bf16.msra.mxu0 %v2864
      %3281 = vmatmul.bf16.gmra.mxu0 %v2335
      %v3282 = vpop.f32.mrf.mxu0
      %v3283 = vadd.f32 %v2472, %v3282
      %v3284 = vpop.f32.mrf.mxu0
      %3285 = vdwg.mxu0
      %3286 = vmatpush.bf16.msra.mxu0 %v2924
      %3287 = vmatpush.bf16.msra.mxu0 %v2920
      %3288 = vmatpush.bf16.msra.mxu0 %v2916
      %3289 = vmatpush.bf16.msra.mxu0 %v2912
      %3290 = vmatpush.bf16.msra.mxu0 %v2908
      %3291 = vmatpush.bf16.msra.mxu0 %v2904
      %3292 = vmatpush.bf16.msra.mxu0 %v2900
      %3293 = vmatpush.bf16.msra.mxu0 %v2896
      %3294 = vmatmul.bf16.gmra.mxu0 %v2336
      %v3295 = vpop.f32.mrf.mxu0
      %v3296 = vadd.f32 %v3283, %v3295
      %v3297 = vpop.f32.mrf.mxu0
      %3298 = vdwg.mxu0
      %3299 = vmatpush.bf16.msra.mxu0 %v2956
      %3300 = vmatpush.bf16.msra.mxu0 %v2952
      %3301 = vmatpush.bf16.msra.mxu0 %v2948
      %3302 = vmatpush.bf16.msra.mxu0 %v2944
      %3303 = vmatpush.bf16.msra.mxu0 %v2940
      %3304 = vmatpush.bf16.msra.mxu0 %v2936
      %3305 = vmatpush.bf16.msra.mxu0 %v2932
      %3306 = vmatpush.bf16.msra.mxu0 %v2928
      %3307 = vmatmul.bf16.gmra.mxu0 %v2337
      %v3308 = vpop.f32.mrf.mxu0
      %v3309 = vadd.f32 %v3296, %v3308
      %v3310 = vpop.f32.mrf.mxu0
      %3311 = vdwg.mxu0
      %3312 = vmatpush.bf16.msra.mxu0 %v2988
      %3313 = vmatpush.bf16.msra.mxu0 %v2984
      %3314 = vmatpush.bf16.msra.mxu0 %v2980
      %3315 = vmatpush.bf16.msra.mxu0 %v2976
      %3316 = vmatpush.bf16.msra.mxu0 %v2972
      %3317 = vmatpush.bf16.msra.mxu0 %v2968
      %3318 = vmatpush.bf16.msra.mxu0 %v2964
      %3319 = vmatpush.bf16.msra.mxu0 %v2960
      %3320 = vmatmul.bf16.gmra.mxu0 %v2338
      %v3321 = vpop.f32.mrf.mxu0
      %v3322 = vadd.f32 %v3309, %v3321
      %v3323 = vpop.f32.mrf.mxu0
      %3324 = vdwg.mxu0
      %v3325 = vmul.f32 %v3166, 0.5
      %v3326 = vmul.f32 %v3218, 0.5
      %v3327 = vmul.f32 %v3270, 0.5
      %v3328 = vmul.f32 %v3322, 0.5
      %v3329 = vmul.f32 %v3166, 0.70710677
      %v3330 = vmul.f32 %v3218, 0.70710677
      %v3331 = vmul.f32 %v3270, 0.70710677
      %v3332 = vmul.f32 %v3322, 0.70710677
      %v3333 = vmul.f32 %v3329, %v3329
      %v3334 = vmin.f32 16.0, %v3333
      %v3335 = vmul.f32 %v3334, 2.1237322e-06
      %v3336 = vadd.f32 %v3335, 0.00028619796
      %v3337 = vmul.f32 %v3334, %v3336
      %v3338 = vadd.f32 %v3337, 0.0036580483
      %v3339 = vmul.f32 %v3334, %v3338
      %v3340 = vadd.f32 %v3339, 0.05243302
      %v3341 = vmul.f32 %v3334, %v3340
      %v3342 = vadd.f32 %v3341, 0.18741608
      %v3343 = vmul.f32 %v3334, %v3342
      %v3344 = vadd.f32 %v3343, 1.1283791
      %v3345 = vmul.f32 %v3329, %v3344
      %v3346 = vmul.f32 %v3334, 3.8918573e-05
      %v3347 = vadd.f32 %v3346, 0.001143296
      %v3348 = vmul.f32 %v3334, %v3347
      %v3349 = vadd.f32 %v3348, 0.014752088
      %v3350 = vmul.f32 %v3334, %v3349
      %v3351 = vadd.f32 %v3350, 0.112945676
      %v3352 = vmul.f32 %v3334, %v3351
      %v3353 = vadd.f32 %v3352, 0.4994258
      %v3354 = vmul.f32 %v3334, %v3353
      %v3355 = vadd.f32 %v3354, 1.0
      %v3356 = vrcp.pop %v3355
      %v3357 = vmul.f32 %v3355, %v3356
      %v3358 = vsub.f32 1.0, %v3357
      %v3359 = vmul.f32 %v3356, %v3358
      %v3360 = vadd.f32 %v3356, %v3359
      %vm3361 = vweird.f32 %v3355
      %vm3362 = vweird.f32 %v3356
      %vm3363 = vmor %vm3361, %vm3362
      %v3364 = vsel %vm3363, %v3356, %v3360
      %v3365 = vand.u32 2147483647, %v3355
      %vm3366 = vcmp.eq.f32.partialorder %v3365, 8.507059e+37
      %v3367 = vand.u32 %v3355, 2147483648
      %v3368 = vor.u32 1.1754944e-38, %v3367
      %v3369 = vsel %vm3366, %v3368, %v3364
      %v3370 = vmul.f32 %v3345, %v3369
      %v3371 = vmin.f32 %v3370, 1.0
      %v3372 = vmax.f32 %v3371, -1.0
      %v3373 = vmul.f32 %v3330, %v3330
      %v3374 = vmin.f32 16.0, %v3373
      %v3375 = vmul.f32 %v3374, 2.1237322e-06
      %v3376 = vadd.f32 %v3375, 0.00028619796
      %v3377 = vmul.f32 %v3374, %v3376
      %v3378 = vadd.f32 %v3377, 0.0036580483
      %v3379 = vmul.f32 %v3374, %v3378
      %v3380 = vadd.f32 %v3379, 0.05243302
      %v3381 = vmul.f32 %v3374, %v3380
      %v3382 = vadd.f32 %v3381, 0.18741608
      %v3383 = vmul.f32 %v3374, %v3382
      %v3384 = vadd.f32 %v3383, 1.1283791
      %v3385 = vmul.f32 %v3330, %v3384
      %v3386 = vmul.f32 %v3374, 3.8918573e-05
      %v3387 = vadd.f32 %v3386, 0.001143296
      %v3388 = vmul.f32 %v3374, %v3387
      %v3389 = vadd.f32 %v3388, 0.014752088
      %v3390 = vmul.f32 %v3374, %v3389
      %v3391 = vadd.f32 %v3390, 0.112945676
      %v3392 = vmul.f32 %v3374, %v3391
      %v3393 = vadd.f32 %v3392, 0.4994258
      %v3394 = vmul.f32 %v3374, %v3393
      %v3395 = vadd.f32 %v3394, 1.0
      %v3396 = vrcp.pop %v3395
      %v3397 = vmul.f32 %v3395, %v3396
      %v3398 = vsub.f32 1.0, %v3397
      %v3399 = vmul.f32 %v3396, %v3398
      %v3400 = vadd.f32 %v3396, %v3399
      %vm3401 = vweird.f32 %v3395
      %vm3402 = vweird.f32 %v3396
      %vm3403 = vmor %vm3401, %vm3402
      %v3404 = vsel %vm3403, %v3396, %v3400
      %v3405 = vand.u32 2147483647, %v3395
      %vm3406 = vcmp.eq.f32.partialorder %v3405, 8.507059e+37
      %v3407 = vand.u32 %v3395, 2147483648
      %v3408 = vor.u32 1.1754944e-38, %v3407
      %v3409 = vsel %vm3406, %v3408, %v3404
      %v3410 = vmul.f32 %v3385, %v3409
      %v3411 = vmin.f32 %v3410, 1.0
      %v3412 = vmax.f32 %v3411, -1.0
      %v3413 = vmul.f32 %v3331, %v3331
      %v3414 = vmin.f32 16.0, %v3413
      %v3415 = vmul.f32 %v3414, 2.1237322e-06
      %v3416 = vadd.f32 %v3415, 0.00028619796
      %v3417 = vmul.f32 %v3414, %v3416
      %v3418 = vadd.f32 %v3417, 0.0036580483
      %v3419 = vmul.f32 %v3414, %v3418
      %v3420 = vadd.f32 %v3419, 0.05243302
      %v3421 = vmul.f32 %v3414, %v3420
      %v3422 = vadd.f32 %v3421, 0.18741608
      %v3423 = vmul.f32 %v3414, %v3422
      %v3424 = vadd.f32 %v3423, 1.1283791
      %v3425 = vmul.f32 %v3331, %v3424
      %v3426 = vmul.f32 %v3414, 3.8918573e-05
      %v3427 = vadd.f32 %v3426, 0.001143296
      %v3428 = vmul.f32 %v3414, %v3427
      %v3429 = vadd.f32 %v3428, 0.014752088
      %v3430 = vmul.f32 %v3414, %v3429
      %v3431 = vadd.f32 %v3430, 0.112945676
      %v3432 = vmul.f32 %v3414, %v3431
      %v3433 = vadd.f32 %v3432, 0.4994258
      %v3434 = vmul.f32 %v3414, %v3433
      %v3435 = vadd.f32 %v3434, 1.0
      %v3436 = vrcp.pop %v3435
      %v3437 = vmul.f32 %v3435, %v3436
      %v3438 = vsub.f32 1.0, %v3437
      %v3439 = vmul.f32 %v3436, %v3438
      %v3440 = vadd.f32 %v3436, %v3439
      %vm3441 = vweird.f32 %v3435
      %vm3442 = vweird.f32 %v3436
      %vm3443 = vmor %vm3441, %vm3442
      %v3444 = vsel %vm3443, %v3436, %v3440
      %v3445 = vand.u32 2147483647, %v3435
      %vm3446 = vcmp.eq.f32.partialorder %v3445, 8.507059e+37
      %v3447 = vand.u32 %v3435, 2147483648
      %v3448 = vor.u32 1.1754944e-38, %v3447
      %v3449 = vsel %vm3446, %v3448, %v3444
      %v3450 = vmul.f32 %v3425, %v3449
      %v3451 = vmin.f32 %v3450, 1.0
      %v3452 = vmax.f32 %v3451, -1.0
      %v3453 = vmul.f32 %v3332, %v3332
      %v3454 = vmin.f32 16.0, %v3453
      %v3455 = vmul.f32 %v3454, 2.1237322e-06
      %v3456 = vadd.f32 %v3455, 0.00028619796
      %v3457 = vmul.f32 %v3454, %v3456
      %v3458 = vadd.f32 %v3457, 0.0036580483
      %v3459 = vmul.f32 %v3454, %v3458
      %v3460 = vadd.f32 %v3459, 0.05243302
      %v3461 = vmul.f32 %v3454, %v3460
      %v3462 = vadd.f32 %v3461, 0.18741608
      %v3463 = vmul.f32 %v3454, %v3462
      %v3464 = vadd.f32 %v3463, 1.1283791
      %v3465 = vmul.f32 %v3332, %v3464
      %v3466 = vmul.f32 %v3454, 3.8918573e-05
      %v3467 = vadd.f32 %v3466, 0.001143296
      %v3468 = vmul.f32 %v3454, %v3467
      %v3469 = vadd.f32 %v3468, 0.014752088
      %v3470 = vmul.f32 %v3454, %v3469
      %v3471 = vadd.f32 %v3470, 0.112945676
      %v3472 = vmul.f32 %v3454, %v3471
      %v3473 = vadd.f32 %v3472, 0.4994258
      %v3474 = vmul.f32 %v3454, %v3473
      %v3475 = vadd.f32 %v3474, 1.0
      %v3476 = vrcp.pop %v3475
      %v3477 = vmul.f32 %v3475, %v3476
      %v3478 = vsub.f32 1.0, %v3477
      %v3479 = vmul.f32 %v3476, %v3478
      %v3480 = vadd.f32 %v3476, %v3479
      %vm3481 = vweird.f32 %v3475
      %vm3482 = vweird.f32 %v3476
      %vm3483 = vmor %vm3481, %vm3482
      %v3484 = vsel %vm3483, %v3476, %v3480
      %v3485 = vand.u32 2147483647, %v3475
      %vm3486 = vcmp.eq.f32.partialorder %v3485, 8.507059e+37
      %v3487 = vand.u32 %v3475, 2147483648
      %v3488 = vor.u32 1.1754944e-38, %v3487
      %v3489 = vsel %vm3486, %v3488, %v3484
      %v3490 = vmul.f32 %v3465, %v3489
      %v3491 = vmin.f32 %v3490, 1.0
      %v3492 = vmax.f32 %v3491, -1.0
      %v3493 = vadd.f32 %v3372, 1.0
      %v3494 = vadd.f32 %v3412, 1.0
      %v3495 = vadd.f32 %v3452, 1.0
      %v3496 = vadd.f32 %v3492, 1.0
      %v3497 = vmul.f32 %v3325, %v3493
      %v3498 = vmul.f32 %v3326, %v3494
      %v3499 = vmul.f32 %v3327, %v3495
      %v3500 = vmul.f32 %v3328, %v3496
      %v3501 = vpack.c.bf16 %v3497, %v3497
      %v3502 = vpack.c.bf16 %v3498, %v3498
      %v3503 = vpack.c.bf16 %v3499, %v3499
      %v3504 = vpack.c.bf16 %v3500, %v3500
      %v3505 = vld [vmem:[#allocation12] sm:$0xff]
      %v3506 = vld [vmem:[#allocation12 + $0x8] sm:$0xff]
      %v3507 = vld [vmem:[#allocation12 + $0x10] sm:$0xff]
      %v3508 = vld [vmem:[#allocation12 + $0x18] sm:$0xff]
      %v3509 = vld [vmem:[#allocation12 + $0x20] sm:$0xff]
      %v3510 = vld [vmem:[#allocation12 + $0x28] sm:$0xff]
      %v3511 = vld [vmem:[#allocation12 + $0x30] sm:$0xff]
      %v3512 = vld [vmem:[#allocation12 + $0x38] sm:$0xff]
      %v3513 = vld [vmem:[#allocation12 + $0x40] sm:$0xff]
      %v3514 = vld [vmem:[#allocation12 + $0x48] sm:$0xff]
      %v3515 = vld [vmem:[#allocation12 + $0x50] sm:$0xff]
      %v3516 = vld [vmem:[#allocation12 + $0x58] sm:$0xff]
      %v3517 = vld [vmem:[#allocation12 + $0x60] sm:$0xff]
      %v3518 = vld [vmem:[#allocation12 + $0x68] sm:$0xff]
      %v3519 = vld [vmem:[#allocation12 + $0x70] sm:$0xff]
      %v3520 = vld [vmem:[#allocation12 + $0x78] sm:$0xff]
      %v3521 = vld [vmem:[#allocation12 + $0x80] sm:$0xff]
      %v3522 = vld [vmem:[#allocation12 + $0x88] sm:$0xff]
      %v3523 = vld [vmem:[#allocation12 + $0x90] sm:$0xff]
      %v3524 = vld [vmem:[#allocation12 + $0x98] sm:$0xff]
      %v3525 = vld [vmem:[#allocation12 + $0xa0] sm:$0xff]
      %v3526 = vld [vmem:[#allocation12 + $0xa8] sm:$0xff]
      %v3527 = vld [vmem:[#allocation12 + $0xb0] sm:$0xff]
      %v3528 = vld [vmem:[#allocation12 + $0xb8] sm:$0xff]
      %v3529 = vld [vmem:[#allocation12 + $0xc0] sm:$0xff]
      %v3530 = vld [vmem:[#allocation12 + $0xc8] sm:$0xff]
      %v3531 = vld [vmem:[#allocation12 + $0xd0] sm:$0xff]
      %v3532 = vld [vmem:[#allocation12 + $0xd8] sm:$0xff]
      %v3533 = vld [vmem:[#allocation12 + $0xe0] sm:$0xff]
      %v3534 = vld [vmem:[#allocation12 + $0xe8] sm:$0xff]
      %v3535 = vld [vmem:[#allocation12 + $0xf0] sm:$0xff]
      %v3536 = vld [vmem:[#allocation12 + $0xf8] sm:$0xff]
      %v3537 = vld [vmem:[#allocation12 + $0x100] sm:$0xff]
      %v3538 = vld [vmem:[#allocation12 + $0x108] sm:$0xff]
      %v3539 = vld [vmem:[#allocation12 + $0x110] sm:$0xff]
      %v3540 = vld [vmem:[#allocation12 + $0x118] sm:$0xff]
      %v3541 = vld [vmem:[#allocation12 + $0x120] sm:$0xff]
      %v3542 = vld [vmem:[#allocation12 + $0x128] sm:$0xff]
      %v3543 = vld [vmem:[#allocation12 + $0x130] sm:$0xff]
      %v3544 = vld [vmem:[#allocation12 + $0x138] sm:$0xff]
      %v3545 = vld [vmem:[#allocation12 + $0x140] sm:$0xff]
      %v3546 = vld [vmem:[#allocation12 + $0x148] sm:$0xff]
      %v3547 = vld [vmem:[#allocation12 + $0x150] sm:$0xff]
      %v3548 = vld [vmem:[#allocation12 + $0x158] sm:$0xff]
      %v3549 = vld [vmem:[#allocation12 + $0x160] sm:$0xff]
      %v3550 = vld [vmem:[#allocation12 + $0x168] sm:$0xff]
      %v3551 = vld [vmem:[#allocation12 + $0x170] sm:$0xff]
      %v3552 = vld [vmem:[#allocation12 + $0x178] sm:$0xff]
      %v3553 = vld [vmem:[#allocation12 + $0x180] sm:$0xff]
      %v3554 = vld [vmem:[#allocation12 + $0x188] sm:$0xff]
      %v3555 = vld [vmem:[#allocation12 + $0x190] sm:$0xff]
      %v3556 = vld [vmem:[#allocation12 + $0x198] sm:$0xff]
      %v3557 = vld [vmem:[#allocation12 + $0x1a0] sm:$0xff]
      %v3558 = vld [vmem:[#allocation12 + $0x1a8] sm:$0xff]
      %v3559 = vld [vmem:[#allocation12 + $0x1b0] sm:$0xff]
      %v3560 = vld [vmem:[#allocation12 + $0x1b8] sm:$0xff]
      %v3561 = vld [vmem:[#allocation12 + $0x1c0] sm:$0xff]
      %v3562 = vld [vmem:[#allocation12 + $0x1c8] sm:$0xff]
      %v3563 = vld [vmem:[#allocation12 + $0x1d0] sm:$0xff]
      %v3564 = vld [vmem:[#allocation12 + $0x1d8] sm:$0xff]
      %v3565 = vld [vmem:[#allocation12 + $0x1e0] sm:$0xff]
      %v3566 = vld [vmem:[#allocation12 + $0x1e8] sm:$0xff]
      %v3567 = vld [vmem:[#allocation12 + $0x1f0] sm:$0xff]
      %v3568 = vld [vmem:[#allocation12 + $0x1f8] sm:$0xff]
      %v3569 = vld [vmem:[#allocation12 + $0x200] sm:$0xff]
      %v3570 = vld [vmem:[#allocation12 + $0x208] sm:$0xff]
      %v3571 = vld [vmem:[#allocation12 + $0x210] sm:$0xff]
      %v3572 = vld [vmem:[#allocation12 + $0x218] sm:$0xff]
      %v3573 = vld [vmem:[#allocation12 + $0x220] sm:$0xff]
      %v3574 = vld [vmem:[#allocation12 + $0x228] sm:$0xff]
      %v3575 = vld [vmem:[#allocation12 + $0x230] sm:$0xff]
      %v3576 = vld [vmem:[#allocation12 + $0x238] sm:$0xff]
      %v3577 = vld [vmem:[#allocation12 + $0x240] sm:$0xff]
      %v3578 = vld [vmem:[#allocation12 + $0x248] sm:$0xff]
      %v3579 = vld [vmem:[#allocation12 + $0x250] sm:$0xff]
      %v3580 = vld [vmem:[#allocation12 + $0x258] sm:$0xff]
      %v3581 = vld [vmem:[#allocation12 + $0x260] sm:$0xff]
      %v3582 = vld [vmem:[#allocation12 + $0x268] sm:$0xff]
      %v3583 = vld [vmem:[#allocation12 + $0x270] sm:$0xff]
      %v3584 = vld [vmem:[#allocation12 + $0x278] sm:$0xff]
      %v3585 = vld [vmem:[#allocation12 + $0x280] sm:$0xff]
      %v3586 = vld [vmem:[#allocation12 + $0x288] sm:$0xff]
      %v3587 = vld [vmem:[#allocation12 + $0x290] sm:$0xff]
      %v3588 = vld [vmem:[#allocation12 + $0x298] sm:$0xff]
      %v3589 = vld [vmem:[#allocation12 + $0x2a0] sm:$0xff]
      %v3590 = vld [vmem:[#allocation12 + $0x2a8] sm:$0xff]
      %v3591 = vld [vmem:[#allocation12 + $0x2b0] sm:$0xff]
      %v3592 = vld [vmem:[#allocation12 + $0x2b8] sm:$0xff]
      %v3593 = vld [vmem:[#allocation12 + $0x2c0] sm:$0xff]
      %v3594 = vld [vmem:[#allocation12 + $0x2c8] sm:$0xff]
      %v3595 = vld [vmem:[#allocation12 + $0x2d0] sm:$0xff]
      %v3596 = vld [vmem:[#allocation12 + $0x2d8] sm:$0xff]
      %v3597 = vld [vmem:[#allocation12 + $0x2e0] sm:$0xff]
      %v3598 = vld [vmem:[#allocation12 + $0x2e8] sm:$0xff]
      %v3599 = vld [vmem:[#allocation12 + $0x2f0] sm:$0xff]
      %v3600 = vld [vmem:[#allocation12 + $0x2f8] sm:$0xff]
      %v3601 = vld [vmem:[#allocation12 + $0x300] sm:$0xff]
      %v3602 = vld [vmem:[#allocation12 + $0x308] sm:$0xff]
      %v3603 = vld [vmem:[#allocation12 + $0x310] sm:$0xff]
      %v3604 = vld [vmem:[#allocation12 + $0x318] sm:$0xff]
      %v3605 = vld [vmem:[#allocation12 + $0x320] sm:$0xff]
      %v3606 = vld [vmem:[#allocation12 + $0x328] sm:$0xff]
      %v3607 = vld [vmem:[#allocation12 + $0x330] sm:$0xff]
      %v3608 = vld [vmem:[#allocation12 + $0x338] sm:$0xff]
      %v3609 = vld [vmem:[#allocation12 + $0x340] sm:$0xff]
      %v3610 = vld [vmem:[#allocation12 + $0x348] sm:$0xff]
      %v3611 = vld [vmem:[#allocation12 + $0x350] sm:$0xff]
      %v3612 = vld [vmem:[#allocation12 + $0x358] sm:$0xff]
      %v3613 = vld [vmem:[#allocation12 + $0x360] sm:$0xff]
      %v3614 = vld [vmem:[#allocation12 + $0x368] sm:$0xff]
      %v3615 = vld [vmem:[#allocation12 + $0x370] sm:$0xff]
      %v3616 = vld [vmem:[#allocation12 + $0x378] sm:$0xff]
      %v3617 = vld [vmem:[#allocation12 + $0x380] sm:$0xff]
      %v3618 = vld [vmem:[#allocation12 + $0x388] sm:$0xff]
      %v3619 = vld [vmem:[#allocation12 + $0x390] sm:$0xff]
      %v3620 = vld [vmem:[#allocation12 + $0x398] sm:$0xff]
      %v3621 = vld [vmem:[#allocation12 + $0x3a0] sm:$0xff]
      %v3622 = vld [vmem:[#allocation12 + $0x3a8] sm:$0xff]
      %v3623 = vld [vmem:[#allocation12 + $0x3b0] sm:$0xff]
      %v3624 = vld [vmem:[#allocation12 + $0x3b8] sm:$0xff]
      %v3625 = vld [vmem:[#allocation12 + $0x3c0] sm:$0xff]
      %v3626 = vld [vmem:[#allocation12 + $0x3c8] sm:$0xff]
      %v3627 = vld [vmem:[#allocation12 + $0x3d0] sm:$0xff]
      %v3628 = vld [vmem:[#allocation12 + $0x3d8] sm:$0xff]
      %v3629 = vld [vmem:[#allocation12 + $0x3e0] sm:$0xff]
      %v3630 = vld [vmem:[#allocation12 + $0x3e8] sm:$0xff]
      %v3631 = vld [vmem:[#allocation12 + $0x3f0] sm:$0xff]
      %v3632 = vld [vmem:[#allocation12 + $0x3f8] sm:$0xff]
      %v3633 = vld [vmem:[%s6] sm:$0xf]
      %v3635 = vperm.slane %v3633, 0
      %v3636 = vperm.slane %v3633, 1
      %v3637 = vperm.slane %v3633, 2
      %v3638 = vperm.slane %v3633, 3
      %v3771 = vunpack.c.l.b16 %v3505
      %v3772 = vunpack.c.h.b16 %v3505
      %v3773 = vunpack.c.l.b16 %v3506
      %v3774 = vunpack.c.h.b16 %v3506
      %v3775 = vunpack.c.l.b16 %v3507
      %v3776 = vunpack.c.h.b16 %v3507
      %v3777 = vunpack.c.l.b16 %v3508
      %v3778 = vunpack.c.h.b16 %v3508
      %v3779 = vunpack.c.l.b16 %v3509
      %v3780 = vunpack.c.h.b16 %v3509
      %v3781 = vunpack.c.l.b16 %v3510
      %v3782 = vunpack.c.h.b16 %v3510
      %v3783 = vunpack.c.l.b16 %v3511
      %v3784 = vunpack.c.h.b16 %v3511
      %v3785 = vunpack.c.l.b16 %v3512
      %v3786 = vunpack.c.h.b16 %v3512
      %v3787 = vunpack.c.l.b16 %v3513
      %v3788 = vunpack.c.h.b16 %v3513
      %v3789 = vunpack.c.l.b16 %v3514
      %v3790 = vunpack.c.h.b16 %v3514
      %v3791 = vunpack.c.l.b16 %v3515
      %v3792 = vunpack.c.h.b16 %v3515
      %v3793 = vunpack.c.l.b16 %v3516
      %v3794 = vunpack.c.h.b16 %v3516
      %v3795 = vunpack.c.l.b16 %v3517
      %v3796 = vunpack.c.h.b16 %v3517
      %v3797 = vunpack.c.l.b16 %v3518
      %v3798 = vunpack.c.h.b16 %v3518
      %v3799 = vunpack.c.l.b16 %v3519
      %v3800 = vunpack.c.h.b16 %v3519
      %v3801 = vunpack.c.l.b16 %v3520
      %v3802 = vunpack.c.h.b16 %v3520
      %v3803 = vunpack.c.l.b16 %v3521
      %v3804 = vunpack.c.h.b16 %v3521
      %v3805 = vunpack.c.l.b16 %v3522
      %v3806 = vunpack.c.h.b16 %v3522
      %v3807 = vunpack.c.l.b16 %v3523
      %v3808 = vunpack.c.h.b16 %v3523
      %v3809 = vunpack.c.l.b16 %v3524
      %v3810 = vunpack.c.h.b16 %v3524
      %v3811 = vunpack.c.l.b16 %v3525
      %v3812 = vunpack.c.h.b16 %v3525
      %v3813 = vunpack.c.l.b16 %v3526
      %v3814 = vunpack.c.h.b16 %v3526
      %v3815 = vunpack.c.l.b16 %v3527
      %v3816 = vunpack.c.h.b16 %v3527
      %v3817 = vunpack.c.l.b16 %v3528
      %v3818 = vunpack.c.h.b16 %v3528
      %v3819 = vunpack.c.l.b16 %v3529
      %v3820 = vunpack.c.h.b16 %v3529
      %v3821 = vunpack.c.l.b16 %v3530
      %v3822 = vunpack.c.h.b16 %v3530
      %v3823 = vunpack.c.l.b16 %v3531
      %v3824 = vunpack.c.h.b16 %v3531
      %v3825 = vunpack.c.l.b16 %v3532
      %v3826 = vunpack.c.h.b16 %v3532
      %v3827 = vunpack.c.l.b16 %v3533
      %v3828 = vunpack.c.h.b16 %v3533
      %v3829 = vunpack.c.l.b16 %v3534
      %v3830 = vunpack.c.h.b16 %v3534
      %v3831 = vunpack.c.l.b16 %v3535
      %v3832 = vunpack.c.h.b16 %v3535
      %v3833 = vunpack.c.l.b16 %v3536
      %v3834 = vunpack.c.h.b16 %v3536
      %v3835 = vunpack.c.l.b16 %v3537
      %v3836 = vunpack.c.h.b16 %v3537
      %v3837 = vunpack.c.l.b16 %v3538
      %v3838 = vunpack.c.h.b16 %v3538
      %v3839 = vunpack.c.l.b16 %v3539
      %v3840 = vunpack.c.h.b16 %v3539
      %v3841 = vunpack.c.l.b16 %v3540
      %v3842 = vunpack.c.h.b16 %v3540
      %v3843 = vunpack.c.l.b16 %v3541
      %v3844 = vunpack.c.h.b16 %v3541
      %v3845 = vunpack.c.l.b16 %v3542
      %v3846 = vunpack.c.h.b16 %v3542
      %v3847 = vunpack.c.l.b16 %v3543
      %v3848 = vunpack.c.h.b16 %v3543
      %v3849 = vunpack.c.l.b16 %v3544
      %v3850 = vunpack.c.h.b16 %v3544
      %v3851 = vunpack.c.l.b16 %v3545
      %v3852 = vunpack.c.h.b16 %v3545
      %v3853 = vunpack.c.l.b16 %v3546
      %v3854 = vunpack.c.h.b16 %v3546
      %v3855 = vunpack.c.l.b16 %v3547
      %v3856 = vunpack.c.h.b16 %v3547
      %v3857 = vunpack.c.l.b16 %v3548
      %v3858 = vunpack.c.h.b16 %v3548
      %v3859 = vunpack.c.l.b16 %v3549
      %v3860 = vunpack.c.h.b16 %v3549
      %v3861 = vunpack.c.l.b16 %v3550
      %v3862 = vunpack.c.h.b16 %v3550
      %v3863 = vunpack.c.l.b16 %v3551
      %v3864 = vunpack.c.h.b16 %v3551
      %v3865 = vunpack.c.l.b16 %v3552
      %v3866 = vunpack.c.h.b16 %v3552
      %v3867 = vunpack.c.l.b16 %v3553
      %v3868 = vunpack.c.h.b16 %v3553
      %v3869 = vunpack.c.l.b16 %v3554
      %v3870 = vunpack.c.h.b16 %v3554
      %v3871 = vunpack.c.l.b16 %v3555
      %v3872 = vunpack.c.h.b16 %v3555
      %v3873 = vunpack.c.l.b16 %v3556
      %v3874 = vunpack.c.h.b16 %v3556
      %v3875 = vunpack.c.l.b16 %v3557
      %v3876 = vunpack.c.h.b16 %v3557
      %v3877 = vunpack.c.l.b16 %v3558
      %v3878 = vunpack.c.h.b16 %v3558
      %v3879 = vunpack.c.l.b16 %v3559
      %v3880 = vunpack.c.h.b16 %v3559
      %v3881 = vunpack.c.l.b16 %v3560
      %v3882 = vunpack.c.h.b16 %v3560
      %v3883 = vunpack.c.l.b16 %v3561
      %v3884 = vunpack.c.h.b16 %v3561
      %v3885 = vunpack.c.l.b16 %v3562
      %v3886 = vunpack.c.h.b16 %v3562
      %v3887 = vunpack.c.l.b16 %v3563
      %v3888 = vunpack.c.h.b16 %v3563
      %v3889 = vunpack.c.l.b16 %v3564
      %v3890 = vunpack.c.h.b16 %v3564
      %v3891 = vunpack.c.l.b16 %v3565
      %v3892 = vunpack.c.h.b16 %v3565
      %v3893 = vunpack.c.l.b16 %v3566
      %v3894 = vunpack.c.h.b16 %v3566
      %v3895 = vunpack.c.l.b16 %v3567
      %v3896 = vunpack.c.h.b16 %v3567
      %v3897 = vunpack.c.l.b16 %v3568
      %v3898 = vunpack.c.h.b16 %v3568
      %v3899 = vunpack.c.l.b16 %v3569
      %v3900 = vunpack.c.h.b16 %v3569
      %v3901 = vunpack.c.l.b16 %v3570
      %v3902 = vunpack.c.h.b16 %v3570
      %v3903 = vunpack.c.l.b16 %v3571
      %v3904 = vunpack.c.h.b16 %v3571
      %v3905 = vunpack.c.l.b16 %v3572
      %v3906 = vunpack.c.h.b16 %v3572
      %v3907 = vunpack.c.l.b16 %v3573
      %v3908 = vunpack.c.h.b16 %v3573
      %v3909 = vunpack.c.l.b16 %v3574
      %v3910 = vunpack.c.h.b16 %v3574
      %v3911 = vunpack.c.l.b16 %v3575
      %v3912 = vunpack.c.h.b16 %v3575
      %v3913 = vunpack.c.l.b16 %v3576
      %v3914 = vunpack.c.h.b16 %v3576
      %v3915 = vunpack.c.l.b16 %v3577
      %v3916 = vunpack.c.h.b16 %v3577
      %v3917 = vunpack.c.l.b16 %v3578
      %v3918 = vunpack.c.h.b16 %v3578
      %v3919 = vunpack.c.l.b16 %v3579
      %v3920 = vunpack.c.h.b16 %v3579
      %v3921 = vunpack.c.l.b16 %v3580
      %v3922 = vunpack.c.h.b16 %v3580
      %v3923 = vunpack.c.l.b16 %v3581
      %v3924 = vunpack.c.h.b16 %v3581
      %v3925 = vunpack.c.l.b16 %v3582
      %v3926 = vunpack.c.h.b16 %v3582
      %v3927 = vunpack.c.l.b16 %v3583
      %v3928 = vunpack.c.h.b16 %v3583
      %v3929 = vunpack.c.l.b16 %v3584
      %v3930 = vunpack.c.h.b16 %v3584
      %v3931 = vunpack.c.l.b16 %v3585
      %v3932 = vunpack.c.h.b16 %v3585
      %v3933 = vunpack.c.l.b16 %v3586
      %v3934 = vunpack.c.h.b16 %v3586
      %v3935 = vunpack.c.l.b16 %v3587
      %v3936 = vunpack.c.h.b16 %v3587
      %v3937 = vunpack.c.l.b16 %v3588
      %v3938 = vunpack.c.h.b16 %v3588
      %v3939 = vunpack.c.l.b16 %v3589
      %v3940 = vunpack.c.h.b16 %v3589
      %v3941 = vunpack.c.l.b16 %v3590
      %v3942 = vunpack.c.h.b16 %v3590
      %v3943 = vunpack.c.l.b16 %v3591
      %v3944 = vunpack.c.h.b16 %v3591
      %v3945 = vunpack.c.l.b16 %v3592
      %v3946 = vunpack.c.h.b16 %v3592
      %v3947 = vunpack.c.l.b16 %v3593
      %v3948 = vunpack.c.h.b16 %v3593
      %v3949 = vunpack.c.l.b16 %v3594
      %v3950 = vunpack.c.h.b16 %v3594
      %v3951 = vunpack.c.l.b16 %v3595
      %v3952 = vunpack.c.h.b16 %v3595
      %v3953 = vunpack.c.l.b16 %v3596
      %v3954 = vunpack.c.h.b16 %v3596
      %v3955 = vunpack.c.l.b16 %v3597
      %v3956 = vunpack.c.h.b16 %v3597
      %v3957 = vunpack.c.l.b16 %v3598
      %v3958 = vunpack.c.h.b16 %v3598
      %v3959 = vunpack.c.l.b16 %v3599
      %v3960 = vunpack.c.h.b16 %v3599
      %v3961 = vunpack.c.l.b16 %v3600
      %v3962 = vunpack.c.h.b16 %v3600
      %v3963 = vunpack.c.l.b16 %v3601
      %v3964 = vunpack.c.h.b16 %v3601
      %v3965 = vunpack.c.l.b16 %v3602
      %v3966 = vunpack.c.h.b16 %v3602
      %v3967 = vunpack.c.l.b16 %v3603
      %v3968 = vunpack.c.h.b16 %v3603
      %v3969 = vunpack.c.l.b16 %v3604
      %v3970 = vunpack.c.h.b16 %v3604
      %v3971 = vunpack.c.l.b16 %v3605
      %v3972 = vunpack.c.h.b16 %v3605
      %v3973 = vunpack.c.l.b16 %v3606
      %v3974 = vunpack.c.h.b16 %v3606
      %v3975 = vunpack.c.l.b16 %v3607
      %v3976 = vunpack.c.h.b16 %v3607
      %v3977 = vunpack.c.l.b16 %v3608
      %v3978 = vunpack.c.h.b16 %v3608
      %v3979 = vunpack.c.l.b16 %v3609
      %v3980 = vunpack.c.h.b16 %v3609
      %v3981 = vunpack.c.l.b16 %v3610
      %v3982 = vunpack.c.h.b16 %v3610
      %v3983 = vunpack.c.l.b16 %v3611
      %v3984 = vunpack.c.h.b16 %v3611
      %v3985 = vunpack.c.l.b16 %v3612
      %v3986 = vunpack.c.h.b16 %v3612
      %v3987 = vunpack.c.l.b16 %v3613
      %v3988 = vunpack.c.h.b16 %v3613
      %v3989 = vunpack.c.l.b16 %v3614
      %v3990 = vunpack.c.h.b16 %v3614
      %v3991 = vunpack.c.l.b16 %v3615
      %v3992 = vunpack.c.h.b16 %v3615
      %v3993 = vunpack.c.l.b16 %v3616
      %v3994 = vunpack.c.h.b16 %v3616
      %v3995 = vunpack.c.l.b16 %v3617
      %v3996 = vunpack.c.h.b16 %v3617
      %v3997 = vunpack.c.l.b16 %v3618
      %v3998 = vunpack.c.h.b16 %v3618
      %v3999 = vunpack.c.l.b16 %v3619
      %v4000 = vunpack.c.h.b16 %v3619
      %v4001 = vunpack.c.l.b16 %v3620
      %v4002 = vunpack.c.h.b16 %v3620
      %v4003 = vunpack.c.l.b16 %v3621
      %v4004 = vunpack.c.h.b16 %v3621
      %v4005 = vunpack.c.l.b16 %v3622
      %v4006 = vunpack.c.h.b16 %v3622
      %v4007 = vunpack.c.l.b16 %v3623
      %v4008 = vunpack.c.h.b16 %v3623
      %v4009 = vunpack.c.l.b16 %v3624
      %v4010 = vunpack.c.h.b16 %v3624
      %v4011 = vunpack.c.l.b16 %v3625
      %v4012 = vunpack.c.h.b16 %v3625
      %v4013 = vunpack.c.l.b16 %v3626
      %v4014 = vunpack.c.h.b16 %v3626
      %v4015 = vunpack.c.l.b16 %v3627
      %v4016 = vunpack.c.h.b16 %v3627
      %v4017 = vunpack.c.l.b16 %v3628
      %v4018 = vunpack.c.h.b16 %v3628
      %v4019 = vunpack.c.l.b16 %v3629
      %v4020 = vunpack.c.h.b16 %v3629
      %v4021 = vunpack.c.l.b16 %v3630
      %v4022 = vunpack.c.h.b16 %v3630
      %v4023 = vunpack.c.l.b16 %v3631
      %v4024 = vunpack.c.h.b16 %v3631
      %v4025 = vunpack.c.l.b16 %v3632
      %v4026 = vunpack.c.h.b16 %v3632
      %v4027 = vpack.c.b16 %v3775, %v3771
      %v4028 = vpack.c.b16 %v3776, %v3772
      %v4029 = vpack.c.b16 %v3777, %v3773
      %v4030 = vpack.c.b16 %v3778, %v3774
      %v4031 = vpack.c.b16 %v3783, %v3779
      %v4032 = vpack.c.b16 %v3784, %v3780
      %v4033 = vpack.c.b16 %v3785, %v3781
      %v4034 = vpack.c.b16 %v3786, %v3782
      %v4035 = vpack.c.b16 %v3791, %v3787
      %v4036 = vpack.c.b16 %v3792, %v3788
      %v4037 = vpack.c.b16 %v3793, %v3789
      %v4038 = vpack.c.b16 %v3794, %v3790
      %v4039 = vpack.c.b16 %v3799, %v3795
      %v4040 = vpack.c.b16 %v3800, %v3796
      %v4041 = vpack.c.b16 %v3801, %v3797
      %v4042 = vpack.c.b16 %v3802, %v3798
      %v4043 = vpack.c.b16 %v3807, %v3803
      %v4044 = vpack.c.b16 %v3808, %v3804
      %v4045 = vpack.c.b16 %v3809, %v3805
      %v4046 = vpack.c.b16 %v3810, %v3806
      %v4047 = vpack.c.b16 %v3815, %v3811
      %v4048 = vpack.c.b16 %v3816, %v3812
      %v4049 = vpack.c.b16 %v3817, %v3813
      %v4050 = vpack.c.b16 %v3818, %v3814
      %v4051 = vpack.c.b16 %v3823, %v3819
      %v4052 = vpack.c.b16 %v3824, %v3820
      %v4053 = vpack.c.b16 %v3825, %v3821
      %v4054 = vpack.c.b16 %v3826, %v3822
      %v4055 = vpack.c.b16 %v3831, %v3827
      %v4056 = vpack.c.b16 %v3832, %v3828
      %v4057 = vpack.c.b16 %v3833, %v3829
      %v4058 = vpack.c.b16 %v3834, %v3830
      %v4059 = vpack.c.b16 %v3839, %v3835
      %v4060 = vpack.c.b16 %v3840, %v3836
      %v4061 = vpack.c.b16 %v3841, %v3837
      %v4062 = vpack.c.b16 %v3842, %v3838
      %v4063 = vpack.c.b16 %v3847, %v3843
      %v4064 = vpack.c.b16 %v3848, %v3844
      %v4065 = vpack.c.b16 %v3849, %v3845
      %v4066 = vpack.c.b16 %v3850, %v3846
      %v4067 = vpack.c.b16 %v3855, %v3851
      %v4068 = vpack.c.b16 %v3856, %v3852
      %v4069 = vpack.c.b16 %v3857, %v3853
      %v4070 = vpack.c.b16 %v3858, %v3854
      %v4071 = vpack.c.b16 %v3863, %v3859
      %v4072 = vpack.c.b16 %v3864, %v3860
      %v4073 = vpack.c.b16 %v3865, %v3861
      %v4074 = vpack.c.b16 %v3866, %v3862
      %v4075 = vpack.c.b16 %v3871, %v3867
      %v4076 = vpack.c.b16 %v3872, %v3868
      %v4077 = vpack.c.b16 %v3873, %v3869
      %v4078 = vpack.c.b16 %v3874, %v3870
      %v4079 = vpack.c.b16 %v3879, %v3875
      %v4080 = vpack.c.b16 %v3880, %v3876
      %v4081 = vpack.c.b16 %v3881, %v3877
      %v4082 = vpack.c.b16 %v3882, %v3878
      %v4083 = vpack.c.b16 %v3887, %v3883
      %v4084 = vpack.c.b16 %v3888, %v3884
      %v4085 = vpack.c.b16 %v3889, %v3885
      %v4086 = vpack.c.b16 %v3890, %v3886
      %v4087 = vpack.c.b16 %v3895, %v3891
      %v4088 = vpack.c.b16 %v3896, %v3892
      %v4089 = vpack.c.b16 %v3897, %v3893
      %v4090 = vpack.c.b16 %v3898, %v3894
      %v4091 = vpack.c.b16 %v3903, %v3899
      %v4092 = vpack.c.b16 %v3904, %v3900
      %v4093 = vpack.c.b16 %v3905, %v3901
      %v4094 = vpack.c.b16 %v3906, %v3902
      %v4095 = vpack.c.b16 %v3911, %v3907
      %v4096 = vpack.c.b16 %v3912, %v3908
      %v4097 = vpack.c.b16 %v3913, %v3909
      %v4098 = vpack.c.b16 %v3914, %v3910
      %v4099 = vpack.c.b16 %v3919, %v3915
      %v4100 = vpack.c.b16 %v3920, %v3916
      %v4101 = vpack.c.b16 %v3921, %v3917
      %v4102 = vpack.c.b16 %v3922, %v3918
      %v4103 = vpack.c.b16 %v3927, %v3923
      %v4104 = vpack.c.b16 %v3928, %v3924
      %v4105 = vpack.c.b16 %v3929, %v3925
      %v4106 = vpack.c.b16 %v3930, %v3926
      %v4107 = vpack.c.b16 %v3935, %v3931
      %v4108 = vpack.c.b16 %v3936, %v3932
      %v4109 = vpack.c.b16 %v3937, %v3933
      %v4110 = vpack.c.b16 %v3938, %v3934
      %v4111 = vpack.c.b16 %v3943, %v3939
      %v4112 = vpack.c.b16 %v3944, %v3940
      %v4113 = vpack.c.b16 %v3945, %v3941
      %v4114 = vpack.c.b16 %v3946, %v3942
      %v4115 = vpack.c.b16 %v3951, %v3947
      %v4116 = vpack.c.b16 %v3952, %v3948
      %v4117 = vpack.c.b16 %v3953, %v3949
      %v4118 = vpack.c.b16 %v3954, %v3950
      %v4119 = vpack.c.b16 %v3959, %v3955
      %v4120 = vpack.c.b16 %v3960, %v3956
      %v4121 = vpack.c.b16 %v3961, %v3957
      %v4122 = vpack.c.b16 %v3962, %v3958
      %v4123 = vpack.c.b16 %v3967, %v3963
      %v4124 = vpack.c.b16 %v3968, %v3964
      %v4125 = vpack.c.b16 %v3969, %v3965
      %v4126 = vpack.c.b16 %v3970, %v3966
      %v4127 = vpack.c.b16 %v3975, %v3971
      %v4128 = vpack.c.b16 %v3976, %v3972
      %v4129 = vpack.c.b16 %v3977, %v3973
      %v4130 = vpack.c.b16 %v3978, %v3974
      %v4131 = vpack.c.b16 %v3983, %v3979
      %v4132 = vpack.c.b16 %v3984, %v3980
      %v4133 = vpack.c.b16 %v3985, %v3981
      %v4134 = vpack.c.b16 %v3986, %v3982
      %v4135 = vpack.c.b16 %v3991, %v3987
      %v4136 = vpack.c.b16 %v3992, %v3988
      %v4137 = vpack.c.b16 %v3993, %v3989
      %v4138 = vpack.c.b16 %v3994, %v3990
      %v4139 = vpack.c.b16 %v3999, %v3995
      %v4140 = vpack.c.b16 %v4000, %v3996
      %v4141 = vpack.c.b16 %v4001, %v3997
      %v4142 = vpack.c.b16 %v4002, %v3998
      %v4143 = vpack.c.b16 %v4007, %v4003
      %v4144 = vpack.c.b16 %v4008, %v4004
      %v4145 = vpack.c.b16 %v4009, %v4005
      %v4146 = vpack.c.b16 %v4010, %v4006
      %v4147 = vpack.c.b16 %v4015, %v4011
      %v4148 = vpack.c.b16 %v4016, %v4012
      %v4149 = vpack.c.b16 %v4017, %v4013
      %v4150 = vpack.c.b16 %v4018, %v4014
      %v4151 = vpack.c.b16 %v4023, %v4019
      %v4152 = vpack.c.b16 %v4024, %v4020
      %v4153 = vpack.c.b16 %v4025, %v4021
      %v4154 = vpack.c.b16 %v4026, %v4022
      %4283 = vmatpush.bf16.msra.mxu0 %v4055
      %4284 = vmatpush.bf16.msra.mxu0 %v4051
      %4285 = vmatpush.bf16.msra.mxu0 %v4047
      %4286 = vmatpush.bf16.msra.mxu0 %v4043
      %4287 = vmatpush.bf16.msra.mxu0 %v4039
      %4288 = vmatpush.bf16.msra.mxu0 %v4035
      %4289 = vmatpush.bf16.msra.mxu0 %v4031
      %4290 = vmatpush.bf16.msra.mxu0 %v4027
      %4291 = vmatmul.bf16.gmra.mxu0 %v3501
      %v4292 = vpop.f32.mrf.mxu0
      %v4293 = vadd.f32 %v3635, %v4292
      %v4294 = vpop.f32.mrf.mxu0
      %4295 = vdwg.mxu0
      %4296 = vmatpush.bf16.msra.mxu0 %v4087
      %4297 = vmatpush.bf16.msra.mxu0 %v4083
      %4298 = vmatpush.bf16.msra.mxu0 %v4079
      %4299 = vmatpush.bf16.msra.mxu0 %v4075
      %4300 = vmatpush.bf16.msra.mxu0 %v4071
      %4301 = vmatpush.bf16.msra.mxu0 %v4067
      %4302 = vmatpush.bf16.msra.mxu0 %v4063
      %4303 = vmatpush.bf16.msra.mxu0 %v4059
      %4304 = vmatmul.bf16.gmra.mxu0 %v3502
      %v4305 = vpop.f32.mrf.mxu0
      %v4306 = vadd.f32 %v4293, %v4305
      %v4307 = vpop.f32.mrf.mxu0
      %4308 = vdwg.mxu0
      %4309 = vmatpush.bf16.msra.mxu0 %v4119
      %4310 = vmatpush.bf16.msra.mxu0 %v4115
      %4311 = vmatpush.bf16.msra.mxu0 %v4111
      %4312 = vmatpush.bf16.msra.mxu0 %v4107
      %4313 = vmatpush.bf16.msra.mxu0 %v4103
      %4314 = vmatpush.bf16.msra.mxu0 %v4099
      %4315 = vmatpush.bf16.msra.mxu0 %v4095
      %4316 = vmatpush.bf16.msra.mxu0 %v4091
      %4317 = vmatmul.bf16.gmra.mxu0 %v3503
      %v4318 = vpop.f32.mrf.mxu0
      %v4319 = vadd.f32 %v4306, %v4318
      %v4320 = vpop.f32.mrf.mxu0
      %4321 = vdwg.mxu0
      %4322 = vmatpush.bf16.msra.mxu0 %v4151
      %4323 = vmatpush.bf16.msra.mxu0 %v4147
      %4324 = vmatpush.bf16.msra.mxu0 %v4143
      %4325 = vmatpush.bf16.msra.mxu0 %v4139
      %4326 = vmatpush.bf16.msra.mxu0 %v4135
      %4327 = vmatpush.bf16.msra.mxu0 %v4131
      %4328 = vmatpush.bf16.msra.mxu0 %v4127
      %4329 = vmatpush.bf16.msra.mxu0 %v4123
      %4330 = vmatmul.bf16.gmra.mxu0 %v3504
      %v4331 = vpop.f32.mrf.mxu0
      %v4332 = vadd.f32 %v4319, %v4331
      %v4333 = vpop.f32.mrf.mxu0
      %4334 = vdwg.mxu0
      %4335 = vmatpush.bf16.msra.mxu0 %v4056
      %4336 = vmatpush.bf16.msra.mxu0 %v4052
      %4337 = vmatpush.bf16.msra.mxu0 %v4048
      %4338 = vmatpush.bf16.msra.mxu0 %v4044
      %4339 = vmatpush.bf16.msra.mxu0 %v4040
      %4340 = vmatpush.bf16.msra.mxu0 %v4036
      %4341 = vmatpush.bf16.msra.mxu0 %v4032
      %4342 = vmatpush.bf16.msra.mxu0 %v4028
      %4343 = vmatmul.bf16.gmra.mxu0 %v3501
      %v4344 = vpop.f32.mrf.mxu0
      %v4345 = vadd.f32 %v3636, %v4344
      %v4346 = vpop.f32.mrf.mxu0
      %4347 = vdwg.mxu0
      %4348 = vmatpush.bf16.msra.mxu0 %v4088
      %4349 = vmatpush.bf16.msra.mxu0 %v4084
      %4350 = vmatpush.bf16.msra.mxu0 %v4080
      %4351 = vmatpush.bf16.msra.mxu0 %v4076
      %4352 = vmatpush.bf16.msra.mxu0 %v4072
      %4353 = vmatpush.bf16.msra.mxu0 %v4068
      %4354 = vmatpush.bf16.msra.mxu0 %v4064
      %4355 = vmatpush.bf16.msra.mxu0 %v4060
      %4356 = vmatmul.bf16.gmra.mxu0 %v3502
      %v4357 = vpop.f32.mrf.mxu0
      %v4358 = vadd.f32 %v4345, %v4357
      %v4359 = vpop.f32.mrf.mxu0
      %4360 = vdwg.mxu0
      %4361 = vmatpush.bf16.msra.mxu0 %v4120
      %4362 = vmatpush.bf16.msra.mxu0 %v4116
      %4363 = vmatpush.bf16.msra.mxu0 %v4112
      %4364 = vmatpush.bf16.msra.mxu0 %v4108
      %4365 = vmatpush.bf16.msra.mxu0 %v4104
      %4366 = vmatpush.bf16.msra.mxu0 %v4100
      %4367 = vmatpush.bf16.msra.mxu0 %v4096
      %4368 = vmatpush.bf16.msra.mxu0 %v4092
      %4369 = vmatmul.bf16.gmra.mxu0 %v3503
      %v4370 = vpop.f32.mrf.mxu0
      %v4371 = vadd.f32 %v4358, %v4370
      %v4372 = vpop.f32.mrf.mxu0
      %4373 = vdwg.mxu0
      %4374 = vmatpush.bf16.msra.mxu0 %v4152
      %4375 = vmatpush.bf16.msra.mxu0 %v4148
      %4376 = vmatpush.bf16.msra.mxu0 %v4144
      %4377 = vmatpush.bf16.msra.mxu0 %v4140
      %4378 = vmatpush.bf16.msra.mxu0 %v4136
      %4379 = vmatpush.bf16.msra.mxu0 %v4132
      %4380 = vmatpush.bf16.msra.mxu0 %v4128
      %4381 = vmatpush.bf16.msra.mxu0 %v4124
      %4382 = vmatmul.bf16.gmra.mxu0 %v3504
      %v4383 = vpop.f32.mrf.mxu0
      %v4384 = vadd.f32 %v4371, %v4383
      %v4385 = vpop.f32.mrf.mxu0
      %4386 = vdwg.mxu0
      %4387 = vmatpush.bf16.msra.mxu0 %v4057
      %4388 = vmatpush.bf16.msra.mxu0 %v4053
      %4389 = vmatpush.bf16.msra.mxu0 %v4049
      %4390 = vmatpush.bf16.msra.mxu0 %v4045
      %4391 = vmatpush.bf16.msra.mxu0 %v4041
      %4392 = vmatpush.bf16.msra.mxu0 %v4037
      %4393 = vmatpush.bf16.msra.mxu0 %v4033
      %4394 = vmatpush.bf16.msra.mxu0 %v4029
      %4395 = vmatmul.bf16.gmra.mxu0 %v3501
      %v4396 = vpop.f32.mrf.mxu0
      %v4397 = vadd.f32 %v3637, %v4396
      %v4398 = vpop.f32.mrf.mxu0
      %4399 = vdwg.mxu0
      %4400 = vmatpush.bf16.msra.mxu0 %v4089
      %4401 = vmatpush.bf16.msra.mxu0 %v4085
      %4402 = vmatpush.bf16.msra.mxu0 %v4081
      %4403 = vmatpush.bf16.msra.mxu0 %v4077
      %4404 = vmatpush.bf16.msra.mxu0 %v4073
      %4405 = vmatpush.bf16.msra.mxu0 %v4069
      %4406 = vmatpush.bf16.msra.mxu0 %v4065
      %4407 = vmatpush.bf16.msra.mxu0 %v4061
      %4408 = vmatmul.bf16.gmra.mxu0 %v3502
      %v4409 = vpop.f32.mrf.mxu0
      %v4410 = vadd.f32 %v4397, %v4409
      %v4411 = vpop.f32.mrf.mxu0
      %4412 = vdwg.mxu0
      %4413 = vmatpush.bf16.msra.mxu0 %v4121
      %4414 = vmatpush.bf16.msra.mxu0 %v4117
      %4415 = vmatpush.bf16.msra.mxu0 %v4113
      %4416 = vmatpush.bf16.msra.mxu0 %v4109
      %4417 = vmatpush.bf16.msra.mxu0 %v4105
      %4418 = vmatpush.bf16.msra.mxu0 %v4101
      %4419 = vmatpush.bf16.msra.mxu0 %v4097
      %4420 = vmatpush.bf16.msra.mxu0 %v4093
      %4421 = vmatmul.bf16.gmra.mxu0 %v3503
      %v4422 = vpop.f32.mrf.mxu0
      %v4423 = vadd.f32 %v4410, %v4422
      %v4424 = vpop.f32.mrf.mxu0
      %4425 = vdwg.mxu0
      %4426 = vmatpush.bf16.msra.mxu0 %v4153
      %4427 = vmatpush.bf16.msra.mxu0 %v4149
      %4428 = vmatpush.bf16.msra.mxu0 %v4145
      %4429 = vmatpush.bf16.msra.mxu0 %v4141
      %4430 = vmatpush.bf16.msra.mxu0 %v4137
      %4431 = vmatpush.bf16.msra.mxu0 %v4133
      %4432 = vmatpush.bf16.msra.mxu0 %v4129
      %4433 = vmatpush.bf16.msra.mxu0 %v4125
      %4434 = vmatmul.bf16.gmra.mxu0 %v3504
      %v4435 = vpop.f32.mrf.mxu0
      %v4436 = vadd.f32 %v4423, %v4435
      %v4437 = vpop.f32.mrf.mxu0
      %4438 = vdwg.mxu0
      %4439 = vmatpush.bf16.msra.mxu0 %v4058
      %4440 = vmatpush.bf16.msra.mxu0 %v4054
      %4441 = vmatpush.bf16.msra.mxu0 %v4050
      %4442 = vmatpush.bf16.msra.mxu0 %v4046
      %4443 = vmatpush.bf16.msra.mxu0 %v4042
      %4444 = vmatpush.bf16.msra.mxu0 %v4038
      %4445 = vmatpush.bf16.msra.mxu0 %v4034
      %4446 = vmatpush.bf16.msra.mxu0 %v4030
      %4447 = vmatmul.bf16.gmra.mxu0 %v3501
      %v4448 = vpop.f32.mrf.mxu0
      %v4449 = vadd.f32 %v3638, %v4448
      %v4450 = vpop.f32.mrf.mxu0
      %4451 = vdwg.mxu0
      %4452 = vmatpush.bf16.msra.mxu0 %v4090
      %4453 = vmatpush.bf16.msra.mxu0 %v4086
      %4454 = vmatpush.bf16.msra.mxu0 %v4082
      %4455 = vmatpush.bf16.msra.mxu0 %v4078
      %4456 = vmatpush.bf16.msra.mxu0 %v4074
      %4457 = vmatpush.bf16.msra.mxu0 %v4070
      %4458 = vmatpush.bf16.msra.mxu0 %v4066
      %4459 = vmatpush.bf16.msra.mxu0 %v4062
      %4460 = vmatmul.bf16.gmra.mxu0 %v3502
      %v4461 = vpop.f32.mrf.mxu0
      %v4462 = vadd.f32 %v4449, %v4461
      %v4463 = vpop.f32.mrf.mxu0
      %4464 = vdwg.mxu0
      %4465 = vmatpush.bf16.msra.mxu0 %v4122
      %4466 = vmatpush.bf16.msra.mxu0 %v4118
      %4467 = vmatpush.bf16.msra.mxu0 %v4114
      %4468 = vmatpush.bf16.msra.mxu0 %v4110
      %4469 = vmatpush.bf16.msra.mxu0 %v4106
      %4470 = vmatpush.bf16.msra.mxu0 %v4102
      %4471 = vmatpush.bf16.msra.mxu0 %v4098
      %4472 = vmatpush.bf16.msra.mxu0 %v4094
      %4473 = vmatmul.bf16.gmra.mxu0 %v3503
      %v4474 = vpop.f32.mrf.mxu0
      %v4475 = vadd.f32 %v4462, %v4474
      %v4476 = vpop.f32.mrf.mxu0
      %4477 = vdwg.mxu0
      %4478 = vmatpush.bf16.msra.mxu0 %v4154
      %4479 = vmatpush.bf16.msra.mxu0 %v4150
      %4480 = vmatpush.bf16.msra.mxu0 %v4146
      %4481 = vmatpush.bf16.msra.mxu0 %v4142
      %4482 = vmatpush.bf16.msra.mxu0 %v4138
      %4483 = vmatpush.bf16.msra.mxu0 %v4134
      %4484 = vmatpush.bf16.msra.mxu0 %v4130
      %4485 = vmatpush.bf16.msra.mxu0 %v4126
      %4486 = vmatmul.bf16.gmra.mxu0 %v3504
      %v4487 = vpop.f32.mrf.mxu0
      %v4488 = vadd.f32 %v4475, %v4487
      %v4489 = vpop.f32.mrf.mxu0
      %4490 = vdwg.mxu0
      %v4491 = vmul.f32 %v4332, 0.5
      %v4492 = vmul.f32 %v4384, 0.5
      %v4493 = vmul.f32 %v4436, 0.5
      %v4494 = vmul.f32 %v4488, 0.5
      %v4495 = vmul.f32 %v4332, 0.70710677
      %v4496 = vmul.f32 %v4384, 0.70710677
      %v4497 = vmul.f32 %v4436, 0.70710677
      %v4498 = vmul.f32 %v4488, 0.70710677
      %v4499 = vmul.f32 %v4495, %v4495
      %v4500 = vmin.f32 16.0, %v4499
      %v4501 = vmul.f32 %v4500, 2.1237322e-06
      %v4502 = vadd.f32 %v4501, 0.00028619796
      %v4503 = vmul.f32 %v4500, %v4502
      %v4504 = vadd.f32 %v4503, 0.0036580483
      %v4505 = vmul.f32 %v4500, %v4504
      %v4506 = vadd.f32 %v4505, 0.05243302
      %v4507 = vmul.f32 %v4500, %v4506
      %v4508 = vadd.f32 %v4507, 0.18741608
      %v4509 = vmul.f32 %v4500, %v4508
      %v4510 = vadd.f32 %v4509, 1.1283791
      %v4511 = vmul.f32 %v4495, %v4510
      %v4512 = vmul.f32 %v4500, 3.8918573e-05
      %v4513 = vadd.f32 %v4512, 0.001143296
      %v4514 = vmul.f32 %v4500, %v4513
      %v4515 = vadd.f32 %v4514, 0.014752088
      %v4516 = vmul.f32 %v4500, %v4515
      %v4517 = vadd.f32 %v4516, 0.112945676
      %v4518 = vmul.f32 %v4500, %v4517
      %v4519 = vadd.f32 %v4518, 0.4994258
      %v4520 = vmul.f32 %v4500, %v4519
      %v4521 = vadd.f32 %v4520, 1.0
      %v4522 = vrcp.pop %v4521
      %v4523 = vmul.f32 %v4521, %v4522
      %v4524 = vsub.f32 1.0, %v4523
      %v4525 = vmul.f32 %v4522, %v4524
      %v4526 = vadd.f32 %v4522, %v4525
      %vm4527 = vweird.f32 %v4521
      %vm4528 = vweird.f32 %v4522
      %vm4529 = vmor %vm4527, %vm4528
      %v4530 = vsel %vm4529, %v4522, %v4526
      %v4531 = vand.u32 2147483647, %v4521
      %vm4532 = vcmp.eq.f32.partialorder %v4531, 8.507059e+37
      %v4533 = vand.u32 %v4521, 2147483648
      %v4534 = vor.u32 1.1754944e-38, %v4533
      %v4535 = vsel %vm4532, %v4534, %v4530
      %v4536 = vmul.f32 %v4511, %v4535
      %v4537 = vmin.f32 %v4536, 1.0
      %v4538 = vmax.f32 %v4537, -1.0
      %v4539 = vmul.f32 %v4496, %v4496
      %v4540 = vmin.f32 16.0, %v4539
      %v4541 = vmul.f32 %v4540, 2.1237322e-06
      %v4542 = vadd.f32 %v4541, 0.00028619796
      %v4543 = vmul.f32 %v4540, %v4542
      %v4544 = vadd.f32 %v4543, 0.0036580483
      %v4545 = vmul.f32 %v4540, %v4544
      %v4546 = vadd.f32 %v4545, 0.05243302
      %v4547 = vmul.f32 %v4540, %v4546
      %v4548 = vadd.f32 %v4547, 0.18741608
      %v4549 = vmul.f32 %v4540, %v4548
      %v4550 = vadd.f32 %v4549, 1.1283791
      %v4551 = vmul.f32 %v4496, %v4550
      %v4552 = vmul.f32 %v4540, 3.8918573e-05
      %v4553 = vadd.f32 %v4552, 0.001143296
      %v4554 = vmul.f32 %v4540, %v4553
      %v4555 = vadd.f32 %v4554, 0.014752088
      %v4556 = vmul.f32 %v4540, %v4555
      %v4557 = vadd.f32 %v4556, 0.112945676
      %v4558 = vmul.f32 %v4540, %v4557
      %v4559 = vadd.f32 %v4558, 0.4994258
      %v4560 = vmul.f32 %v4540, %v4559
      %v4561 = vadd.f32 %v4560, 1.0
      %v4562 = vrcp.pop %v4561
      %v4563 = vmul.f32 %v4561, %v4562
      %v4564 = vsub.f32 1.0, %v4563
      %v4565 = vmul.f32 %v4562, %v4564
      %v4566 = vadd.f32 %v4562, %v4565
      %vm4567 = vweird.f32 %v4561
      %vm4568 = vweird.f32 %v4562
      %vm4569 = vmor %vm4567, %vm4568
      %v4570 = vsel %vm4569, %v4562, %v4566
      %v4571 = vand.u32 2147483647, %v4561
      %vm4572 = vcmp.eq.f32.partialorder %v4571, 8.507059e+37
      %v4573 = vand.u32 %v4561, 2147483648
      %v4574 = vor.u32 1.1754944e-38, %v4573
      %v4575 = vsel %vm4572, %v4574, %v4570
      %v4576 = vmul.f32 %v4551, %v4575
      %v4577 = vmin.f32 %v4576, 1.0
      %v4578 = vmax.f32 %v4577, -1.0
      %v4579 = vmul.f32 %v4497, %v4497
      %v4580 = vmin.f32 16.0, %v4579
      %v4581 = vmul.f32 %v4580, 2.1237322e-06
      %v4582 = vadd.f32 %v4581, 0.00028619796
      %v4583 = vmul.f32 %v4580, %v4582
      %v4584 = vadd.f32 %v4583, 0.0036580483
      %v4585 = vmul.f32 %v4580, %v4584
      %v4586 = vadd.f32 %v4585, 0.05243302
      %v4587 = vmul.f32 %v4580, %v4586
      %v4588 = vadd.f32 %v4587, 0.18741608
      %v4589 = vmul.f32 %v4580, %v4588
      %v4590 = vadd.f32 %v4589, 1.1283791
      %v4591 = vmul.f32 %v4497, %v4590
      %v4592 = vmul.f32 %v4580, 3.8918573e-05
      %v4593 = vadd.f32 %v4592, 0.001143296
      %v4594 = vmul.f32 %v4580, %v4593
      %v4595 = vadd.f32 %v4594, 0.014752088
      %v4596 = vmul.f32 %v4580, %v4595
      %v4597 = vadd.f32 %v4596, 0.112945676
      %v4598 = vmul.f32 %v4580, %v4597
      %v4599 = vadd.f32 %v4598, 0.4994258
      %v4600 = vmul.f32 %v4580, %v4599
      %v4601 = vadd.f32 %v4600, 1.0
      %v4602 = vrcp.pop %v4601
      %v4603 = vmul.f32 %v4601, %v4602
      %v4604 = vsub.f32 1.0, %v4603
      %v4605 = vmul.f32 %v4602, %v4604
      %v4606 = vadd.f32 %v4602, %v4605
      %vm4607 = vweird.f32 %v4601
      %vm4608 = vweird.f32 %v4602
      %vm4609 = vmor %vm4607, %vm4608
      %v4610 = vsel %vm4609, %v4602, %v4606
      %v4611 = vand.u32 2147483647, %v4601
      %vm4612 = vcmp.eq.f32.partialorder %v4611, 8.507059e+37
      %v4613 = vand.u32 %v4601, 2147483648
      %v4614 = vor.u32 1.1754944e-38, %v4613
      %v4615 = vsel %vm4612, %v4614, %v4610
      %v4616 = vmul.f32 %v4591, %v4615
      %v4617 = vmin.f32 %v4616, 1.0
      %v4618 = vmax.f32 %v4617, -1.0
      %v4619 = vmul.f32 %v4498, %v4498
      %v4620 = vmin.f32 16.0, %v4619
      %v4621 = vmul.f32 %v4620, 2.1237322e-06
      %v4622 = vadd.f32 %v4621, 0.00028619796
      %v4623 = vmul.f32 %v4620, %v4622
      %v4624 = vadd.f32 %v4623, 0.0036580483
      %v4625 = vmul.f32 %v4620, %v4624
      %v4626 = vadd.f32 %v4625, 0.05243302
      %v4627 = vmul.f32 %v4620, %v4626
      %v4628 = vadd.f32 %v4627, 0.18741608
      %v4629 = vmul.f32 %v4620, %v4628
      %v4630 = vadd.f32 %v4629, 1.1283791
      %v4631 = vmul.f32 %v4498, %v4630
      %v4632 = vmul.f32 %v4620, 3.8918573e-05
      %v4633 = vadd.f32 %v4632, 0.001143296
      %v4634 = vmul.f32 %v4620, %v4633
      %v4635 = vadd.f32 %v4634, 0.014752088
      %v4636 = vmul.f32 %v4620, %v4635
      %v4637 = vadd.f32 %v4636, 0.112945676
      %v4638 = vmul.f32 %v4620, %v4637
      %v4639 = vadd.f32 %v4638, 0.4994258
      %v4640 = vmul.f32 %v4620, %v4639
      %v4641 = vadd.f32 %v4640, 1.0
      %v4642 = vrcp.pop %v4641
      %v4643 = vmul.f32 %v4641, %v4642
      %v4644 = vsub.f32 1.0, %v4643
      %v4645 = vmul.f32 %v4642, %v4644
      %v4646 = vadd.f32 %v4642, %v4645
      %vm4647 = vweird.f32 %v4641
      %vm4648 = vweird.f32 %v4642
      %vm4649 = vmor %vm4647, %vm4648
      %v4650 = vsel %vm4649, %v4642, %v4646
      %v4651 = vand.u32 2147483647, %v4641
      %vm4652 = vcmp.eq.f32.partialorder %v4651, 8.507059e+37
      %v4653 = vand.u32 %v4641, 2147483648
      %v4654 = vor.u32 1.1754944e-38, %v4653
      %v4655 = vsel %vm4652, %v4654, %v4650
      %v4656 = vmul.f32 %v4631, %v4655
      %v4657 = vmin.f32 %v4656, 1.0
      %v4658 = vmax.f32 %v4657, -1.0
      %v4659 = vadd.f32 %v4538, 1.0
      %v4660 = vadd.f32 %v4578, 1.0
      %v4661 = vadd.f32 %v4618, 1.0
      %v4662 = vadd.f32 %v4658, 1.0
      %v4663 = vmul.f32 %v4491, %v4659
      %v4664 = vmul.f32 %v4492, %v4660
      %v4665 = vmul.f32 %v4493, %v4661
      %v4666 = vmul.f32 %v4494, %v4662
      %v4667 = vpack.c.bf16 %v4663, %v4663
      %v4668 = vpack.c.bf16 %v4664, %v4664
      %v4669 = vpack.c.bf16 %v4665, %v4665
      %v4670 = vpack.c.bf16 %v4666, %v4666
      %v4671 = vld [vmem:[#allocation14] sm:$0xff]
      %v4672 = vld [vmem:[#allocation14 + $0x8] sm:$0xff]
      %v4673 = vld [vmem:[#allocation14 + $0x10] sm:$0xff]
      %v4674 = vld [vmem:[#allocation14 + $0x18] sm:$0xff]
      %v4675 = vld [vmem:[#allocation14 + $0x20] sm:$0xff]
      %v4676 = vld [vmem:[#allocation14 + $0x28] sm:$0xff]
      %v4677 = vld [vmem:[#allocation14 + $0x30] sm:$0xff]
      %v4678 = vld [vmem:[#allocation14 + $0x38] sm:$0xff]
      %v4679 = vld [vmem:[#allocation14 + $0x40] sm:$0xff]
      %v4680 = vld [vmem:[#allocation14 + $0x48] sm:$0xff]
      %v4681 = vld [vmem:[#allocation14 + $0x50] sm:$0xff]
      %v4682 = vld [vmem:[#allocation14 + $0x58] sm:$0xff]
      %v4683 = vld [vmem:[#allocation14 + $0x60] sm:$0xff]
      %v4684 = vld [vmem:[#allocation14 + $0x68] sm:$0xff]
      %v4685 = vld [vmem:[#allocation14 + $0x70] sm:$0xff]
      %v4686 = vld [vmem:[#allocation14 + $0x78] sm:$0xff]
      %v4687 = vld [vmem:[#allocation14 + $0x80] sm:$0xff]
      %v4688 = vld [vmem:[#allocation14 + $0x88] sm:$0xff]
      %v4689 = vld [vmem:[#allocation14 + $0x90] sm:$0xff]
      %v4690 = vld [vmem:[#allocation14 + $0x98] sm:$0xff]
      %v4691 = vld [vmem:[#allocation14 + $0xa0] sm:$0xff]
      %v4692 = vld [vmem:[#allocation14 + $0xa8] sm:$0xff]
      %v4693 = vld [vmem:[#allocation14 + $0xb0] sm:$0xff]
      %v4694 = vld [vmem:[#allocation14 + $0xb8] sm:$0xff]
      %v4695 = vld [vmem:[#allocation14 + $0xc0] sm:$0xff]
      %v4696 = vld [vmem:[#allocation14 + $0xc8] sm:$0xff]
      %v4697 = vld [vmem:[#allocation14 + $0xd0] sm:$0xff]
      %v4698 = vld [vmem:[#allocation14 + $0xd8] sm:$0xff]
      %v4699 = vld [vmem:[#allocation14 + $0xe0] sm:$0xff]
      %v4700 = vld [vmem:[#allocation14 + $0xe8] sm:$0xff]
      %v4701 = vld [vmem:[#allocation14 + $0xf0] sm:$0xff]
      %v4702 = vld [vmem:[#allocation14 + $0xf8] sm:$0xff]
      %v4703 = vld [vmem:[#allocation14 + $0x100] sm:$0xff]
      %v4704 = vld [vmem:[#allocation14 + $0x108] sm:$0xff]
      %v4705 = vld [vmem:[#allocation14 + $0x110] sm:$0xff]
      %v4706 = vld [vmem:[#allocation14 + $0x118] sm:$0xff]
      %v4707 = vld [vmem:[#allocation14 + $0x120] sm:$0xff]
      %v4708 = vld [vmem:[#allocation14 + $0x128] sm:$0xff]
      %v4709 = vld [vmem:[#allocation14 + $0x130] sm:$0xff]
      %v4710 = vld [vmem:[#allocation14 + $0x138] sm:$0xff]
      %v4711 = vld [vmem:[#allocation14 + $0x140] sm:$0xff]
      %v4712 = vld [vmem:[#allocation14 + $0x148] sm:$0xff]
      %v4713 = vld [vmem:[#allocation14 + $0x150] sm:$0xff]
      %v4714 = vld [vmem:[#allocation14 + $0x158] sm:$0xff]
      %v4715 = vld [vmem:[#allocation14 + $0x160] sm:$0xff]
      %v4716 = vld [vmem:[#allocation14 + $0x168] sm:$0xff]
      %v4717 = vld [vmem:[#allocation14 + $0x170] sm:$0xff]
      %v4718 = vld [vmem:[#allocation14 + $0x178] sm:$0xff]
      %v4719 = vld [vmem:[#allocation14 + $0x180] sm:$0xff]
      %v4720 = vld [vmem:[#allocation14 + $0x188] sm:$0xff]
      %v4721 = vld [vmem:[#allocation14 + $0x190] sm:$0xff]
      %v4722 = vld [vmem:[#allocation14 + $0x198] sm:$0xff]
      %v4723 = vld [vmem:[#allocation14 + $0x1a0] sm:$0xff]
      %v4724 = vld [vmem:[#allocation14 + $0x1a8] sm:$0xff]
      %v4725 = vld [vmem:[#allocation14 + $0x1b0] sm:$0xff]
      %v4726 = vld [vmem:[#allocation14 + $0x1b8] sm:$0xff]
      %v4727 = vld [vmem:[#allocation14 + $0x1c0] sm:$0xff]
      %v4728 = vld [vmem:[#allocation14 + $0x1c8] sm:$0xff]
      %v4729 = vld [vmem:[#allocation14 + $0x1d0] sm:$0xff]
      %v4730 = vld [vmem:[#allocation14 + $0x1d8] sm:$0xff]
      %v4731 = vld [vmem:[#allocation14 + $0x1e0] sm:$0xff]
      %v4732 = vld [vmem:[#allocation14 + $0x1e8] sm:$0xff]
      %v4733 = vld [vmem:[#allocation14 + $0x1f0] sm:$0xff]
      %v4734 = vld [vmem:[#allocation14 + $0x1f8] sm:$0xff]
      %v4735 = vld [vmem:[#allocation14 + $0x200] sm:$0xff]
      %v4736 = vld [vmem:[#allocation14 + $0x208] sm:$0xff]
      %v4737 = vld [vmem:[#allocation14 + $0x210] sm:$0xff]
      %v4738 = vld [vmem:[#allocation14 + $0x218] sm:$0xff]
      %v4739 = vld [vmem:[#allocation14 + $0x220] sm:$0xff]
      %v4740 = vld [vmem:[#allocation14 + $0x228] sm:$0xff]
      %v4741 = vld [vmem:[#allocation14 + $0x230] sm:$0xff]
      %v4742 = vld [vmem:[#allocation14 + $0x238] sm:$0xff]
      %v4743 = vld [vmem:[#allocation14 + $0x240] sm:$0xff]
      %v4744 = vld [vmem:[#allocation14 + $0x248] sm:$0xff]
      %v4745 = vld [vmem:[#allocation14 + $0x250] sm:$0xff]
      %v4746 = vld [vmem:[#allocation14 + $0x258] sm:$0xff]
      %v4747 = vld [vmem:[#allocation14 + $0x260] sm:$0xff]
      %v4748 = vld [vmem:[#allocation14 + $0x268] sm:$0xff]
      %v4749 = vld [vmem:[#allocation14 + $0x270] sm:$0xff]
      %v4750 = vld [vmem:[#allocation14 + $0x278] sm:$0xff]
      %v4751 = vld [vmem:[#allocation14 + $0x280] sm:$0xff]
      %v4752 = vld [vmem:[#allocation14 + $0x288] sm:$0xff]
      %v4753 = vld [vmem:[#allocation14 + $0x290] sm:$0xff]
      %v4754 = vld [vmem:[#allocation14 + $0x298] sm:$0xff]
      %v4755 = vld [vmem:[#allocation14 + $0x2a0] sm:$0xff]
      %v4756 = vld [vmem:[#allocation14 + $0x2a8] sm:$0xff]
      %v4757 = vld [vmem:[#allocation14 + $0x2b0] sm:$0xff]
      %v4758 = vld [vmem:[#allocation14 + $0x2b8] sm:$0xff]
      %v4759 = vld [vmem:[#allocation14 + $0x2c0] sm:$0xff]
      %v4760 = vld [vmem:[#allocation14 + $0x2c8] sm:$0xff]
      %v4761 = vld [vmem:[#allocation14 + $0x2d0] sm:$0xff]
      %v4762 = vld [vmem:[#allocation14 + $0x2d8] sm:$0xff]
      %v4763 = vld [vmem:[#allocation14 + $0x2e0] sm:$0xff]
      %v4764 = vld [vmem:[#allocation14 + $0x2e8] sm:$0xff]
      %v4765 = vld [vmem:[#allocation14 + $0x2f0] sm:$0xff]
      %v4766 = vld [vmem:[#allocation14 + $0x2f8] sm:$0xff]
      %v4767 = vld [vmem:[#allocation14 + $0x300] sm:$0xff]
      %v4768 = vld [vmem:[#allocation14 + $0x308] sm:$0xff]
      %v4769 = vld [vmem:[#allocation14 + $0x310] sm:$0xff]
      %v4770 = vld [vmem:[#allocation14 + $0x318] sm:$0xff]
      %v4771 = vld [vmem:[#allocation14 + $0x320] sm:$0xff]
      %v4772 = vld [vmem:[#allocation14 + $0x328] sm:$0xff]
      %v4773 = vld [vmem:[#allocation14 + $0x330] sm:$0xff]
      %v4774 = vld [vmem:[#allocation14 + $0x338] sm:$0xff]
      %v4775 = vld [vmem:[#allocation14 + $0x340] sm:$0xff]
      %v4776 = vld [vmem:[#allocation14 + $0x348] sm:$0xff]
      %v4777 = vld [vmem:[#allocation14 + $0x350] sm:$0xff]
      %v4778 = vld [vmem:[#allocation14 + $0x358] sm:$0xff]
      %v4779 = vld [vmem:[#allocation14 + $0x360] sm:$0xff]
      %v4780 = vld [vmem:[#allocation14 + $0x368] sm:$0xff]
      %v4781 = vld [vmem:[#allocation14 + $0x370] sm:$0xff]
      %v4782 = vld [vmem:[#allocation14 + $0x378] sm:$0xff]
      %v4783 = vld [vmem:[#allocation14 + $0x380] sm:$0xff]
      %v4784 = vld [vmem:[#allocation14 + $0x388] sm:$0xff]
      %v4785 = vld [vmem:[#allocation14 + $0x390] sm:$0xff]
      %v4786 = vld [vmem:[#allocation14 + $0x398] sm:$0xff]
      %v4787 = vld [vmem:[#allocation14 + $0x3a0] sm:$0xff]
      %v4788 = vld [vmem:[#allocation14 + $0x3a8] sm:$0xff]
      %v4789 = vld [vmem:[#allocation14 + $0x3b0] sm:$0xff]
      %v4790 = vld [vmem:[#allocation14 + $0x3b8] sm:$0xff]
      %v4791 = vld [vmem:[#allocation14 + $0x3c0] sm:$0xff]
      %v4792 = vld [vmem:[#allocation14 + $0x3c8] sm:$0xff]
      %v4793 = vld [vmem:[#allocation14 + $0x3d0] sm:$0xff]
      %v4794 = vld [vmem:[#allocation14 + $0x3d8] sm:$0xff]
      %v4795 = vld [vmem:[#allocation14 + $0x3e0] sm:$0xff]
      %v4796 = vld [vmem:[#allocation14 + $0x3e8] sm:$0xff]
      %v4797 = vld [vmem:[#allocation14 + $0x3f0] sm:$0xff]
      %v4798 = vld [vmem:[#allocation14 + $0x3f8] sm:$0xff]
      %v4799 = vld [vmem:[#allocation15] sm:$0xf]
      %v4801 = vperm.slane %v4799, 0
      %v4802 = vperm.slane %v4799, 1
      %v4803 = vperm.slane %v4799, 2
      %v4804 = vperm.slane %v4799, 3
      %v4937 = vunpack.c.l.b16 %v4671
      %v4938 = vunpack.c.h.b16 %v4671
      %v4939 = vunpack.c.l.b16 %v4672
      %v4940 = vunpack.c.h.b16 %v4672
      %v4941 = vunpack.c.l.b16 %v4673
      %v4942 = vunpack.c.h.b16 %v4673
      %v4943 = vunpack.c.l.b16 %v4674
      %v4944 = vunpack.c.h.b16 %v4674
      %v4945 = vunpack.c.l.b16 %v4675
      %v4946 = vunpack.c.h.b16 %v4675
      %v4947 = vunpack.c.l.b16 %v4676
      %v4948 = vunpack.c.h.b16 %v4676
      %v4949 = vunpack.c.l.b16 %v4677
      %v4950 = vunpack.c.h.b16 %v4677
      %v4951 = vunpack.c.l.b16 %v4678
      %v4952 = vunpack.c.h.b16 %v4678
      %v4953 = vunpack.c.l.b16 %v4679
      %v4954 = vunpack.c.h.b16 %v4679
      %v4955 = vunpack.c.l.b16 %v4680
      %v4956 = vunpack.c.h.b16 %v4680
      %v4957 = vunpack.c.l.b16 %v4681
      %v4958 = vunpack.c.h.b16 %v4681
      %v4959 = vunpack.c.l.b16 %v4682
      %v4960 = vunpack.c.h.b16 %v4682
      %v4961 = vunpack.c.l.b16 %v4683
      %v4962 = vunpack.c.h.b16 %v4683
      %v4963 = vunpack.c.l.b16 %v4684
      %v4964 = vunpack.c.h.b16 %v4684
      %v4965 = vunpack.c.l.b16 %v4685
      %v4966 = vunpack.c.h.b16 %v4685
      %v4967 = vunpack.c.l.b16 %v4686
      %v4968 = vunpack.c.h.b16 %v4686
      %v4969 = vunpack.c.l.b16 %v4687
      %v4970 = vunpack.c.h.b16 %v4687
      %v4971 = vunpack.c.l.b16 %v4688
      %v4972 = vunpack.c.h.b16 %v4688
      %v4973 = vunpack.c.l.b16 %v4689
      %v4974 = vunpack.c.h.b16 %v4689
      %v4975 = vunpack.c.l.b16 %v4690
      %v4976 = vunpack.c.h.b16 %v4690
      %v4977 = vunpack.c.l.b16 %v4691
      %v4978 = vunpack.c.h.b16 %v4691
      %v4979 = vunpack.c.l.b16 %v4692
      %v4980 = vunpack.c.h.b16 %v4692
      %v4981 = vunpack.c.l.b16 %v4693
      %v4982 = vunpack.c.h.b16 %v4693
      %v4983 = vunpack.c.l.b16 %v4694
      %v4984 = vunpack.c.h.b16 %v4694
      %v4985 = vunpack.c.l.b16 %v4695
      %v4986 = vunpack.c.h.b16 %v4695
      %v4987 = vunpack.c.l.b16 %v4696
      %v4988 = vunpack.c.h.b16 %v4696
      %v4989 = vunpack.c.l.b16 %v4697
      %v4990 = vunpack.c.h.b16 %v4697
      %v4991 = vunpack.c.l.b16 %v4698
      %v4992 = vunpack.c.h.b16 %v4698
      %v4993 = vunpack.c.l.b16 %v4699
      %v4994 = vunpack.c.h.b16 %v4699
      %v4995 = vunpack.c.l.b16 %v4700
      %v4996 = vunpack.c.h.b16 %v4700
      %v4997 = vunpack.c.l.b16 %v4701
      %v4998 = vunpack.c.h.b16 %v4701
      %v4999 = vunpack.c.l.b16 %v4702
      %v5000 = vunpack.c.h.b16 %v4702
      %v5001 = vunpack.c.l.b16 %v4703
      %v5002 = vunpack.c.h.b16 %v4703
      %v5003 = vunpack.c.l.b16 %v4704
      %v5004 = vunpack.c.h.b16 %v4704
      %v5005 = vunpack.c.l.b16 %v4705
      %v5006 = vunpack.c.h.b16 %v4705
      %v5007 = vunpack.c.l.b16 %v4706
      %v5008 = vunpack.c.h.b16 %v4706
      %v5009 = vunpack.c.l.b16 %v4707
      %v5010 = vunpack.c.h.b16 %v4707
      %v5011 = vunpack.c.l.b16 %v4708
      %v5012 = vunpack.c.h.b16 %v4708
      %v5013 = vunpack.c.l.b16 %v4709
      %v5014 = vunpack.c.h.b16 %v4709
      %v5015 = vunpack.c.l.b16 %v4710
      %v5016 = vunpack.c.h.b16 %v4710
      %v5017 = vunpack.c.l.b16 %v4711
      %v5018 = vunpack.c.h.b16 %v4711
      %v5019 = vunpack.c.l.b16 %v4712
      %v5020 = vunpack.c.h.b16 %v4712
      %v5021 = vunpack.c.l.b16 %v4713
      %v5022 = vunpack.c.h.b16 %v4713
      %v5023 = vunpack.c.l.b16 %v4714
      %v5024 = vunpack.c.h.b16 %v4714
      %v5025 = vunpack.c.l.b16 %v4715
      %v5026 = vunpack.c.h.b16 %v4715
      %v5027 = vunpack.c.l.b16 %v4716
      %v5028 = vunpack.c.h.b16 %v4716
      %v5029 = vunpack.c.l.b16 %v4717
      %v5030 = vunpack.c.h.b16 %v4717
      %v5031 = vunpack.c.l.b16 %v4718
      %v5032 = vunpack.c.h.b16 %v4718
      %v5033 = vunpack.c.l.b16 %v4719
      %v5034 = vunpack.c.h.b16 %v4719
      %v5035 = vunpack.c.l.b16 %v4720
      %v5036 = vunpack.c.h.b16 %v4720
      %v5037 = vunpack.c.l.b16 %v4721
      %v5038 = vunpack.c.h.b16 %v4721
      %v5039 = vunpack.c.l.b16 %v4722
      %v5040 = vunpack.c.h.b16 %v4722
      %v5041 = vunpack.c.l.b16 %v4723
      %v5042 = vunpack.c.h.b16 %v4723
      %v5043 = vunpack.c.l.b16 %v4724
      %v5044 = vunpack.c.h.b16 %v4724
      %v5045 = vunpack.c.l.b16 %v4725
      %v5046 = vunpack.c.h.b16 %v4725
      %v5047 = vunpack.c.l.b16 %v4726
      %v5048 = vunpack.c.h.b16 %v4726
      %v5049 = vunpack.c.l.b16 %v4727
      %v5050 = vunpack.c.h.b16 %v4727
      %v5051 = vunpack.c.l.b16 %v4728
      %v5052 = vunpack.c.h.b16 %v4728
      %v5053 = vunpack.c.l.b16 %v4729
      %v5054 = vunpack.c.h.b16 %v4729
      %v5055 = vunpack.c.l.b16 %v4730
      %v5056 = vunpack.c.h.b16 %v4730
      %v5057 = vunpack.c.l.b16 %v4731
      %v5058 = vunpack.c.h.b16 %v4731
      %v5059 = vunpack.c.l.b16 %v4732
      %v5060 = vunpack.c.h.b16 %v4732
      %v5061 = vunpack.c.l.b16 %v4733
      %v5062 = vunpack.c.h.b16 %v4733
      %v5063 = vunpack.c.l.b16 %v4734
      %v5064 = vunpack.c.h.b16 %v4734
      %v5065 = vunpack.c.l.b16 %v4735
      %v5066 = vunpack.c.h.b16 %v4735
      %v5067 = vunpack.c.l.b16 %v4736
      %v5068 = vunpack.c.h.b16 %v4736
      %v5069 = vunpack.c.l.b16 %v4737
      %v5070 = vunpack.c.h.b16 %v4737
      %v5071 = vunpack.c.l.b16 %v4738
      %v5072 = vunpack.c.h.b16 %v4738
      %v5073 = vunpack.c.l.b16 %v4739
      %v5074 = vunpack.c.h.b16 %v4739
      %v5075 = vunpack.c.l.b16 %v4740
      %v5076 = vunpack.c.h.b16 %v4740
      %v5077 = vunpack.c.l.b16 %v4741
      %v5078 = vunpack.c.h.b16 %v4741
      %v5079 = vunpack.c.l.b16 %v4742
      %v5080 = vunpack.c.h.b16 %v4742
      %v5081 = vunpack.c.l.b16 %v4743
      %v5082 = vunpack.c.h.b16 %v4743
      %v5083 = vunpack.c.l.b16 %v4744
      %v5084 = vunpack.c.h.b16 %v4744
      %v5085 = vunpack.c.l.b16 %v4745
      %v5086 = vunpack.c.h.b16 %v4745
      %v5087 = vunpack.c.l.b16 %v4746
      %v5088 = vunpack.c.h.b16 %v4746
      %v5089 = vunpack.c.l.b16 %v4747
      %v5090 = vunpack.c.h.b16 %v4747
      %v5091 = vunpack.c.l.b16 %v4748
      %v5092 = vunpack.c.h.b16 %v4748
      %v5093 = vunpack.c.l.b16 %v4749
      %v5094 = vunpack.c.h.b16 %v4749
      %v5095 = vunpack.c.l.b16 %v4750
      %v5096 = vunpack.c.h.b16 %v4750
      %v5097 = vunpack.c.l.b16 %v4751
      %v5098 = vunpack.c.h.b16 %v4751
      %v5099 = vunpack.c.l.b16 %v4752
      %v5100 = vunpack.c.h.b16 %v4752
      %v5101 = vunpack.c.l.b16 %v4753
      %v5102 = vunpack.c.h.b16 %v4753
      %v5103 = vunpack.c.l.b16 %v4754
      %v5104 = vunpack.c.h.b16 %v4754
      %v5105 = vunpack.c.l.b16 %v4755
      %v5106 = vunpack.c.h.b16 %v4755
      %v5107 = vunpack.c.l.b16 %v4756
      %v5108 = vunpack.c.h.b16 %v4756
      %v5109 = vunpack.c.l.b16 %v4757
      %v5110 = vunpack.c.h.b16 %v4757
      %v5111 = vunpack.c.l.b16 %v4758
      %v5112 = vunpack.c.h.b16 %v4758
      %v5113 = vunpack.c.l.b16 %v4759
      %v5114 = vunpack.c.h.b16 %v4759
      %v5115 = vunpack.c.l.b16 %v4760
      %v5116 = vunpack.c.h.b16 %v4760
      %v5117 = vunpack.c.l.b16 %v4761
      %v5118 = vunpack.c.h.b16 %v4761
      %v5119 = vunpack.c.l.b16 %v4762
      %v5120 = vunpack.c.h.b16 %v4762
      %v5121 = vunpack.c.l.b16 %v4763
      %v5122 = vunpack.c.h.b16 %v4763
      %v5123 = vunpack.c.l.b16 %v4764
      %v5124 = vunpack.c.h.b16 %v4764
      %v5125 = vunpack.c.l.b16 %v4765
      %v5126 = vunpack.c.h.b16 %v4765
      %v5127 = vunpack.c.l.b16 %v4766
      %v5128 = vunpack.c.h.b16 %v4766
      %v5129 = vunpack.c.l.b16 %v4767
      %v5130 = vunpack.c.h.b16 %v4767
      %v5131 = vunpack.c.l.b16 %v4768
      %v5132 = vunpack.c.h.b16 %v4768
      %v5133 = vunpack.c.l.b16 %v4769
      %v5134 = vunpack.c.h.b16 %v4769
      %v5135 = vunpack.c.l.b16 %v4770
      %v5136 = vunpack.c.h.b16 %v4770
      %v5137 = vunpack.c.l.b16 %v4771
      %v5138 = vunpack.c.h.b16 %v4771
      %v5139 = vunpack.c.l.b16 %v4772
      %v5140 = vunpack.c.h.b16 %v4772
      %v5141 = vunpack.c.l.b16 %v4773
      %v5142 = vunpack.c.h.b16 %v4773
      %v5143 = vunpack.c.l.b16 %v4774
      %v5144 = vunpack.c.h.b16 %v4774
      %v5145 = vunpack.c.l.b16 %v4775
      %v5146 = vunpack.c.h.b16 %v4775
      %v5147 = vunpack.c.l.b16 %v4776
      %v5148 = vunpack.c.h.b16 %v4776
      %v5149 = vunpack.c.l.b16 %v4777
      %v5150 = vunpack.c.h.b16 %v4777
      %v5151 = vunpack.c.l.b16 %v4778
      %v5152 = vunpack.c.h.b16 %v4778
      %v5153 = vunpack.c.l.b16 %v4779
      %v5154 = vunpack.c.h.b16 %v4779
      %v5155 = vunpack.c.l.b16 %v4780
      %v5156 = vunpack.c.h.b16 %v4780
      %v5157 = vunpack.c.l.b16 %v4781
      %v5158 = vunpack.c.h.b16 %v4781
      %v5159 = vunpack.c.l.b16 %v4782
      %v5160 = vunpack.c.h.b16 %v4782
      %v5161 = vunpack.c.l.b16 %v4783
      %v5162 = vunpack.c.h.b16 %v4783
      %v5163 = vunpack.c.l.b16 %v4784
      %v5164 = vunpack.c.h.b16 %v4784
      %v5165 = vunpack.c.l.b16 %v4785
      %v5166 = vunpack.c.h.b16 %v4785
      %v5167 = vunpack.c.l.b16 %v4786
      %v5168 = vunpack.c.h.b16 %v4786
      %v5169 = vunpack.c.l.b16 %v4787
      %v5170 = vunpack.c.h.b16 %v4787
      %v5171 = vunpack.c.l.b16 %v4788
      %v5172 = vunpack.c.h.b16 %v4788
      %v5173 = vunpack.c.l.b16 %v4789
      %v5174 = vunpack.c.h.b16 %v4789
      %v5175 = vunpack.c.l.b16 %v4790
      %v5176 = vunpack.c.h.b16 %v4790
      %v5177 = vunpack.c.l.b16 %v4791
      %v5178 = vunpack.c.h.b16 %v4791
      %v5179 = vunpack.c.l.b16 %v4792
      %v5180 = vunpack.c.h.b16 %v4792
      %v5181 = vunpack.c.l.b16 %v4793
      %v5182 = vunpack.c.h.b16 %v4793
      %v5183 = vunpack.c.l.b16 %v4794
      %v5184 = vunpack.c.h.b16 %v4794
      %v5185 = vunpack.c.l.b16 %v4795
      %v5186 = vunpack.c.h.b16 %v4795
      %v5187 = vunpack.c.l.b16 %v4796
      %v5188 = vunpack.c.h.b16 %v4796
      %v5189 = vunpack.c.l.b16 %v4797
      %v5190 = vunpack.c.h.b16 %v4797
      %v5191 = vunpack.c.l.b16 %v4798
      %v5192 = vunpack.c.h.b16 %v4798
      %v5193 = vpack.c.b16 %v4941, %v4937
      %v5194 = vpack.c.b16 %v4942, %v4938
      %v5195 = vpack.c.b16 %v4943, %v4939
      %v5196 = vpack.c.b16 %v4944, %v4940
      %v5197 = vpack.c.b16 %v4949, %v4945
      %v5198 = vpack.c.b16 %v4950, %v4946
      %v5199 = vpack.c.b16 %v4951, %v4947
      %v5200 = vpack.c.b16 %v4952, %v4948
      %v5201 = vpack.c.b16 %v4957, %v4953
      %v5202 = vpack.c.b16 %v4958, %v4954
      %v5203 = vpack.c.b16 %v4959, %v4955
      %v5204 = vpack.c.b16 %v4960, %v4956
      %v5205 = vpack.c.b16 %v4965, %v4961
      %v5206 = vpack.c.b16 %v4966, %v4962
      %v5207 = vpack.c.b16 %v4967, %v4963
      %v5208 = vpack.c.b16 %v4968, %v4964
      %v5209 = vpack.c.b16 %v4973, %v4969
      %v5210 = vpack.c.b16 %v4974, %v4970
      %v5211 = vpack.c.b16 %v4975, %v4971
      %v5212 = vpack.c.b16 %v4976, %v4972
      %v5213 = vpack.c.b16 %v4981, %v4977
      %v5214 = vpack.c.b16 %v4982, %v4978
      %v5215 = vpack.c.b16 %v4983, %v4979
      %v5216 = vpack.c.b16 %v4984, %v4980
      %v5217 = vpack.c.b16 %v4989, %v4985
      %v5218 = vpack.c.b16 %v4990, %v4986
      %v5219 = vpack.c.b16 %v4991, %v4987
      %v5220 = vpack.c.b16 %v4992, %v4988
      %v5221 = vpack.c.b16 %v4997, %v4993
      %v5222 = vpack.c.b16 %v4998, %v4994
      %v5223 = vpack.c.b16 %v4999, %v4995
      %v5224 = vpack.c.b16 %v5000, %v4996
      %v5225 = vpack.c.b16 %v5005, %v5001
      %v5226 = vpack.c.b16 %v5006, %v5002
      %v5227 = vpack.c.b16 %v5007, %v5003
      %v5228 = vpack.c.b16 %v5008, %v5004
      %v5229 = vpack.c.b16 %v5013, %v5009
      %v5230 = vpack.c.b16 %v5014, %v5010
      %v5231 = vpack.c.b16 %v5015, %v5011
      %v5232 = vpack.c.b16 %v5016, %v5012
      %v5233 = vpack.c.b16 %v5021, %v5017
      %v5234 = vpack.c.b16 %v5022, %v5018
      %v5235 = vpack.c.b16 %v5023, %v5019
      %v5236 = vpack.c.b16 %v5024, %v5020
      %v5237 = vpack.c.b16 %v5029, %v5025
      %v5238 = vpack.c.b16 %v5030, %v5026
      %v5239 = vpack.c.b16 %v5031, %v5027
      %v5240 = vpack.c.b16 %v5032, %v5028
      %v5241 = vpack.c.b16 %v5037, %v5033
      %v5242 = vpack.c.b16 %v5038, %v5034
      %v5243 = vpack.c.b16 %v5039, %v5035
      %v5244 = vpack.c.b16 %v5040, %v5036
      %v5245 = vpack.c.b16 %v5045, %v5041
      %v5246 = vpack.c.b16 %v5046, %v5042
      %v5247 = vpack.c.b16 %v5047, %v5043
      %v5248 = vpack.c.b16 %v5048, %v5044
      %v5249 = vpack.c.b16 %v5053, %v5049
      %v5250 = vpack.c.b16 %v5054, %v5050
      %v5251 = vpack.c.b16 %v5055, %v5051
      %v5252 = vpack.c.b16 %v5056, %v5052
      %v5253 = vpack.c.b16 %v5061, %v5057
      %v5254 = vpack.c.b16 %v5062, %v5058
      %v5255 = vpack.c.b16 %v5063, %v5059
      %v5256 = vpack.c.b16 %v5064, %v5060
      %v5257 = vpack.c.b16 %v5069, %v5065
      %v5258 = vpack.c.b16 %v5070, %v5066
      %v5259 = vpack.c.b16 %v5071, %v5067
      %v5260 = vpack.c.b16 %v5072, %v5068
      %v5261 = vpack.c.b16 %v5077, %v5073
      %v5262 = vpack.c.b16 %v5078, %v5074
      %v5263 = vpack.c.b16 %v5079, %v5075
      %v5264 = vpack.c.b16 %v5080, %v5076
      %v5265 = vpack.c.b16 %v5085, %v5081
      %v5266 = vpack.c.b16 %v5086, %v5082
      %v5267 = vpack.c.b16 %v5087, %v5083
      %v5268 = vpack.c.b16 %v5088, %v5084
      %v5269 = vpack.c.b16 %v5093, %v5089
      %v5270 = vpack.c.b16 %v5094, %v5090
      %v5271 = vpack.c.b16 %v5095, %v5091
      %v5272 = vpack.c.b16 %v5096, %v5092
      %v5273 = vpack.c.b16 %v5101, %v5097
      %v5274 = vpack.c.b16 %v5102, %v5098
      %v5275 = vpack.c.b16 %v5103, %v5099
      %v5276 = vpack.c.b16 %v5104, %v5100
      %v5277 = vpack.c.b16 %v5109, %v5105
      %v5278 = vpack.c.b16 %v5110, %v5106
      %v5279 = vpack.c.b16 %v5111, %v5107
      %v5280 = vpack.c.b16 %v5112, %v5108
      %v5281 = vpack.c.b16 %v5117, %v5113
      %v5282 = vpack.c.b16 %v5118, %v5114
      %v5283 = vpack.c.b16 %v5119, %v5115
      %v5284 = vpack.c.b16 %v5120, %v5116
      %v5285 = vpack.c.b16 %v5125, %v5121
      %v5286 = vpack.c.b16 %v5126, %v5122
      %v5287 = vpack.c.b16 %v5127, %v5123
      %v5288 = vpack.c.b16 %v5128, %v5124
      %v5289 = vpack.c.b16 %v5133, %v5129
      %v5290 = vpack.c.b16 %v5134, %v5130
      %v5291 = vpack.c.b16 %v5135, %v5131
      %v5292 = vpack.c.b16 %v5136, %v5132
      %v5293 = vpack.c.b16 %v5141, %v5137
      %v5294 = vpack.c.b16 %v5142, %v5138
      %v5295 = vpack.c.b16 %v5143, %v5139
      %v5296 = vpack.c.b16 %v5144, %v5140
      %v5297 = vpack.c.b16 %v5149, %v5145
      %v5298 = vpack.c.b16 %v5150, %v5146
      %v5299 = vpack.c.b16 %v5151, %v5147
      %v5300 = vpack.c.b16 %v5152, %v5148
      %v5301 = vpack.c.b16 %v5157, %v5153
      %v5302 = vpack.c.b16 %v5158, %v5154
      %v5303 = vpack.c.b16 %v5159, %v5155
      %v5304 = vpack.c.b16 %v5160, %v5156
      %v5305 = vpack.c.b16 %v5165, %v5161
      %v5306 = vpack.c.b16 %v5166, %v5162
      %v5307 = vpack.c.b16 %v5167, %v5163
      %v5308 = vpack.c.b16 %v5168, %v5164
      %v5309 = vpack.c.b16 %v5173, %v5169
      %v5310 = vpack.c.b16 %v5174, %v5170
      %v5311 = vpack.c.b16 %v5175, %v5171
      %v5312 = vpack.c.b16 %v5176, %v5172
      %v5313 = vpack.c.b16 %v5181, %v5177
      %v5314 = vpack.c.b16 %v5182, %v5178
      %v5315 = vpack.c.b16 %v5183, %v5179
      %v5316 = vpack.c.b16 %v5184, %v5180
      %v5317 = vpack.c.b16 %v5189, %v5185
      %v5318 = vpack.c.b16 %v5190, %v5186
      %v5319 = vpack.c.b16 %v5191, %v5187
      %v5320 = vpack.c.b16 %v5192, %v5188
      %5449 = vmatpush.bf16.msra.mxu0 %v5221
      %5450 = vmatpush.bf16.msra.mxu0 %v5217
      %5451 = vmatpush.bf16.msra.mxu0 %v5213
      %5452 = vmatpush.bf16.msra.mxu0 %v5209
      %5453 = vmatpush.bf16.msra.mxu0 %v5205
      %5454 = vmatpush.bf16.msra.mxu0 %v5201
      %5455 = vmatpush.bf16.msra.mxu0 %v5197
      %5456 = vmatpush.bf16.msra.mxu0 %v5193
      %5457 = vmatmul.bf16.gmra.mxu0 %v4667
      %v5458 = vpop.f32.mrf.mxu0
      %v5459 = vadd.f32 %v4801, %v5458
      %v5460 = vpop.f32.mrf.mxu0
      %5461 = vdwg.mxu0
      %5462 = vmatpush.bf16.msra.mxu0 %v5253
      %5463 = vmatpush.bf16.msra.mxu0 %v5249
      %5464 = vmatpush.bf16.msra.mxu0 %v5245
      %5465 = vmatpush.bf16.msra.mxu0 %v5241
      %5466 = vmatpush.bf16.msra.mxu0 %v5237
      %5467 = vmatpush.bf16.msra.mxu0 %v5233
      %5468 = vmatpush.bf16.msra.mxu0 %v5229
      %5469 = vmatpush.bf16.msra.mxu0 %v5225
      %5470 = vmatmul.bf16.gmra.mxu0 %v4668
      %v5471 = vpop.f32.mrf.mxu0
      %v5472 = vadd.f32 %v5459, %v5471
      %v5473 = vpop.f32.mrf.mxu0
      %5474 = vdwg.mxu0
      %5475 = vmatpush.bf16.msra.mxu0 %v5285
      %5476 = vmatpush.bf16.msra.mxu0 %v5281
      %5477 = vmatpush.bf16.msra.mxu0 %v5277
      %5478 = vmatpush.bf16.msra.mxu0 %v5273
      %5479 = vmatpush.bf16.msra.mxu0 %v5269
      %5480 = vmatpush.bf16.msra.mxu0 %v5265
      %5481 = vmatpush.bf16.msra.mxu0 %v5261
      %5482 = vmatpush.bf16.msra.mxu0 %v5257
      %5483 = vmatmul.bf16.gmra.mxu0 %v4669
      %v5484 = vpop.f32.mrf.mxu0
      %v5485 = vadd.f32 %v5472, %v5484
      %v5486 = vpop.f32.mrf.mxu0
      %5487 = vdwg.mxu0
      %5488 = vmatpush.bf16.msra.mxu0 %v5317
      %5489 = vmatpush.bf16.msra.mxu0 %v5313
      %5490 = vmatpush.bf16.msra.mxu0 %v5309
      %5491 = vmatpush.bf16.msra.mxu0 %v5305
      %5492 = vmatpush.bf16.msra.mxu0 %v5301
      %5493 = vmatpush.bf16.msra.mxu0 %v5297
      %5494 = vmatpush.bf16.msra.mxu0 %v5293
      %5495 = vmatpush.bf16.msra.mxu0 %v5289
      %5496 = vmatmul.bf16.gmra.mxu0 %v4670
      %v5497 = vpop.f32.mrf.mxu0
      %v5498 = vadd.f32 %v5485, %v5497
      %v5499 = vpop.f32.mrf.mxu0
      %5500 = vdwg.mxu0
      %5501 = vmatpush.bf16.msra.mxu0 %v5222
      %5502 = vmatpush.bf16.msra.mxu0 %v5218
      %5503 = vmatpush.bf16.msra.mxu0 %v5214
      %5504 = vmatpush.bf16.msra.mxu0 %v5210
      %5505 = vmatpush.bf16.msra.mxu0 %v5206
      %5506 = vmatpush.bf16.msra.mxu0 %v5202
      %5507 = vmatpush.bf16.msra.mxu0 %v5198
      %5508 = vmatpush.bf16.msra.mxu0 %v5194
      %5509 = vmatmul.bf16.gmra.mxu0 %v4667
      %v5510 = vpop.f32.mrf.mxu0
      %v5511 = vadd.f32 %v4802, %v5510
      %v5512 = vpop.f32.mrf.mxu0
      %5513 = vdwg.mxu0
      %5514 = vmatpush.bf16.msra.mxu0 %v5254
      %5515 = vmatpush.bf16.msra.mxu0 %v5250
      %5516 = vmatpush.bf16.msra.mxu0 %v5246
      %5517 = vmatpush.bf16.msra.mxu0 %v5242
      %5518 = vmatpush.bf16.msra.mxu0 %v5238
      %5519 = vmatpush.bf16.msra.mxu0 %v5234
      %5520 = vmatpush.bf16.msra.mxu0 %v5230
      %5521 = vmatpush.bf16.msra.mxu0 %v5226
      %5522 = vmatmul.bf16.gmra.mxu0 %v4668
      %v5523 = vpop.f32.mrf.mxu0
      %v5524 = vadd.f32 %v5511, %v5523
      %v5525 = vpop.f32.mrf.mxu0
      %5526 = vdwg.mxu0
      %5527 = vmatpush.bf16.msra.mxu0 %v5286
      %5528 = vmatpush.bf16.msra.mxu0 %v5282
      %5529 = vmatpush.bf16.msra.mxu0 %v5278
      %5530 = vmatpush.bf16.msra.mxu0 %v5274
      %5531 = vmatpush.bf16.msra.mxu0 %v5270
      %5532 = vmatpush.bf16.msra.mxu0 %v5266
      %5533 = vmatpush.bf16.msra.mxu0 %v5262
      %5534 = vmatpush.bf16.msra.mxu0 %v5258
      %5535 = vmatmul.bf16.gmra.mxu0 %v4669
      %v5536 = vpop.f32.mrf.mxu0
      %v5537 = vadd.f32 %v5524, %v5536
      %v5538 = vpop.f32.mrf.mxu0
      %5539 = vdwg.mxu0
      %5540 = vmatpush.bf16.msra.mxu0 %v5318
      %5541 = vmatpush.bf16.msra.mxu0 %v5314
      %5542 = vmatpush.bf16.msra.mxu0 %v5310
      %5543 = vmatpush.bf16.msra.mxu0 %v5306
      %5544 = vmatpush.bf16.msra.mxu0 %v5302
      %5545 = vmatpush.bf16.msra.mxu0 %v5298
      %5546 = vmatpush.bf16.msra.mxu0 %v5294
      %5547 = vmatpush.bf16.msra.mxu0 %v5290
      %5548 = vmatmul.bf16.gmra.mxu0 %v4670
      %v5549 = vpop.f32.mrf.mxu0
      %v5550 = vadd.f32 %v5537, %v5549
      %v5551 = vpop.f32.mrf.mxu0
      %5552 = vdwg.mxu0
      %5553 = vmatpush.bf16.msra.mxu0 %v5223
      %5554 = vmatpush.bf16.msra.mxu0 %v5219
      %5555 = vmatpush.bf16.msra.mxu0 %v5215
      %5556 = vmatpush.bf16.msra.mxu0 %v5211
      %5557 = vmatpush.bf16.msra.mxu0 %v5207
      %5558 = vmatpush.bf16.msra.mxu0 %v5203
      %5559 = vmatpush.bf16.msra.mxu0 %v5199
      %5560 = vmatpush.bf16.msra.mxu0 %v5195
      %5561 = vmatmul.bf16.gmra.mxu0 %v4667
      %v5562 = vpop.f32.mrf.mxu0
      %v5563 = vadd.f32 %v4803, %v5562
      %v5564 = vpop.f32.mrf.mxu0
      %5565 = vdwg.mxu0
      %5566 = vmatpush.bf16.msra.mxu0 %v5255
      %5567 = vmatpush.bf16.msra.mxu0 %v5251
      %5568 = vmatpush.bf16.msra.mxu0 %v5247
      %5569 = vmatpush.bf16.msra.mxu0 %v5243
      %5570 = vmatpush.bf16.msra.mxu0 %v5239
      %5571 = vmatpush.bf16.msra.mxu0 %v5235
      %5572 = vmatpush.bf16.msra.mxu0 %v5231
      %5573 = vmatpush.bf16.msra.mxu0 %v5227
      %5574 = vmatmul.bf16.gmra.mxu0 %v4668
      %v5575 = vpop.f32.mrf.mxu0
      %v5576 = vadd.f32 %v5563, %v5575
      %v5577 = vpop.f32.mrf.mxu0
      %5578 = vdwg.mxu0
      %5579 = vmatpush.bf16.msra.mxu0 %v5287
      %5580 = vmatpush.bf16.msra.mxu0 %v5283
      %5581 = vmatpush.bf16.msra.mxu0 %v5279
      %5582 = vmatpush.bf16.msra.mxu0 %v5275
      %5583 = vmatpush.bf16.msra.mxu0 %v5271
      %5584 = vmatpush.bf16.msra.mxu0 %v5267
      %5585 = vmatpush.bf16.msra.mxu0 %v5263
      %5586 = vmatpush.bf16.msra.mxu0 %v5259
      %5587 = vmatmul.bf16.gmra.mxu0 %v4669
      %v5588 = vpop.f32.mrf.mxu0
      %v5589 = vadd.f32 %v5576, %v5588
      %v5590 = vpop.f32.mrf.mxu0
      %5591 = vdwg.mxu0
      %5592 = vmatpush.bf16.msra.mxu0 %v5319
      %5593 = vmatpush.bf16.msra.mxu0 %v5315
      %5594 = vmatpush.bf16.msra.mxu0 %v5311
      %5595 = vmatpush.bf16.msra.mxu0 %v5307
      %5596 = vmatpush.bf16.msra.mxu0 %v5303
      %5597 = vmatpush.bf16.msra.mxu0 %v5299
      %5598 = vmatpush.bf16.msra.mxu0 %v5295
      %5599 = vmatpush.bf16.msra.mxu0 %v5291
      %5600 = vmatmul.bf16.gmra.mxu0 %v4670
      %v5601 = vpop.f32.mrf.mxu0
      %v5602 = vadd.f32 %v5589, %v5601
      %v5603 = vpop.f32.mrf.mxu0
      %5604 = vdwg.mxu0
      %5605 = vmatpush.bf16.msra.mxu0 %v5224
      %5606 = vmatpush.bf16.msra.mxu0 %v5220
      %5607 = vmatpush.bf16.msra.mxu0 %v5216
      %5608 = vmatpush.bf16.msra.mxu0 %v5212
      %5609 = vmatpush.bf16.msra.mxu0 %v5208
      %5610 = vmatpush.bf16.msra.mxu0 %v5204
      %5611 = vmatpush.bf16.msra.mxu0 %v5200
      %5612 = vmatpush.bf16.msra.mxu0 %v5196
      %5613 = vmatmul.bf16.gmra.mxu0 %v4667
      %v5614 = vpop.f32.mrf.mxu0
      %v5615 = vadd.f32 %v4804, %v5614
      %v5616 = vpop.f32.mrf.mxu0
      %5617 = vdwg.mxu0
      %5618 = vmatpush.bf16.msra.mxu0 %v5256
      %5619 = vmatpush.bf16.msra.mxu0 %v5252
      %5620 = vmatpush.bf16.msra.mxu0 %v5248
      %5621 = vmatpush.bf16.msra.mxu0 %v5244
      %5622 = vmatpush.bf16.msra.mxu0 %v5240
      %5623 = vmatpush.bf16.msra.mxu0 %v5236
      %5624 = vmatpush.bf16.msra.mxu0 %v5232
      %5625 = vmatpush.bf16.msra.mxu0 %v5228
      %5626 = vmatmul.bf16.gmra.mxu0 %v4668
      %v5627 = vpop.f32.mrf.mxu0
      %v5628 = vadd.f32 %v5615, %v5627
      %v5629 = vpop.f32.mrf.mxu0
      %5630 = vdwg.mxu0
      %5631 = vmatpush.bf16.msra.mxu0 %v5288
      %5632 = vmatpush.bf16.msra.mxu0 %v5284
      %5633 = vmatpush.bf16.msra.mxu0 %v5280
      %5634 = vmatpush.bf16.msra.mxu0 %v5276
      %5635 = vmatpush.bf16.msra.mxu0 %v5272
      %5636 = vmatpush.bf16.msra.mxu0 %v5268
      %5637 = vmatpush.bf16.msra.mxu0 %v5264
      %5638 = vmatpush.bf16.msra.mxu0 %v5260
      %5639 = vmatmul.bf16.gmra.mxu0 %v4669
      %v5640 = vpop.f32.mrf.mxu0
      %v5641 = vadd.f32 %v5628, %v5640
      %v5642 = vpop.f32.mrf.mxu0
      %5643 = vdwg.mxu0
      %5644 = vmatpush.bf16.msra.mxu0 %v5320
      %5645 = vmatpush.bf16.msra.mxu0 %v5316
      %5646 = vmatpush.bf16.msra.mxu0 %v5312
      %5647 = vmatpush.bf16.msra.mxu0 %v5308
      %5648 = vmatpush.bf16.msra.mxu0 %v5304
      %5649 = vmatpush.bf16.msra.mxu0 %v5300
      %5650 = vmatpush.bf16.msra.mxu0 %v5296
      %5651 = vmatpush.bf16.msra.mxu0 %v5292
      %5652 = vmatmul.bf16.gmra.mxu0 %v4670
      %v5653 = vpop.f32.mrf.mxu0
      %v5654 = vadd.f32 %v5641, %v5653
      %v5655 = vpop.f32.mrf.mxu0
      %5656 = vdwg.mxu0
      %5657 = vst [vmem:[#allocation17] sm:$0xff] %v5498
      %5658 = vst [vmem:[#allocation17 + $0x8] sm:$0xff] %v5550
      %5659 = vst [vmem:[#allocation17 + $0x10] sm:$0xff] %v5602
      %5660 = vst [vmem:[#allocation17 + $0x18] sm:$0xff] %v5654
    $region77: #{tpu_custom_call.1} parent=1 // pred_fallthru
      _
    // Predicated region
    $region78: #{tpu_custom_call.1} parent=1 // pred_check
      _
    $region79: #{tpu_custom_call.1} parent=1 // pred_check_branch
      %5662 = sbr.rel (0) target = $region81
    $region80: #{tpu_custom_call.1} parent=1 // pred_region
      %5664 = vsyncadd [#allocation5], 0
      %s5666 = sshll.u32 [#allocation17], 4
      %s5667 = int_to_ptr.vmem [resolvable:$true] %s5666
      %s5668 = sshll.u32 %s9, 4
      %s5669 = int_to_ptr.hbm [resolvable:$true] %s5668
      %5671 = dma.vmem_to_hbm [thread:$0]  %s5667, 512, %s5669, [#allocation5]
    $region81: #{tpu_custom_call.1} parent=1 // pred_fallthru
      _
    // Predicated region
    $region82: #{tpu_custom_call.1} parent=1 // pred_check
      _
    $region83: #{tpu_custom_call.1} parent=1 // pred_check_branch
      %5673 = sbr.rel (0) target = $region85
    $region84: #{tpu_custom_call.1} parent=1 // pred_region
      %5675 = dma.done [#allocation5], 512
    $region85: #{tpu_custom_call.1} parent=1 // pred_fallthru
      _
    %5676 = vsyncpa [#allocation4], 1
    %5677 = vsyncpa [#allocation7], 1
    %5678 = vsyncpa [#allocation10], 1
    %5679 = vsyncpa [#allocation13], 1
    %5680 = vsyncpa [#allocation16], 1
    %5681 = vsyncpa [#allocation5], 1

</llo_original>
